<compile_context>
chip_gen: v5e
topology: v5e:2x2
jax: 0.10.0
libtpu: 0.0.40
codegen_flags: <defaults>
</compile_context>

<pallas_src>
import functools

import jax
import jax.numpy as jnp
from jax.experimental import pallas as pl
from jax.experimental.pallas import tpu as pltpu

LANES = 128


def _round_up(x, m):
    return (x + m - 1) // m * m


def _vmem_limit_bytes():
    """Per-generation VMEM limit: ~80% of physical, 48 MiB fallback."""
    try:
        cap = int(pltpu.get_tpu_info().vmem_capacity_bytes)
        return min(int(cap * 0.8), 112 * 1024 * 1024)
    except Exception:
        return 48 * 1024 * 1024


def _pick_row_tile(Ho, Wo, target_rows):
    """Largest divisor `th` of Ho such that th * Wo <= target_rows (>= 1)."""
    best = 1
    for d in range(1, Ho + 1):
        if Ho % d == 0 and d * Wo <= max(target_rows, Wo):
            best = d
    return best


# ---------------------------------------------------------------------------
# Kernels
# ---------------------------------------------------------------------------
def _conv3x3_stats_kernel(*refs, th, cin, pool_input, apply_input_act):
    """3x3 conv (pad=1) as 9 accumulated MXU dots per row tile + BN partial stats.

    Input staging (once per image, at h == 0) also performs the fused pre-op:
      * pool_input:       2x2 max-pool + channel lane-padding of the raw image
      * apply_input_act:  previous layer's folded BN scale/shift + ReLU

    refs (apply_input_act): x, scale_in, shift_in, w, y, psum, psq, xpad
    refs (otherwise):       x, w, y, psum, psq, xpad
      x:    (1, Ho, 2, Wo, 2, cin) if pool_input else (1, Ho, Wo, Cip)
      w:    (9, Cip, Cop)            im2col-packed weights (compute dtype)
      y:    (1, th, Wo, Cop)         raw conv output tile (compute dtype)
      psum: (1, 1, Cop)  psq: (1, 1, Cop)   per-image partial stats (f32)
      xpad: (1, Ho+2, Wo+2, Cip)     zero-padded image scratch (compute dtype)
    """
    if apply_input_act:
        x_ref, scale_ref, shift_ref, w_ref, y_ref, psum_ref, psq_ref, xpad_ref = refs
    else:
        x_ref, w_ref, y_ref, psum_ref, psq_ref, xpad_ref = refs
        scale_ref = shift_ref = None

    h = pl.program_id(1)
    _, Hp, Wp, Cip = xpad_ref.shape
    Ho, Wo = Hp - 2, Wp - 2
    Cop = w_ref.shape[2]

    # Fill the zero-padded image scratch and reset the stats once per image.
    @pl.when(h == 0)
    def _init():
        xpad_ref[...] = jnp.zeros_like(xpad_ref)
        if pool_input:
            a = x_ref[:, :, 0, :, 0, :]
            b = x_ref[:, :, 0, :, 1, :]
            c = x_ref[:, :, 1, :, 0, :]
            d = x_ref[:, :, 1, :, 1, :]
            pooled = jnp.maximum(jnp.maximum(a, b), jnp.maximum(c, d))
            xpad_ref[:, 1:Ho + 1, 1:Wo + 1, 0:cin] = pooled.astype(xpad_ref.dtype)
        else:
            xin = x_ref[...].astype(jnp.float32)
            if apply_input_act:
                xin = xin * scale_ref[...].reshape(1, 1, 1, Cip)
                xin = xin + shift_ref[...].reshape(1, 1, 1, Cip)
                xin = jnp.maximum(xin, 0.0)
            xpad_ref[:, 1:Ho + 1, 1:Wo + 1, :] = xin.astype(xpad_ref.dtype)
        psum_ref[...] = jnp.zeros_like(psum_ref)
        psq_ref[...] = jnp.zeros_like(psq_ref)

    hs = pl.multiple_of(h * th, th)

    # 9 accumulated dots of K = Cip (no big im2col concat materialization).
    # Note: th*Wo-row reshapes stay layout-free when Wo % 8 == 0.
    acc = jnp.zeros((th * Wo, Cop), jnp.float32)
    t = 0
    for di in range(3):
        for dj in range(3):
            tap = xpad_ref[:, pl.ds(hs + di, th), dj:dj + Wo, :]   # (1, th, Wo, Cip)
            acc = acc + jnp.dot(tap.reshape(th * Wo, Cip), w_ref[t],
                                preferred_element_type=jnp.float32)
            t += 1

    y_ref[...] = acc.reshape(1, th, Wo, Cop).astype(y_ref.dtype)
    psum_ref[...] += jnp.sum(acc, axis=0).reshape(1, 1, Cop)
    psq_ref[...] += jnp.sum(acc * acc, axis=0).reshape(1, 1, Cop)


def _bn_relu_kernel(y_ref, scale_ref, shift_ref, o_ref):
    """Final-layer BN (pre-folded scale/shift) + ReLU: pure streaming mul-add-max."""
    Cop = y_ref.shape[-1]
    z = y_ref[...].astype(jnp.float32)
    z = z * scale_ref[...].reshape(1, 1, 1, Cop) + shift_ref[...].reshape(1, 1, 1, Cop)
    o_ref[...] = jnp.maximum(z, 0.0).astype(o_ref.dtype)


# ---------------------------------------------------------------------------
# Parameter packing and BN folding (tiny JAX glue)
# ---------------------------------------------------------------------------
def _pack_weight(w, cin_p, cout_p, compute_dtype):
    """(3,3,Cin,Cout) HWIO -> lane-padded tap-major layout (9, Cin_p, Cout_p)."""
    kh, kw, cin, cout = w.shape
    wp = jnp.zeros((kh * kw, cin_p, cout_p), compute_dtype)
    wp = wp.at[:, :cin, :cout].set(w.reshape(kh * kw, cin, cout).astype(compute_dtype))
    return wp


def _pack_vec(v, cout_p):
    out = jnp.zeros((1, cout_p), jnp.float32)
    return out.at[0, :v.shape[0]].set(v.astype(jnp.float32))


def _fold_bn(psum, psq, gamma_p, beta_p, count, eps):
    """Per-image partial sums -> folded per-channel BN scale/shift (training mode)."""
    s1 = jnp.sum(psum, axis=0)                       # (1, Cop)
    s2 = jnp.sum(psq, axis=0)
    mean = s1 / count
    var = jnp.maximum(s2 / count - mean * mean, 0.0)
    scale = gamma_p * jax.lax.rsqrt(var + eps)
    shift = beta_p - mean * scale
    return scale.astype(jnp.float32), shift.astype(jnp.float32)


# ---------------------------------------------------------------------------
# Public forward pass ("down")
# ---------------------------------------------------------------------------
def down_forward(x_nchw, params, *, momentum=0.1, eps=1e-5,
                 compute_dtype=jnp.bfloat16):
    """params: list of two (w, b, gamma, beta) tuples, w in HWIO (3,3,Cin,Cout)."""
    del momentum  # only affects running-stat updates, not the forward output
    N, C, H, W = x_nchw.shape
    Ho, Wo = H // 2, W // 2

    vmem_limit = _vmem_limit_bytes()
    target_rows = 4096 if vmem_limit >= 80 * 1024 * 1024 else 2048
    th = _pick_row_tile(Ho, Wo, target_rows)
    Hb = Ho // th
    count = float(N * Ho * Wo)

    x = jnp.transpose(x_nchw, (0, 2, 3, 1))        # NCHW -> NHWC   (layout glue)
    x = x[:, :2 * Ho, :2 * Wo, :]                  # MaxPool2d(2) floors odd sizes
    x6 = x.reshape(N, Ho, 2, Wo, 2, C)             # expose 2x2 windows (view)

    y = None
    scale_shift = None
    last_cout = C
    for li, (w, b, g, beta) in enumerate(params):
        del b  # conv bias cancels exactly under training-mode BatchNorm
        cin, cout = int(w.shape[2]), int(w.shape[3])
        cip = _round_up(cin, LANES)
        cop = _round_up(cout, LANES)
        w3d = _pack_weight(w, cip, cop, compute_dtype)
        pool_input = (li == 0)

        if pool_input:
            assert cin == C
            kernel = functools.partial(_conv3x3_stats_kernel, th=th, cin=cin,
                                       pool_input=True, apply_input_act=False)
            in_specs = [
                pl.BlockSpec((1, Ho, 2, Wo, 2, cin),
                             lambda n, h: (n, 0, 0, 0, 0, 0)),
                pl.BlockSpec((9, cip, cop), lambda n, h: (0, 0, 0)),
            ]
            args = (x6, w3d)
        else:
            assert cip == y.shape[-1]
            kernel = functools.partial(_conv3x3_stats_kernel, th=th, cin=cin,
                                       pool_input=False, apply_input_act=True)
            in_specs = [
                pl.BlockSpec((1, Ho, Wo, cip), lambda n, h: (n, 0, 0, 0)),
                pl.BlockSpec((1, cip), lambda n, h: (0, 0)),
                pl.BlockSpec((1, cip), lambda n, h: (0, 0)),
                pl.BlockSpec((9, cip, cop), lambda n, h: (0, 0, 0)),
            ]
            args = (y, scale_shift[0], scale_shift[1], w3d)

        y, psum, psq = pl.pallas_call(
            kernel,
            grid=(N, Hb),
            in_specs=in_specs,
            out_specs=(
                pl.BlockSpec((1, th, Wo, cop), lambda n, h: (n, h, 0, 0)),
                pl.BlockSpec((1, 1, cop), lambda n, h: (n, 0, 0)),
                pl.BlockSpec((1, 1, cop), lambda n, h: (n, 0, 0)),
            ),
            out_shape=(
                jax.ShapeDtypeStruct((N, Ho, Wo, cop), compute_dtype),
                jax.ShapeDtypeStruct((N, 1, cop), jnp.float32),
                jax.ShapeDtypeStruct((N, 1, cop), jnp.float32),
            ),
            scratch_shapes=[pltpu.VMEM((1, Ho + 2, Wo + 2, cip), compute_dtype)],
            compiler_params=pltpu.CompilerParams(
                dimension_semantics=("parallel", "arbitrary"),
                vmem_limit_bytes=vmem_limit),
        )(*args)

        # Fold this layer's BN into (scale, shift) once (tiny JAX op).
        scale_shift = _fold_bn(psum, psq, _pack_vec(g, cop), _pack_vec(beta, cop),
                               count, eps)
        last_cout = cout

    # Final layer's BN + ReLU (earlier layers' BN is fused into the next conv).
    cop = y.shape[-1]
    out = pl.pallas_call(
        _bn_relu_kernel,
        grid=(N, Hb),
        in_specs=[
            pl.BlockSpec((1, th, Wo, cop), lambda n, h: (n, h, 0, 0)),
            pl.BlockSpec((1, cop), lambda n, h: (0, 0)),
            pl.BlockSpec((1, cop), lambda n, h: (0, 0)),
        ],
        out_specs=pl.BlockSpec((1, th, Wo, cop), lambda n, h: (n, h, 0, 0)),
        out_shape=jax.ShapeDtypeStruct((N, Ho, Wo, cop), x_nchw.dtype),
        compiler_params=pltpu.CompilerParams(
            dimension_semantics=("parallel", "parallel"),
            vmem_limit_bytes=vmem_limit),
    )(y, scale_shift[0], scale_shift[1])

    out = out[:, :, :, :last_cout]                  # drop lane padding  (glue)
    return jnp.transpose(out, (0, 3, 1, 2))         # NHWC -> NCHW       (glue)


# ---------------------------------------------------------------------------
# Pure-JAX reference (for correctness check)
# ---------------------------------------------------------------------------
def down_reference(x_nchw, params, eps=1e-5, compute_dtype=jnp.float32):
    x = jnp.transpose(x_nchw, (0, 2, 3, 1)).astype(jnp.float32)
    N, H, W, C = x.shape
    x = x[:, :2 * (H // 2), :2 * (W // 2), :]
    x = x.reshape(N, H // 2, 2, W // 2, 2, C).max(axis=(2, 4))
    for (w, b, g, beta) in params:
        y = jax.lax.conv_general_dilated(
            x.astype(compute_dtype), w.astype(compute_dtype),
            window_strides=(1, 1), padding="SAME",
            dimension_numbers=("NHWC", "HWIO", "NHWC"),
            preferred_element_type=jnp.float32)
        y = y + b.astype(jnp.float32)
        m = y.mean(axis=(0, 1, 2), keepdims=True)
        v = ((y - m) ** 2).mean(axis=(0, 1, 2), keepdims=True)
        y = (y - m) * jax.lax.rsqrt(v + eps) * g + beta
        x = jnp.maximum(y, 0.0)
    return jnp.transpose(x, (0, 3, 1, 2)).astype(x_nchw.dtype)


# ---------------------------------------------------------------------------
if __name__ == "__main__":
    N, inC, H, W = 2, 4, 16, 16
    outC = 8
    momentum = 0.1

    key = jax.random.PRNGKey(0)
    kx, kw1, kb1, kw2, kb2 = jax.random.split(key, 5)

    x = jax.random.normal(kx, (N, inC, H, W), jnp.float32)

    # Deterministic synthetic parameters (HWIO conv weights; BN gamma=1, beta=0
    # as in freshly-initialized PyTorch BatchNorm2d).
    w1 = jax.random.normal(kw1, (3, 3, inC, outC), jnp.float32) * 0.1
    b1 = jax.random.normal(kb1, (outC,), jnp.float32) * 0.1
    g1, bt1 = jnp.ones((outC,), jnp.float32), jnp.zeros((outC,), jnp.float32)

    w2 = jax.random.normal(kw2, (3, 3, outC, outC), jnp.float32) * 0.1
    b2 = jax.random.normal(kb2, (outC,), jnp.float32) * 0.1
    g2, bt2 = jnp.ones((outC,), jnp.float32), jnp.zeros((outC,), jnp.float32)

    params = [(w1, b1, g1, bt1), (w2, b2, g2, bt2)]

    # f32 MXU path: must match the f32 reference tightly.
    fwd_f32 = jax.jit(functools.partial(down_forward, momentum=momentum,
                                        compute_dtype=jnp.float32))
    out_f32 = jax.block_until_ready(fwd_f32(x, params))
    ref_f32 = jax.block_until_ready(down_reference(x, params,
                                                   compute_dtype=jnp.float32))
    assert out_f32.shape == (N, outC, H // 2, W // 2), out_f32.shape
    err_f32 = float(jnp.max(jnp.abs(out_f32 - ref_f32)))
    assert err_f32 < 2e-3, err_f32

    # bf16 MXU path (default): compare against a bf16-operand reference.
    fwd_bf16 = jax.jit(functools.partial(down_forward, momentum=momentum,
                                         compute_dtype=jnp.bfloat16))
    out_bf16 = jax.block_until_ready(fwd_bf16(x, params))
    ref_bf16 = jax.block_until_ready(down_reference(x, params,
                                                    compute_dtype=jnp.bfloat16))
    err_bf16 = float(jnp.max(jnp.abs(out_bf16 - ref_bf16)))
    assert err_bf16 < 5e-2, err_bf16

    print("KERNEL_OK")
</pallas_src>

<mosaic_0001>
module attributes {stable_mosaic.version = 11 : i64} {
  func.func @_conv3x3_stats_kernel(%arg0: i32, %arg1: i32, %arg2: memref<1x8x2x8x2x4xf32, #tpu.memory_space<vmem>>, %arg3: memref<9x128x128xf32, #tpu.memory_space<vmem>>, %arg4: memref<1x8x8x128xf32, #tpu.memory_space<vmem>>, %arg5: memref<1x1x128xf32, #tpu.memory_space<vmem>>, %arg6: memref<1x1x128xf32, #tpu.memory_space<vmem>>, %arg7: memref<1x10x10x128xf32, #tpu.memory_space<vmem>>) attributes {dimension_semantics = [#tpu.dimension_semantics<parallel>, #tpu.dimension_semantics<arbitrary>], iteration_bounds = array<i64: 2, 1>, scalar_prefetch = 0 : i64, scratch_operands = 1 : i64, tpu.core_type = #tpu.core_type<tc>, window_params = [{transform_indices = @transform_0, window_bounds = array<i64: 1, 8, 2, 8, 2, 4>}, {pipeline_mode = #tpu.pipeline_mode<synchronous>, transform_indices = @transform_1, window_bounds = array<i64: 9, 128, 128>}, {transform_indices = @transform_2, window_bounds = array<i64: 1, 8, 8, 128>}, {transform_indices = @transform_3, window_bounds = array<i64: 1, 1, 128>}, {transform_indices = @transform_4, window_bounds = array<i64: 1, 1, 128>}]} {
    %c0_i32 = arith.constant 0 : i32
    %0 = arith.cmpi eq, %arg1, %c0_i32 : i32
    %1 = arith.extui %0 : i1 to i32
    %c0_i32_0 = arith.constant 0 : i32
    %2 = arith.cmpi ne, %1, %c0_i32_0 : i32
    scf.if %2 {
      %cst_80 = arith.constant 0.000000e+00 : f32
      %91 = vector.broadcast %cst_80 : f32 to vector<1x10x10x128xf32>
      %c0_81 = arith.constant 0 : index
      %c0_82 = arith.constant 0 : index
      %c0_83 = arith.constant 0 : index
      %c0_84 = arith.constant 0 : index
      %92 = vector.load %arg7[%c0_81, %c0_82, %c0_83, %c0_84] : memref<1x10x10x128xf32, #tpu.memory_space<vmem>>, vector<1x10x10x128xf32>
      tpu.vector_store %arg7[%c0_81, %c0_82, %c0_83, %c0_84], %91 {strides = array<i32>} : memref<1x10x10x128xf32, #tpu.memory_space<vmem>>, vector<1x10x10x128xf32>,
      %c0_85 = arith.constant 0 : index
      %c0_86 = arith.constant 0 : index
      %c0_87 = arith.constant 0 : index
      %c0_88 = arith.constant 0 : index
      %c0_89 = arith.constant 0 : index
      %c0_90 = arith.constant 0 : index
      %93 = vector.load %arg2[%c0_85, %c0_86, %c0_87, %c0_88, %c0_89, %c0_90] : memref<1x8x2x8x2x4xf32, #tpu.memory_space<vmem>>, vector<1x8x1x8x1x4xf32>
      %94 = vector.shape_cast %93 : vector<1x8x1x8x1x4xf32> to vector<1x8x8x4xf32>
      %c0_91 = arith.constant 0 : index
      %c0_92 = arith.constant 0 : index
      %c0_93 = arith.constant 0 : index
      %c0_94 = arith.constant 0 : index
      %c1_95 = arith.constant 1 : index
      %c0_96 = arith.constant 0 : index
      %95 = vector.load %arg2[%c0_91, %c0_92, %c0_93, %c0_94, %c1_95, %c0_96] : memref<1x8x2x8x2x4xf32, #tpu.memory_space<vmem>>, vector<1x8x1x8x1x4xf32>
      %96 = vector.shape_cast %95 : vector<1x8x1x8x1x4xf32> to vector<1x8x8x4xf32>
      %c0_97 = arith.constant 0 : index
      %c0_98 = arith.constant 0 : index
      %c1_99 = arith.constant 1 : index
      %c0_100 = arith.constant 0 : index
      %c0_101 = arith.constant 0 : index
      %c0_102 = arith.constant 0 : index
      %97 = vector.load %arg2[%c0_97, %c0_98, %c1_99, %c0_100, %c0_101, %c0_102] : memref<1x8x2x8x2x4xf32, #tpu.memory_space<vmem>>, vector<1x8x1x8x1x4xf32>
      %98 = vector.shape_cast %97 : vector<1x8x1x8x1x4xf32> to vector<1x8x8x4xf32>
      %c0_103 = arith.constant 0 : index
      %c0_104 = arith.constant 0 : index
      %c1_105 = arith.constant 1 : index
      %c0_106 = arith.constant 0 : index
      %c1_107 = arith.constant 1 : index
      %c0_108 = arith.constant 0 : index
      %99 = vector.load %arg2[%c0_103, %c0_104, %c1_105, %c0_106, %c1_107, %c0_108] : memref<1x8x2x8x2x4xf32, #tpu.memory_space<vmem>>, vector<1x8x1x8x1x4xf32>
      %100 = vector.shape_cast %99 : vector<1x8x1x8x1x4xf32> to vector<1x8x8x4xf32>
      %101 = arith.maximumf %94, %96 : vector<1x8x8x4xf32>
      %102 = arith.maximumf %98, %100 : vector<1x8x8x4xf32>
      %103 = arith.maximumf %101, %102 : vector<1x8x8x4xf32>
      %c0_109 = arith.constant 0 : index
      %c1_110 = arith.constant 1 : index
      %c1_111 = arith.constant 1 : index
      %c0_112 = arith.constant 0 : index
      %104 = vector.load %arg7[%c0_109, %c1_110, %c1_111, %c0_112] : memref<1x10x10x128xf32, #tpu.memory_space<vmem>>, vector<1x8x8x4xf32>
      tpu.vector_store %arg7[%c0_109, %c1_110, %c1_111, %c0_112], %103 {strides = array<i32>} : memref<1x10x10x128xf32, #tpu.memory_space<vmem>>, vector<1x8x8x4xf32>,
      %cst_113 = arith.constant 0.000000e+00 : f32
      %105 = vector.broadcast %cst_113 : f32 to vector<1x1x128xf32>
      %c0_114 = arith.constant 0 : index
      %c0_115 = arith.constant 0 : index
      %c0_116 = arith.constant 0 : index
      %106 = vector.load %arg5[%c0_114, %c0_115, %c0_116] : memref<1x1x128xf32, #tpu.memory_space<vmem>>, vector<1x1x128xf32>
      tpu.vector_store %arg5[%c0_114, %c0_115, %c0_116], %105 {strides = array<i32>} : memref<1x1x128xf32, #tpu.memory_space<vmem>>, vector<1x1x128xf32>,
      %cst_117 = arith.constant 0.000000e+00 : f32
      %107 = vector.broadcast %cst_117 : f32 to vector<1x1x128xf32>
      %c0_118 = arith.constant 0 : index
      %c0_119 = arith.constant 0 : index
      %c0_120 = arith.constant 0 : index
      %108 = vector.load %arg6[%c0_118, %c0_119, %c0_120] : memref<1x1x128xf32, #tpu.memory_space<vmem>>, vector<1x1x128xf32>
      tpu.vector_store %arg6[%c0_118, %c0_119, %c0_120], %107 {strides = array<i32>} : memref<1x1x128xf32, #tpu.memory_space<vmem>>, vector<1x1x128xf32>,
    } else {
    }
    %c8_i32 = arith.constant 8 : i32
    %3 = arith.muli %arg1, %c8_i32 : i32
    %4 = tpu.assume_multiple %3, 8 : i32
    %cst = arith.constant 0.000000e+00 : f32
    %5 = vector.broadcast %cst : f32 to vector<64x128xf32>
    %c0_i32_1 = arith.constant 0 : i32
    %6 = arith.addi %4, %c0_i32_1 : i32
    %c0 = arith.constant 0 : index
    %7 = arith.index_cast %6 : i32 to index
    %c0_2 = arith.constant 0 : index
    %c0_3 = arith.constant 0 : index
    %8 = vector.load %arg7[%c0, %7, %c0_2, %c0_3] : memref<1x10x10x128xf32, #tpu.memory_space<vmem>>, vector<1x8x8x128xf32>
    %9 = vector.shape_cast %8 : vector<1x8x8x128xf32> to vector<64x128xf32>
    %c0_4 = arith.constant 0 : index
    %c0_5 = arith.constant 0 : index
    %c0_6 = arith.constant 0 : index
    %10 = vector.load %arg3[%c0_4, %c0_5, %c0_6] : memref<9x128x128xf32, #tpu.memory_space<vmem>>, vector<1x128x128xf32>
    %11 = vector.shape_cast %10 : vector<1x128x128xf32> to vector<128x128xf32>
    %cst_7 = arith.constant dense<0.000000e+00> : vector<64x128xf32>
    %12 = tpu.matmul %9, %11, %cst_7 {dimension_numbers = #tpu.dot_dimension_numbers<[1], [0], [0], [1], [0, 0, 1, 1], [], []>} : vector<64x128xf32>, vector<128x128xf32>, vector<64x128xf32> -> vector<64x128xf32>
    %13 = arith.addf %5, %12 : vector<64x128xf32>
    %c0_i32_8 = arith.constant 0 : i32
    %14 = arith.addi %4, %c0_i32_8 : i32
    %c0_9 = arith.constant 0 : index
    %15 = arith.index_cast %14 : i32 to index
    %c1 = arith.constant 1 : index
    %c0_10 = arith.constant 0 : index
    %16 = vector.load %arg7[%c0_9, %15, %c1, %c0_10] : memref<1x10x10x128xf32, #tpu.memory_space<vmem>>, vector<1x8x8x128xf32>
    %17 = vector.shape_cast %16 : vector<1x8x8x128xf32> to vector<64x128xf32>
    %c1_11 = arith.constant 1 : index
    %c0_12 = arith.constant 0 : index
    %c0_13 = arith.constant 0 : index
    %18 = vector.load %arg3[%c1_11, %c0_12, %c0_13] : memref<9x128x128xf32, #tpu.memory_space<vmem>>, vector<1x128x128xf32>
    %19 = vector.shape_cast %18 : vector<1x128x128xf32> to vector<128x128xf32>
    %cst_14 = arith.constant dense<0.000000e+00> : vector<64x128xf32>
    %20 = tpu.matmul %17, %19, %cst_14 {dimension_numbers = #tpu.dot_dimension_numbers<[1], [0], [0], [1], [0, 0, 1, 1], [], []>} : vector<64x128xf32>, vector<128x128xf32>, vector<64x128xf32> -> vector<64x128xf32>
    %21 = arith.addf %13, %20 : vector<64x128xf32>
    %c0_i32_15 = arith.constant 0 : i32
    %22 = arith.addi %4, %c0_i32_15 : i32
    %c0_16 = arith.constant 0 : index
    %23 = arith.index_cast %22 : i32 to index
    %c2 = arith.constant 2 : index
    %c0_17 = arith.constant 0 : index
    %24 = vector.load %arg7[%c0_16, %23, %c2, %c0_17] : memref<1x10x10x128xf32, #tpu.memory_space<vmem>>, vector<1x8x8x128xf32>
    %25 = vector.shape_cast %24 : vector<1x8x8x128xf32> to vector<64x128xf32>
    %c2_18 = arith.constant 2 : index
    %c0_19 = arith.constant 0 : index
    %c0_20 = arith.constant 0 : index
    %26 = vector.load %arg3[%c2_18, %c0_19, %c0_20] : memref<9x128x128xf32, #tpu.memory_space<vmem>>, vector<1x128x128xf32>
    %27 = vector.shape_cast %26 : vector<1x128x128xf32> to vector<128x128xf32>
    %cst_21 = arith.constant dense<0.000000e+00> : vector<64x128xf32>
    %28 = tpu.matmul %25, %27, %cst_21 {dimension_numbers = #tpu.dot_dimension_numbers<[1], [0], [0], [1], [0, 0, 1, 1], [], []>} : vector<64x128xf32>, vector<128x128xf32>, vector<64x128xf32> -> vector<64x128xf32>
    %29 = arith.addf %21, %28 : vector<64x128xf32>
    %c1_i32 = arith.constant 1 : i32
    %30 = arith.addi %4, %c1_i32 : i32
    %c0_22 = arith.constant 0 : index
    %31 = arith.index_cast %30 : i32 to index
    %c0_23 = arith.constant 0 : index
    %c0_24 = arith.constant 0 : index
    %32 = vector.load %arg7[%c0_22, %31, %c0_23, %c0_24] : memref<1x10x10x128xf32, #tpu.memory_space<vmem>>, vector<1x8x8x128xf32>
    %33 = vector.shape_cast %32 : vector<1x8x8x128xf32> to vector<64x128xf32>
    %c3 = arith.constant 3 : index
    %c0_25 = arith.constant 0 : index
    %c0_26 = arith.constant 0 : index
    %34 = vector.load %arg3[%c3, %c0_25, %c0_26] : memref<9x128x128xf32, #tpu.memory_space<vmem>>, vector<1x128x128xf32>
    %35 = vector.shape_cast %34 : vector<1x128x128xf32> to vector<128x128xf32>
    %cst_27 = arith.constant dense<0.000000e+00> : vector<64x128xf32>
    %36 = tpu.matmul %33, %35, %cst_27 {dimension_numbers = #tpu.dot_dimension_numbers<[1], [0], [0], [1], [0, 0, 1, 1], [], []>} : vector<64x128xf32>, vector<128x128xf32>, vector<64x128xf32> -> vector<64x128xf32>
    %37 = arith.addf %29, %36 : vector<64x128xf32>
    %c1_i32_28 = arith.constant 1 : i32
    %38 = arith.addi %4, %c1_i32_28 : i32
    %c0_29 = arith.constant 0 : index
    %39 = arith.index_cast %38 : i32 to index
    %c1_30 = arith.constant 1 : index
    %c0_31 = arith.constant 0 : index
    %40 = vector.load %arg7[%c0_29, %39, %c1_30, %c0_31] : memref<1x10x10x128xf32, #tpu.memory_space<vmem>>, vector<1x8x8x128xf32>
    %41 = vector.shape_cast %40 : vector<1x8x8x128xf32> to vector<64x128xf32>
    %c4 = arith.constant 4 : index
    %c0_32 = arith.constant 0 : index
    %c0_33 = arith.constant 0 : index
    %42 = vector.load %arg3[%c4, %c0_32, %c0_33] : memref<9x128x128xf32, #tpu.memory_space<vmem>>, vector<1x128x128xf32>
    %43 = vector.shape_cast %42 : vector<1x128x128xf32> to vector<128x128xf32>
    %cst_34 = arith.constant dense<0.000000e+00> : vector<64x128xf32>
    %44 = tpu.matmul %41, %43, %cst_34 {dimension_numbers = #tpu.dot_dimension_numbers<[1], [0], [0], [1], [0, 0, 1, 1], [], []>} : vector<64x128xf32>, vector<128x128xf32>, vector<64x128xf32> -> vector<64x128xf32>
    %45 = arith.addf %37, %44 : vector<64x128xf32>
    %c1_i32_35 = arith.constant 1 : i32
    %46 = arith.addi %4, %c1_i32_35 : i32
    %c0_36 = arith.constant 0 : index
    %47 = arith.index_cast %46 : i32 to index
    %c2_37 = arith.constant 2 : index
    %c0_38 = arith.constant 0 : index
    %48 = vector.load %arg7[%c0_36, %47, %c2_37, %c0_38] : memref<1x10x10x128xf32, #tpu.memory_space<vmem>>, vector<1x8x8x128xf32>
    %49 = vector.shape_cast %48 : vector<1x8x8x128xf32> to vector<64x128xf32>
    %c5 = arith.constant 5 : index
    %c0_39 = arith.constant 0 : index
    %c0_40 = arith.constant 0 : index
    %50 = vector.load %arg3[%c5, %c0_39, %c0_40] : memref<9x128x128xf32, #tpu.memory_space<vmem>>, vector<1x128x128xf32>
    %51 = vector.shape_cast %50 : vector<1x128x128xf32> to vector<128x128xf32>
    %cst_41 = arith.constant dense<0.000000e+00> : vector<64x128xf32>
    %52 = tpu.matmul %49, %51, %cst_41 {dimension_numbers = #tpu.dot_dimension_numbers<[1], [0], [0], [1], [0, 0, 1, 1], [], []>} : vector<64x128xf32>, vector<128x128xf32>, vector<64x128xf32> -> vector<64x128xf32>
    %53 = arith.addf %45, %52 : vector<64x128xf32>
    %c2_i32 = arith.constant 2 : i32
    %54 = arith.addi %4, %c2_i32 : i32
    %c0_42 = arith.constant 0 : index
    %55 = arith.index_cast %54 : i32 to index
    %c0_43 = arith.constant 0 : index
    %c0_44 = arith.constant 0 : index
    %56 = vector.load %arg7[%c0_42, %55, %c0_43, %c0_44] : memref<1x10x10x128xf32, #tpu.memory_space<vmem>>, vector<1x8x8x128xf32>
    %57 = vector.shape_cast %56 : vector<1x8x8x128xf32> to vector<64x128xf32>
    %c6 = arith.constant 6 : index
    %c0_45 = arith.constant 0 : index
    %c0_46 = arith.constant 0 : index
    %58 = vector.load %arg3[%c6, %c0_45, %c0_46] : memref<9x128x128xf32, #tpu.memory_space<vmem>>, vector<1x128x128xf32>
    %59 = vector.shape_cast %58 : vector<1x128x128xf32> to vector<128x128xf32>
    %cst_47 = arith.constant dense<0.000000e+00> : vector<64x128xf32>
    %60 = tpu.matmul %57, %59, %cst_47 {dimension_numbers = #tpu.dot_dimension_numbers<[1], [0], [0], [1], [0, 0, 1, 1], [], []>} : vector<64x128xf32>, vector<128x128xf32>, vector<64x128xf32> -> vector<64x128xf32>
    %61 = arith.addf %53, %60 : vector<64x128xf32>
    %c2_i32_48 = arith.constant 2 : i32
    %62 = arith.addi %4, %c2_i32_48 : i32
    %c0_49 = arith.constant 0 : index
    %63 = arith.index_cast %62 : i32 to index
    %c1_50 = arith.constant 1 : index
    %c0_51 = arith.constant 0 : index
    %64 = vector.load %arg7[%c0_49, %63, %c1_50, %c0_51] : memref<1x10x10x128xf32, #tpu.memory_space<vmem>>, vector<1x8x8x128xf32>
    %65 = vector.shape_cast %64 : vector<1x8x8x128xf32> to vector<64x128xf32>
    %c7 = arith.constant 7 : index
    %c0_52 = arith.constant 0 : index
    %c0_53 = arith.constant 0 : index
    %66 = vector.load %arg3[%c7, %c0_52, %c0_53] : memref<9x128x128xf32, #tpu.memory_space<vmem>>, vector<1x128x128xf32>
    %67 = vector.shape_cast %66 : vector<1x128x128xf32> to vector<128x128xf32>
    %cst_54 = arith.constant dense<0.000000e+00> : vector<64x128xf32>
    %68 = tpu.matmul %65, %67, %cst_54 {dimension_numbers = #tpu.dot_dimension_numbers<[1], [0], [0], [1], [0, 0, 1, 1], [], []>} : vector<64x128xf32>, vector<128x128xf32>, vector<64x128xf32> -> vector<64x128xf32>
    %69 = arith.addf %61, %68 : vector<64x128xf32>
    %c2_i32_55 = arith.constant 2 : i32
    %70 = arith.addi %4, %c2_i32_55 : i32
    %c0_56 = arith.constant 0 : index
    %71 = arith.index_cast %70 : i32 to index
    %c2_57 = arith.constant 2 : index
    %c0_58 = arith.constant 0 : index
    %72 = vector.load %arg7[%c0_56, %71, %c2_57, %c0_58] : memref<1x10x10x128xf32, #tpu.memory_space<vmem>>, vector<1x8x8x128xf32>
    %73 = vector.shape_cast %72 : vector<1x8x8x128xf32> to vector<64x128xf32>
    %c8 = arith.constant 8 : index
    %c0_59 = arith.constant 0 : index
    %c0_60 = arith.constant 0 : index
    %74 = vector.load %arg3[%c8, %c0_59, %c0_60] : memref<9x128x128xf32, #tpu.memory_space<vmem>>, vector<1x128x128xf32>
    %75 = vector.shape_cast %74 : vector<1x128x128xf32> to vector<128x128xf32>
    %cst_61 = arith.constant dense<0.000000e+00> : vector<64x128xf32>
    %76 = tpu.matmul %73, %75, %cst_61 {dimension_numbers = #tpu.dot_dimension_numbers<[1], [0], [0], [1], [0, 0, 1, 1], [], []>} : vector<64x128xf32>, vector<128x128xf32>, vector<64x128xf32> -> vector<64x128xf32>
    %77 = arith.addf %69, %76 : vector<64x128xf32>
    %78 = vector.shape_cast %77 : vector<64x128xf32> to vector<1x8x8x128xf32>
    %c0_62 = arith.constant 0 : index
    %c0_63 = arith.constant 0 : index
    %c0_64 = arith.constant 0 : index
    %c0_65 = arith.constant 0 : index
    %79 = vector.load %arg4[%c0_62, %c0_63, %c0_64, %c0_65] : memref<1x8x8x128xf32, #tpu.memory_space<vmem>>, vector<1x8x8x128xf32>
    tpu.vector_store %arg4[%c0_62, %c0_63, %c0_64, %c0_65], %78 {strides = array<i32>} : memref<1x8x8x128xf32, #tpu.memory_space<vmem>>, vector<1x8x8x128xf32>,
    %c0_66 = arith.constant 0 : index
    %c0_67 = arith.constant 0 : index
    %c0_68 = arith.constant 0 : index
    %80 = vector.load %arg5[%c0_66, %c0_67, %c0_68] : memref<1x1x128xf32, #tpu.memory_space<vmem>>, vector<1x1x128xf32>
    %cst_69 = arith.constant dense<0.000000e+00> : vector<128xf32>
    %81 = vector.multi_reduction <add>, %77, %cst_69 [0] : vector<64x128xf32> to vector<128xf32>
    %82 = vector.shape_cast %81 : vector<128xf32> to vector<1x1x128xf32>
    %83 = arith.addf %80, %82 : vector<1x1x128xf32>
    %c0_70 = arith.constant 0 : index
    %c0_71 = arith.constant 0 : index
    %c0_72 = arith.constant 0 : index
    %84 = vector.load %arg5[%c0_70, %c0_71, %c0_72] : memref<1x1x128xf32, #tpu.memory_space<vmem>>, vector<1x1x128xf32>
    tpu.vector_store %arg5[%c0_70, %c0_71, %c0_72], %83 {strides = array<i32>} : memref<1x1x128xf32, #tpu.memory_space<vmem>>, vector<1x1x128xf32>,
    %c0_73 = arith.constant 0 : index
    %c0_74 = arith.constant 0 : index
    %c0_75 = arith.constant 0 : index
    %85 = vector.load %arg6[%c0_73, %c0_74, %c0_75] : memref<1x1x128xf32, #tpu.memory_space<vmem>>, vector<1x1x128xf32>
    %86 = arith.mulf %77, %77 : vector<64x128xf32>
    %cst_76 = arith.constant dense<0.000000e+00> : vector<128xf32>
    %87 = vector.multi_reduction <add>, %86, %cst_76 [0] : vector<64x128xf32> to vector<128xf32>
    %88 = vector.shape_cast %87 : vector<128xf32> to vector<1x1x128xf32>
    %89 = arith.addf %85, %88 : vector<1x1x128xf32>
    %c0_77 = arith.constant 0 : index
    %c0_78 = arith.constant 0 : index
    %c0_79 = arith.constant 0 : index
    %90 = vector.load %arg6[%c0_77, %c0_78, %c0_79] : memref<1x1x128xf32, #tpu.memory_space<vmem>>, vector<1x1x128xf32>
    tpu.vector_store %arg6[%c0_77, %c0_78, %c0_79], %89 {strides = array<i32>} : memref<1x1x128xf32, #tpu.memory_space<vmem>>, vector<1x1x128xf32>,
    return
  }
  func.func @transform_0(%arg0: i32, %arg1: i32) -> (i32, i32, i32, i32, i32, i32) {
    %c0_i32 = arith.constant 0 : i32
    %c0_i32_0 = arith.constant 0 : i32
    %c0_i32_1 = arith.constant 0 : i32
    %c0_i32_2 = arith.constant 0 : i32
    %c0_i32_3 = arith.constant 0 : i32
    %c0_i32_4 = arith.constant 0 : i32
    return %arg0, %c0_i32, %c0_i32_0, %c0_i32_1, %c0_i32_2, %c0_i32_3 : i32, i32, i32, i32, i32, i32
  }
  func.func @transform_1(%arg0: i32, %arg1: i32) -> (i32, i32, i32) {
    %c0_i32 = arith.constant 0 : i32
    %c0_i32_0 = arith.constant 0 : i32
    %c0_i32_1 = arith.constant 0 : i32
    %c0_i32_2 = arith.constant 0 : i32
    return %c0_i32, %c0_i32_0, %c0_i32_1 : i32, i32, i32
  }
  func.func @transform_2(%arg0: i32, %arg1: i32) -> (i32, i32, i32, i32) {
    %c0_i32 = arith.constant 0 : i32
    %c0_i32_0 = arith.constant 0 : i32
    %c0_i32_1 = arith.constant 0 : i32
    return %arg0, %arg1, %c0_i32, %c0_i32_0 : i32, i32, i32, i32
  }
  func.func @transform_3(%arg0: i32, %arg1: i32) -> (i32, i32, i32) {
    %c0_i32 = arith.constant 0 : i32
    %c0_i32_0 = arith.constant 0 : i32
    %c0_i32_1 = arith.constant 0 : i32
    return %arg0, %c0_i32, %c0_i32_0 : i32, i32, i32
  }
  func.func @transform_4(%arg0: i32, %arg1: i32) -> (i32, i32, i32) {
    %c0_i32 = arith.constant 0 : i32
    %c0_i32_0 = arith.constant 0 : i32
    %c0_i32_1 = arith.constant 0 : i32
    return %arg0, %c0_i32, %c0_i32_0 : i32, i32, i32
  }
}

module attributes {stable_mosaic.version = 11 : i64} {
  func.func @_bn_relu_kernel(%arg0: i32, %arg1: i32, %arg2: memref<1x8x8x128xf32, #tpu.memory_space<vmem>>, %arg3: memref<1x128xf32, #tpu.memory_space<vmem>>, %arg4: memref<1x128xf32, #tpu.memory_space<vmem>>, %arg5: memref<1x8x8x128xf32, #tpu.memory_space<vmem>>) attributes {dimension_semantics = [#tpu.dimension_semantics<parallel>, #tpu.dimension_semantics<parallel>], iteration_bounds = array<i64: 2, 1>, scalar_prefetch = 0 : i64, scratch_operands = 0 : i64, tpu.core_type = #tpu.core_type<tc>, window_params = [{transform_indices = @transform_0, window_bounds = array<i64: 1, 8, 8, 128>}, {pipeline_mode = #tpu.pipeline_mode<synchronous>, transform_indices = @transform_1, window_bounds = array<i64: 1, 128>}, {pipeline_mode = #tpu.pipeline_mode<synchronous>, transform_indices = @transform_2, window_bounds = array<i64: 1, 128>}, {transform_indices = @transform_3, window_bounds = array<i64: 1, 8, 8, 128>}]} {
    %c0 = arith.constant 0 : index
    %c0_0 = arith.constant 0 : index
    %c0_1 = arith.constant 0 : index
    %c0_2 = arith.constant 0 : index
    %0 = vector.load %arg2[%c0, %c0_0, %c0_1, %c0_2] : memref<1x8x8x128xf32, #tpu.memory_space<vmem>>, vector<1x8x8x128xf32>
    %c0_3 = arith.constant 0 : index
    %c0_4 = arith.constant 0 : index
    %1 = vector.load %arg3[%c0_3, %c0_4] : memref<1x128xf32, #tpu.memory_space<vmem>>, vector<1x128xf32>
    %2 = vector.shape_cast %1 : vector<1x128xf32> to vector<1x1x1x128xf32>
    %3 = vector.broadcast %2 : vector<1x1x1x128xf32> to vector<1x8x8x128xf32>
    %4 = arith.mulf %0, %3 : vector<1x8x8x128xf32>
    %c0_5 = arith.constant 0 : index
    %c0_6 = arith.constant 0 : index
    %5 = vector.load %arg4[%c0_5, %c0_6] : memref<1x128xf32, #tpu.memory_space<vmem>>, vector<1x128xf32>
    %6 = vector.shape_cast %5 : vector<1x128xf32> to vector<1x1x1x128xf32>
    %7 = vector.broadcast %6 : vector<1x1x1x128xf32> to vector<1x8x8x128xf32>
    %8 = arith.addf %4, %7 : vector<1x8x8x128xf32>
    %cst = arith.constant 0.000000e+00 : f32
    %9 = vector.broadcast %cst : f32 to vector<1x8x8x128xf32>
    %10 = arith.maximumf %8, %9 : vector<1x8x8x128xf32>
    %c0_7 = arith.constant 0 : index
    %c0_8 = arith.constant 0 : index
    %c0_9 = arith.constant 0 : index
    %c0_10 = arith.constant 0 : index
    %11 = vector.load %arg5[%c0_7, %c0_8, %c0_9, %c0_10] : memref<1x8x8x128xf32, #tpu.memory_space<vmem>>, vector<1x8x8x128xf32>
    tpu.vector_store %arg5[%c0_7, %c0_8, %c0_9, %c0_10], %10 {strides = array<i32>} : memref<1x8x8x128xf32, #tpu.memory_space<vmem>>, vector<1x8x8x128xf32>,
    return
  }
  func.func @transform_0(%arg0: i32, %arg1: i32) -> (i32, i32, i32, i32) {
    %c0_i32 = arith.constant 0 : i32
    %c0_i32_0 = arith.constant 0 : i32
    %c0_i32_1 = arith.constant 0 : i32
    return %arg0, %arg1, %c0_i32, %c0_i32_0 : i32, i32, i32, i32
  }
  func.func @transform_1(%arg0: i32, %arg1: i32) -> (i32, i32) {
    %c0_i32 = arith.constant 0 : i32
    %c0_i32_0 = arith.constant 0 : i32
    %c0_i32_1 = arith.constant 0 : i32
    return %c0_i32, %c0_i32_0 : i32, i32
  }
  func.func @transform_2(%arg0: i32, %arg1: i32) -> (i32, i32) {
    %c0_i32 = arith.constant 0 : i32
    %c0_i32_0 = arith.constant 0 : i32
    %c0_i32_1 = arith.constant 0 : i32
    return %c0_i32, %c0_i32_0 : i32, i32
  }
  func.func @transform_3(%arg0: i32, %arg1: i32) -> (i32, i32, i32, i32) {
    %c0_i32 = arith.constant 0 : i32
    %c0_i32_0 = arith.constant 0 : i32
    %c0_i32_1 = arith.constant 0 : i32
    return %arg0, %arg1, %c0_i32, %c0_i32_0 : i32, i32, i32, i32
  }
}

module attributes {stable_mosaic.version = 11 : i64} {
  func.func @_conv3x3_stats_kernel(%arg0: i32, %arg1: i32, %arg2: memref<1x8x8x128xf32, #tpu.memory_space<vmem>>, %arg3: memref<1x128xf32, #tpu.memory_space<vmem>>, %arg4: memref<1x128xf32, #tpu.memory_space<vmem>>, %arg5: memref<9x128x128xf32, #tpu.memory_space<vmem>>, %arg6: memref<1x8x8x128xf32, #tpu.memory_space<vmem>>, %arg7: memref<1x1x128xf32, #tpu.memory_space<vmem>>, %arg8: memref<1x1x128xf32, #tpu.memory_space<vmem>>, %arg9: memref<1x10x10x128xf32, #tpu.memory_space<vmem>>) attributes {dimension_semantics = [#tpu.dimension_semantics<parallel>, #tpu.dimension_semantics<arbitrary>], iteration_bounds = array<i64: 2, 1>, scalar_prefetch = 0 : i64, scratch_operands = 1 : i64, tpu.core_type = #tpu.core_type<tc>, window_params = [{transform_indices = @transform_0, window_bounds = array<i64: 1, 8, 8, 128>}, {pipeline_mode = #tpu.pipeline_mode<synchronous>, transform_indices = @transform_1, window_bounds = array<i64: 1, 128>}, {pipeline_mode = #tpu.pipeline_mode<synchronous>, transform_indices = @transform_2, window_bounds = array<i64: 1, 128>}, {pipeline_mode = #tpu.pipeline_mode<synchronous>, transform_indices = @transform_3, window_bounds = array<i64: 9, 128, 128>}, {transform_indices = @transform_4, window_bounds = array<i64: 1, 8, 8, 128>}, {transform_indices = @transform_5, window_bounds = array<i64: 1, 1, 128>}, {transform_indices = @transform_6, window_bounds = array<i64: 1, 1, 128>}]} {
    %c0_i32 = arith.constant 0 : i32
    %0 = arith.cmpi eq, %arg1, %c0_i32 : i32
    %1 = arith.extui %0 : i1 to i32
    %c0_i32_0 = arith.constant 0 : i32
    %2 = arith.cmpi ne, %1, %c0_i32_0 : i32
    scf.if %2 {
      %cst_80 = arith.constant 0.000000e+00 : f32
      %91 = vector.broadcast %cst_80 : f32 to vector<1x10x10x128xf32>
      %c0_81 = arith.constant 0 : index
      %c0_82 = arith.constant 0 : index
      %c0_83 = arith.constant 0 : index
      %c0_84 = arith.constant 0 : index
      %92 = vector.load %arg9[%c0_81, %c0_82, %c0_83, %c0_84] : memref<1x10x10x128xf32, #tpu.memory_space<vmem>>, vector<1x10x10x128xf32>
      tpu.vector_store %arg9[%c0_81, %c0_82, %c0_83, %c0_84], %91 {strides = array<i32>} : memref<1x10x10x128xf32, #tpu.memory_space<vmem>>, vector<1x10x10x128xf32>,
      %c0_85 = arith.constant 0 : index
      %c0_86 = arith.constant 0 : index
      %c0_87 = arith.constant 0 : index
      %c0_88 = arith.constant 0 : index
      %93 = vector.load %arg2[%c0_85, %c0_86, %c0_87, %c0_88] : memref<1x8x8x128xf32, #tpu.memory_space<vmem>>, vector<1x8x8x128xf32>
      %c0_89 = arith.constant 0 : index
      %c0_90 = arith.constant 0 : index
      %94 = vector.load %arg3[%c0_89, %c0_90] : memref<1x128xf32, #tpu.memory_space<vmem>>, vector<1x128xf32>
      %95 = vector.shape_cast %94 : vector<1x128xf32> to vector<1x1x1x128xf32>
      %96 = vector.broadcast %95 : vector<1x1x1x128xf32> to vector<1x8x8x128xf32>
      %97 = arith.mulf %93, %96 : vector<1x8x8x128xf32>
      %c0_91 = arith.constant 0 : index
      %c0_92 = arith.constant 0 : index
      %98 = vector.load %arg4[%c0_91, %c0_92] : memref<1x128xf32, #tpu.memory_space<vmem>>, vector<1x128xf32>
      %99 = vector.shape_cast %98 : vector<1x128xf32> to vector<1x1x1x128xf32>
      %100 = vector.broadcast %99 : vector<1x1x1x128xf32> to vector<1x8x8x128xf32>
      %101 = arith.addf %97, %100 : vector<1x8x8x128xf32>
      %cst_93 = arith.constant 0.000000e+00 : f32
      %102 = vector.broadcast %cst_93 : f32 to vector<1x8x8x128xf32>
      %103 = arith.maximumf %101, %102 : vector<1x8x8x128xf32>
      %c0_94 = arith.constant 0 : index
      %c1_95 = arith.constant 1 : index
      %c1_96 = arith.constant 1 : index
      %c0_97 = arith.constant 0 : index
      %104 = vector.load %arg9[%c0_94, %c1_95, %c1_96, %c0_97] : memref<1x10x10x128xf32, #tpu.memory_space<vmem>>, vector<1x8x8x128xf32>
      tpu.vector_store %arg9[%c0_94, %c1_95, %c1_96, %c0_97], %103 {strides = array<i32>} : memref<1x10x10x128xf32, #tpu.memory_space<vmem>>, vector<1x8x8x128xf32>,
      %cst_98 = arith.constant 0.000000e+00 : f32
      %105 = vector.broadcast %cst_98 : f32 to vector<1x1x128xf32>
      %c0_99 = arith.constant 0 : index
      %c0_100 = arith.constant 0 : index
      %c0_101 = arith.constant 0 : index
      %106 = vector.load %arg7[%c0_99, %c0_100, %c0_101] : memref<1x1x128xf32, #tpu.memory_space<vmem>>, vector<1x1x128xf32>
      tpu.vector_store %arg7[%c0_99, %c0_100, %c0_101], %105 {strides = array<i32>} : memref<1x1x128xf32, #tpu.memory_space<vmem>>, vector<1x1x128xf32>,
      %cst_102 = arith.constant 0.000000e+00 : f32
      %107 = vector.broadcast %cst_102 : f32 to vector<1x1x128xf32>
      %c0_103 = arith.constant 0 : index
      %c0_104 = arith.constant 0 : index
      %c0_105 = arith.constant 0 : index
      %108 = vector.load %arg8[%c0_103, %c0_104, %c0_105] : memref<1x1x128xf32, #tpu.memory_space<vmem>>, vector<1x1x128xf32>
      tpu.vector_store %arg8[%c0_103, %c0_104, %c0_105], %107 {strides = array<i32>} : memref<1x1x128xf32, #tpu.memory_space<vmem>>, vector<1x1x128xf32>,
    } else {
    }
    %c8_i32 = arith.constant 8 : i32
    %3 = arith.muli %arg1, %c8_i32 : i32
    %4 = tpu.assume_multiple %3, 8 : i32
    %cst = arith.constant 0.000000e+00 : f32
    %5 = vector.broadcast %cst : f32 to vector<64x128xf32>
    %c0_i32_1 = arith.constant 0 : i32
    %6 = arith.addi %4, %c0_i32_1 : i32
    %c0 = arith.constant 0 : index
    %7 = arith.index_cast %6 : i32 to index
    %c0_2 = arith.constant 0 : index
    %c0_3 = arith.constant 0 : index
    %8 = vector.load %arg9[%c0, %7, %c0_2, %c0_3] : memref<1x10x10x128xf32, #tpu.memory_space<vmem>>, vector<1x8x8x128xf32>
    %9 = vector.shape_cast %8 : vector<1x8x8x128xf32> to vector<64x128xf32>
    %c0_4 = arith.constant 0 : index
    %c0_5 = arith.constant 0 : index
    %c0_6 = arith.constant 0 : index
    %10 = vector.load %arg5[%c0_4, %c0_5, %c0_6] : memref<9x128x128xf32, #tpu.memory_space<vmem>>, vector<1x128x128xf32>
    %11 = vector.shape_cast %10 : vector<1x128x128xf32> to vector<128x128xf32>
    %cst_7 = arith.constant dense<0.000000e+00> : vector<64x128xf32>
    %12 = tpu.matmul %9, %11, %cst_7 {dimension_numbers = #tpu.dot_dimension_numbers<[1], [0], [0], [1], [0, 0, 1, 1], [], []>} : vector<64x128xf32>, vector<128x128xf32>, vector<64x128xf32> -> vector<64x128xf32>
    %13 = arith.addf %5, %12 : vector<64x128xf32>
    %c0_i32_8 = arith.constant 0 : i32
    %14 = arith.addi %4, %c0_i32_8 : i32
    %c0_9 = arith.constant 0 : index
    %15 = arith.index_cast %14 : i32 to index
    %c1 = arith.constant 1 : index
    %c0_10 = arith.constant 0 : index
    %16 = vector.load %arg9[%c0_9, %15, %c1, %c0_10] : memref<1x10x10x128xf32, #tpu.memory_space<vmem>>, vector<1x8x8x128xf32>
    %17 = vector.shape_cast %16 : vector<1x8x8x128xf32> to vector<64x128xf32>
    %c1_11 = arith.constant 1 : index
    %c0_12 = arith.constant 0 : index
    %c0_13 = arith.constant 0 : index
    %18 = vector.load %arg5[%c1_11, %c0_12, %c0_13] : memref<9x128x128xf32, #tpu.memory_space<vmem>>, vector<1x128x128xf32>
    %19 = vector.shape_cast %18 : vector<1x128x128xf32> to vector<128x128xf32>
    %cst_14 = arith.constant dense<0.000000e+00> : vector<64x128xf32>
    %20 = tpu.matmul %17, %19, %cst_14 {dimension_numbers = #tpu.dot_dimension_numbers<[1], [0], [0], [1], [0, 0, 1, 1], [], []>} : vector<64x128xf32>, vector<128x128xf32>, vector<64x128xf32> -> vector<64x128xf32>
    %21 = arith.addf %13, %20 : vector<64x128xf32>
    %c0_i32_15 = arith.constant 0 : i32
    %22 = arith.addi %4, %c0_i32_15 : i32
    %c0_16 = arith.constant 0 : index
    %23 = arith.index_cast %22 : i32 to index
    %c2 = arith.constant 2 : index
    %c0_17 = arith.constant 0 : index
    %24 = vector.load %arg9[%c0_16, %23, %c2, %c0_17] : memref<1x10x10x128xf32, #tpu.memory_space<vmem>>, vector<1x8x8x128xf32>
    %25 = vector.shape_cast %24 : vector<1x8x8x128xf32> to vector<64x128xf32>
    %c2_18 = arith.constant 2 : index
    %c0_19 = arith.constant 0 : index
    %c0_20 = arith.constant 0 : index
    %26 = vector.load %arg5[%c2_18, %c0_19, %c0_20] : memref<9x128x128xf32, #tpu.memory_space<vmem>>, vector<1x128x128xf32>
    %27 = vector.shape_cast %26 : vector<1x128x128xf32> to vector<128x128xf32>
    %cst_21 = arith.constant dense<0.000000e+00> : vector<64x128xf32>
    %28 = tpu.matmul %25, %27, %cst_21 {dimension_numbers = #tpu.dot_dimension_numbers<[1], [0], [0], [1], [0, 0, 1, 1], [], []>} : vector<64x128xf32>, vector<128x128xf32>, vector<64x128xf32> -> vector<64x128xf32>
    %29 = arith.addf %21, %28 : vector<64x128xf32>
    %c1_i32 = arith.constant 1 : i32
    %30 = arith.addi %4, %c1_i32 : i32
    %c0_22 = arith.constant 0 : index
    %31 = arith.index_cast %30 : i32 to index
    %c0_23 = arith.constant 0 : index
    %c0_24 = arith.constant 0 : index
    %32 = vector.load %arg9[%c0_22, %31, %c0_23, %c0_24] : memref<1x10x10x128xf32, #tpu.memory_space<vmem>>, vector<1x8x8x128xf32>
    %33 = vector.shape_cast %32 : vector<1x8x8x128xf32> to vector<64x128xf32>
    %c3 = arith.constant 3 : index
    %c0_25 = arith.constant 0 : index
    %c0_26 = arith.constant 0 : index
    %34 = vector.load %arg5[%c3, %c0_25, %c0_26] : memref<9x128x128xf32, #tpu.memory_space<vmem>>, vector<1x128x128xf32>
    %35 = vector.shape_cast %34 : vector<1x128x128xf32> to vector<128x128xf32>
    %cst_27 = arith.constant dense<0.000000e+00> : vector<64x128xf32>
    %36 = tpu.matmul %33, %35, %cst_27 {dimension_numbers = #tpu.dot_dimension_numbers<[1], [0], [0], [1], [0, 0, 1, 1], [], []>} : vector<64x128xf32>, vector<128x128xf32>, vector<64x128xf32> -> vector<64x128xf32>
    %37 = arith.addf %29, %36 : vector<64x128xf32>
    %c1_i32_28 = arith.constant 1 : i32
    %38 = arith.addi %4, %c1_i32_28 : i32
    %c0_29 = arith.constant 0 : index
    %39 = arith.index_cast %38 : i32 to index
    %c1_30 = arith.constant 1 : index
    %c0_31 = arith.constant 0 : index
    %40 = vector.load %arg9[%c0_29, %39, %c1_30, %c0_31] : memref<1x10x10x128xf32, #tpu.memory_space<vmem>>, vector<1x8x8x128xf32>
    %41 = vector.shape_cast %40 : vector<1x8x8x128xf32> to vector<64x128xf32>
    %c4 = arith.constant 4 : index
    %c0_32 = arith.constant 0 : index
    %c0_33 = arith.constant 0 : index
    %42 = vector.load %arg5[%c4, %c0_32, %c0_33] : memref<9x128x128xf32, #tpu.memory_space<vmem>>, vector<1x128x128xf32>
    %43 = vector.shape_cast %42 : vector<1x128x128xf32> to vector<128x128xf32>
    %cst_34 = arith.constant dense<0.000000e+00> : vector<64x128xf32>
    %44 = tpu.matmul %41, %43, %cst_34 {dimension_numbers = #tpu.dot_dimension_numbers<[1], [0], [0], [1], [0, 0, 1, 1], [], []>} : vector<64x128xf32>, vector<128x128xf32>, vector<64x128xf32> -> vector<64x128xf32>
    %45 = arith.addf %37, %44 : vector<64x128xf32>
    %c1_i32_35 = arith.constant 1 : i32
    %46 = arith.addi %4, %c1_i32_35 : i32
    %c0_36 = arith.constant 0 : index
    %47 = arith.index_cast %46 : i32 to index
    %c2_37 = arith.constant 2 : index
    %c0_38 = arith.constant 0 : index
    %48 = vector.load %arg9[%c0_36, %47, %c2_37, %c0_38] : memref<1x10x10x128xf32, #tpu.memory_space<vmem>>, vector<1x8x8x128xf32>
    %49 = vector.shape_cast %48 : vector<1x8x8x128xf32> to vector<64x128xf32>
    %c5 = arith.constant 5 : index
    %c0_39 = arith.constant 0 : index
    %c0_40 = arith.constant 0 : index
    %50 = vector.load %arg5[%c5, %c0_39, %c0_40] : memref<9x128x128xf32, #tpu.memory_space<vmem>>, vector<1x128x128xf32>
    %51 = vector.shape_cast %50 : vector<1x128x128xf32> to vector<128x128xf32>
    %cst_41 = arith.constant dense<0.000000e+00> : vector<64x128xf32>
    %52 = tpu.matmul %49, %51, %cst_41 {dimension_numbers = #tpu.dot_dimension_numbers<[1], [0], [0], [1], [0, 0, 1, 1], [], []>} : vector<64x128xf32>, vector<128x128xf32>, vector<64x128xf32> -> vector<64x128xf32>
    %53 = arith.addf %45, %52 : vector<64x128xf32>
    %c2_i32 = arith.constant 2 : i32
    %54 = arith.addi %4, %c2_i32 : i32
    %c0_42 = arith.constant 0 : index
    %55 = arith.index_cast %54 : i32 to index
    %c0_43 = arith.constant 0 : index
    %c0_44 = arith.constant 0 : index
    %56 = vector.load %arg9[%c0_42, %55, %c0_43, %c0_44] : memref<1x10x10x128xf32, #tpu.memory_space<vmem>>, vector<1x8x8x128xf32>
    %57 = vector.shape_cast %56 : vector<1x8x8x128xf32> to vector<64x128xf32>
    %c6 = arith.constant 6 : index
    %c0_45 = arith.constant 0 : index
    %c0_46 = arith.constant 0 : index
    %58 = vector.load %arg5[%c6, %c0_45, %c0_46] : memref<9x128x128xf32, #tpu.memory_space<vmem>>, vector<1x128x128xf32>
    %59 = vector.shape_cast %58 : vector<1x128x128xf32> to vector<128x128xf32>
    %cst_47 = arith.constant dense<0.000000e+00> : vector<64x128xf32>
    %60 = tpu.matmul %57, %59, %cst_47 {dimension_numbers = #tpu.dot_dimension_numbers<[1], [0], [0], [1], [0, 0, 1, 1], [], []>} : vector<64x128xf32>, vector<128x128xf32>, vector<64x128xf32> -> vector<64x128xf32>
    %61 = arith.addf %53, %60 : vector<64x128xf32>
    %c2_i32_48 = arith.constant 2 : i32
    %62 = arith.addi %4, %c2_i32_48 : i32
    %c0_49 = arith.constant 0 : index
    %63 = arith.index_cast %62 : i32 to index
    %c1_50 = arith.constant 1 : index
    %c0_51 = arith.constant 0 : index
    %64 = vector.load %arg9[%c0_49, %63, %c1_50, %c0_51] : memref<1x10x10x128xf32, #tpu.memory_space<vmem>>, vector<1x8x8x128xf32>
    %65 = vector.shape_cast %64 : vector<1x8x8x128xf32> to vector<64x128xf32>
    %c7 = arith.constant 7 : index
    %c0_52 = arith.constant 0 : index
    %c0_53 = arith.constant 0 : index
    %66 = vector.load %arg5[%c7, %c0_52, %c0_53] : memref<9x128x128xf32, #tpu.memory_space<vmem>>, vector<1x128x128xf32>
    %67 = vector.shape_cast %66 : vector<1x128x128xf32> to vector<128x128xf32>
    %cst_54 = arith.constant dense<0.000000e+00> : vector<64x128xf32>
    %68 = tpu.matmul %65, %67, %cst_54 {dimension_numbers = #tpu.dot_dimension_numbers<[1], [0], [0], [1], [0, 0, 1, 1], [], []>} : vector<64x128xf32>, vector<128x128xf32>, vector<64x128xf32> -> vector<64x128xf32>
    %69 = arith.addf %61, %68 : vector<64x128xf32>
    %c2_i32_55 = arith.constant 2 : i32
    %70 = arith.addi %4, %c2_i32_55 : i32
    %c0_56 = arith.constant 0 : index
    %71 = arith.index_cast %70 : i32 to index
    %c2_57 = arith.constant 2 : index
    %c0_58 = arith.constant 0 : index
    %72 = vector.load %arg9[%c0_56, %71, %c2_57, %c0_58] : memref<1x10x10x128xf32, #tpu.memory_space<vmem>>, vector<1x8x8x128xf32>
    %73 = vector.shape_cast %72 : vector<1x8x8x128xf32> to vector<64x128xf32>
    %c8 = arith.constant 8 : index
    %c0_59 = arith.constant 0 : index
    %c0_60 = arith.constant 0 : index
    %74 = vector.load %arg5[%c8, %c0_59, %c0_60] : memref<9x128x128xf32, #tpu.memory_space<vmem>>, vector<1x128x128xf32>
    %75 = vector.shape_cast %74 : vector<1x128x128xf32> to vector<128x128xf32>
    %cst_61 = arith.constant dense<0.000000e+00> : vector<64x128xf32>
    %76 = tpu.matmul %73, %75, %cst_61 {dimension_numbers = #tpu.dot_dimension_numbers<[1], [0], [0], [1], [0, 0, 1, 1], [], []>} : vector<64x128xf32>, vector<128x128xf32>, vector<64x128xf32> -> vector<64x128xf32>
    %77 = arith.addf %69, %76 : vector<64x128xf32>
    %78 = vector.shape_cast %77 : vector<64x128xf32> to vector<1x8x8x128xf32>
    %c0_62 = arith.constant 0 : index
    %c0_63 = arith.constant 0 : index
    %c0_64 = arith.constant 0 : index
    %c0_65 = arith.constant 0 : index
    %79 = vector.load %arg6[%c0_62, %c0_63, %c0_64, %c0_65] : memref<1x8x8x128xf32, #tpu.memory_space<vmem>>, vector<1x8x8x128xf32>
    tpu.vector_store %arg6[%c0_62, %c0_63, %c0_64, %c0_65], %78 {strides = array<i32>} : memref<1x8x8x128xf32, #tpu.memory_space<vmem>>, vector<1x8x8x128xf32>,
    %c0_66 = arith.constant 0 : index
    %c0_67 = arith.constant 0 : index
    %c0_68 = arith.constant 0 : index
    %80 = vector.load %arg7[%c0_66, %c0_67, %c0_68] : memref<1x1x128xf32, #tpu.memory_space<vmem>>, vector<1x1x128xf32>
    %cst_69 = arith.constant dense<0.000000e+00> : vector<128xf32>
    %81 = vector.multi_reduction <add>, %77, %cst_69 [0] : vector<64x128xf32> to vector<128xf32>
    %82 = vector.shape_cast %81 : vector<128xf32> to vector<1x1x128xf32>
    %83 = arith.addf %80, %82 : vector<1x1x128xf32>
    %c0_70 = arith.constant 0 : index
    %c0_71 = arith.constant 0 : index
    %c0_72 = arith.constant 0 : index
    %84 = vector.load %arg7[%c0_70, %c0_71, %c0_72] : memref<1x1x128xf32, #tpu.memory_space<vmem>>, vector<1x1x128xf32>
    tpu.vector_store %arg7[%c0_70, %c0_71, %c0_72], %83 {strides = array<i32>} : memref<1x1x128xf32, #tpu.memory_space<vmem>>, vector<1x1x128xf32>,
    %c0_73 = arith.constant 0 : index
    %c0_74 = arith.constant 0 : index
    %c0_75 = arith.constant 0 : index
    %85 = vector.load %arg8[%c0_73, %c0_74, %c0_75] : memref<1x1x128xf32, #tpu.memory_space<vmem>>, vector<1x1x128xf32>
    %86 = arith.mulf %77, %77 : vector<64x128xf32>
    %cst_76 = arith.constant dense<0.000000e+00> : vector<128xf32>
    %87 = vector.multi_reduction <add>, %86, %cst_76 [0] : vector<64x128xf32> to vector<128xf32>
    %88 = vector.shape_cast %87 : vector<128xf32> to vector<1x1x128xf32>
    %89 = arith.addf %85, %88 : vector<1x1x128xf32>
    %c0_77 = arith.constant 0 : index
    %c0_78 = arith.constant 0 : index
    %c0_79 = arith.constant 0 : index
    %90 = vector.load %arg8[%c0_77, %c0_78, %c0_79] : memref<1x1x128xf32, #tpu.memory_space<vmem>>, vector<1x1x128xf32>
    tpu.vector_store %arg8[%c0_77, %c0_78, %c0_79], %89 {strides = array<i32>} : memref<1x1x128xf32, #tpu.memory_space<vmem>>, vector<1x1x128xf32>,
    return
  }
  func.func @transform_0(%arg0: i32, %arg1: i32) -> (i32, i32, i32, i32) {
    %c0_i32 = arith.constant 0 : i32
    %c0_i32_0 = arith.constant 0 : i32
    %c0_i32_1 = arith.constant 0 : i32
    %c0_i32_2 = arith.constant 0 : i32
    return %arg0, %c0_i32, %c0_i32_0, %c0_i32_1 : i32, i32, i32, i32
  }
  func.func @transform_1(%arg0: i32, %arg1: i32) -> (i32, i32) {
    %c0_i32 = arith.constant 0 : i32
    %c0_i32_0 = arith.constant 0 : i32
    %c0_i32_1 = arith.constant 0 : i32
    return %c0_i32, %c0_i32_0 : i32, i32
  }
  func.func @transform_2(%arg0: i32, %arg1: i32) -> (i32, i32) {
    %c0_i32 = arith.constant 0 : i32
    %c0_i32_0 = arith.constant 0 : i32
    %c0_i32_1 = arith.constant 0 : i32
    return %c0_i32, %c0_i32_0 : i32, i32
  }
  func.func @transform_3(%arg0: i32, %arg1: i32) -> (i32, i32, i32) {
    %c0_i32 = arith.constant 0 : i32
    %c0_i32_0 = arith.constant 0 : i32
    %c0_i32_1 = arith.constant 0 : i32
    %c0_i32_2 = arith.constant 0 : i32
    return %c0_i32, %c0_i32_0, %c0_i32_1 : i32, i32, i32
  }
  func.func @transform_4(%arg0: i32, %arg1: i32) -> (i32, i32, i32, i32) {
    %c0_i32 = arith.constant 0 : i32
    %c0_i32_0 = arith.constant 0 : i32
    %c0_i32_1 = arith.constant 0 : i32
    return %arg0, %arg1, %c0_i32, %c0_i32_0 : i32, i32, i32, i32
  }
  func.func @transform_5(%arg0: i32, %arg1: i32) -> (i32, i32, i32) {
    %c0_i32 = arith.constant 0 : i32
    %c0_i32_0 = arith.constant 0 : i32
    %c0_i32_1 = arith.constant 0 : i32
    return %arg0, %c0_i32, %c0_i32_0 : i32, i32, i32
  }
  func.func @transform_6(%arg0: i32, %arg1: i32) -> (i32, i32, i32) {
    %c0_i32 = arith.constant 0 : i32
    %c0_i32_0 = arith.constant 0 : i32
    %c0_i32_1 = arith.constant 0 : i32
    return %arg0, %c0_i32, %c0_i32_0 : i32, i32, i32
  }
}

</mosaic_0001>

<llo_original>
// kernel: down_forward.5
$region0: #{down_forward.5}
  #allocation0 [shape = 'u32[]', space=smem, size = 0x4, offset = 0x4, fixed_abs, tag = 'smem constant byte address 0x4 - core index']
  #allocation1 [shape = 'u32[72,128]{1,0:T(1,128)}', space=vmem, size = 0x9000, scoped, tag = 'internal scratch']
  %s0 = inlined_call_operand.vmem [shape: f32[2,8,8,128], index: 0, kind: input, shape index: {}]
  %s1 = inlined_call_operand.vmem [shape: f32[1,128], index: 1, kind: input, shape index: {}]
  %s2 = inlined_call_operand.vmem [shape: f32[1,128], index: 2, kind: input, shape index: {}]
  %s3 = inlined_call_operand.vmem [shape: f32[2,8,8,128], index: 3, kind: output, shape index: {}]
  %s4 = sld [smem:[#allocation0]]
  $region45: #{down_forward.5} parent=0
    _
  %s6 = ssub.s32 1, %s4
  %s7 = scalar_select 0, %s6, %s4
  loop: start=0, step=1, limit=4
  $region2: #{down_forward.5} parent=0 // loop_pre_header
    _
  $region3: #{down_forward.5} parent=0 // loop_header
    %s9 = sphi 0, %s13
    %p10 = scmp.ge.s32.totalorder %s9, 4
    %s16 = sphi 0, %s28
    %s17 = sphi 0, %s24
    %s18 = sphi 0, %s16
    %s19 = sphi 0, %s17
    %s20 = sphi 0, %s18
    %s21 = sphi 0, %s19
    %s33 = sphi 0, %s35
    %s36 = sphi 0, %s33
    %s37 = sphi 0, %s36
    %s53 = sphi 0, %s37
    %s57 = sphi 0, %s57
    %s59 = sphi 0, %s57
    %s60 = sphi 0, %s59
    %s74 = sphi 0, %s60
    %s78 = sphi 0, %s78
    %s80 = sphi 0, %s78
    %s81 = sphi 0, %s80
    %s95 = sphi 0, %s81
    %s103 = sphi 0, %s105
    %s106 = sphi 0, %s103
    %s107 = sphi 0, %s106
    %s123 = sphi 0, %s107
  $region4: #{down_forward.5} parent=0 // loop_header_branch
    %12 = sbr.rel (%p10) target = $region8
  $region5: #{down_forward.5} parent=0 // loop_body
    %s14 = ssub.s32 %s9, 1
    %s15 = ssub.s32 %s9, 2
    %s22 = sadd.s32 1, %s17
    %p23 = scmp.ge.s32.totalorder %s22, 1
    %s24 = scalar_select %p23, 0, %s22
    %s25 = sadd.s32 1, %s16
    %s26 = scalar_select %p23, %s25, %s16
    %p27 = scmp.ge.s32.totalorder %s26, 2
    %s28 = scalar_select %p27, 0, %s26
    %s29 = ssub.s32 %s16, %s28
    %s30 = ssub.s32 %s17, %s24
    %s31 = sor.u32 %s29, %s30
    %p32 = scmp.eq.s32.totalorder %s31, 0
    %s34 = sadd.s32 %s33, 1
    %s35 = scalar_select %p32, %s33, %s34
    %p38 = pneg %p32
    %p39 = scmp.eq.s32.totalorder %s9, 1
    %p40 = por %p38, %p39
    %p41 = scmp.ne.s32.totalorder %s33, %s36
    %p42 = scmp.eq.s32.totalorder %s9, 0
    %p43 = por %p41, %p42
    %p44 = scmp.ne.s32.totalorder %s33, %s36
    %p45 = scmp.eq.s32.totalorder %s14, 1
    %p46 = por %p44, %p45
    %p47 = scmp.ne.s32.totalorder %s36, %s37
    %p48 = scmp.eq.s32.totalorder %s14, 0
    %p49 = por %p47, %p48
    %p50 = scmp.ne.s32.totalorder %s36, %s37
    %p51 = scmp.eq.s32.totalorder %s15, 1
    %p52 = por %p50, %p51
    %p54 = scmp.ne.s32.totalorder %s37, %s53
    %p55 = scmp.eq.s32.totalorder %s15, 0
    %p56 = por %p54, %p55
    %s58 = sadd.s32 %s57, 1
    %p61 = scmp.eq.s32.totalorder %s9, 1
    %p62 = scmp.ne.s32.totalorder %s57, %s59
    %p63 = scmp.eq.s32.totalorder %s9, 0
    %p64 = por %p62, %p63
    %p65 = scmp.ne.s32.totalorder %s57, %s59
    %p66 = scmp.eq.s32.totalorder %s14, 1
    %p67 = por %p65, %p66
    %p68 = scmp.ne.s32.totalorder %s59, %s60
    %p69 = scmp.eq.s32.totalorder %s14, 0
    %p70 = por %p68, %p69
    %p71 = scmp.ne.s32.totalorder %s59, %s60
    %p72 = scmp.eq.s32.totalorder %s15, 1
    %p73 = por %p71, %p72
    %p75 = scmp.ne.s32.totalorder %s60, %s74
    %p76 = scmp.eq.s32.totalorder %s15, 0
    %p77 = por %p75, %p76
    %s79 = sadd.s32 %s78, 1
    %p82 = scmp.eq.s32.totalorder %s9, 1
    %p83 = scmp.ne.s32.totalorder %s78, %s80
    %p84 = scmp.eq.s32.totalorder %s9, 0
    %p85 = por %p83, %p84
    %p86 = scmp.ne.s32.totalorder %s78, %s80
    %p87 = scmp.eq.s32.totalorder %s14, 1
    %p88 = por %p86, %p87
    %p89 = scmp.ne.s32.totalorder %s80, %s81
    %p90 = scmp.eq.s32.totalorder %s14, 0
    %p91 = por %p89, %p90
    %p92 = scmp.ne.s32.totalorder %s80, %s81
    %p93 = scmp.eq.s32.totalorder %s15, 1
    %p94 = por %p92, %p93
    %p96 = scmp.ne.s32.totalorder %s81, %s95
    %p97 = scmp.eq.s32.totalorder %s15, 0
    %p98 = por %p96, %p97
    %s99 = ssub.s32 %s16, %s28
    %s100 = ssub.s32 %s17, %s24
    %s101 = sor.u32 %s99, %s100
    %p102 = scmp.eq.s32.totalorder %s101, 0
    %s104 = sadd.s32 %s103, 1
    %s105 = scalar_select %p102, %s103, %s104
    %p108 = pneg %p102
    %p109 = scmp.eq.s32.totalorder %s9, 1
    %p110 = por %p108, %p109
    %p111 = scmp.ne.s32.totalorder %s103, %s106
    %p112 = scmp.eq.s32.totalorder %s9, 0
    %p113 = por %p111, %p112
    %p114 = scmp.ne.s32.totalorder %s103, %s106
    %p115 = scmp.eq.s32.totalorder %s14, 1
    %p116 = por %p114, %p115
    %p117 = scmp.ne.s32.totalorder %s106, %s107
    %p118 = scmp.eq.s32.totalorder %s14, 0
    %p119 = por %p117, %p118
    %p120 = scmp.ne.s32.totalorder %s106, %s107
    %p121 = scmp.eq.s32.totalorder %s15, 1
    %p122 = por %p120, %p121
    %p124 = scmp.ne.s32.totalorder %s107, %s123
    %p125 = scmp.eq.s32.totalorder %s15, 0
    %p126 = por %p124, %p125
    %p127 = scmp.le.s32.totalorder 1, %s9
    %p128 = scmp.lt.s32.totalorder %s9, 3
    %p129 = pnand %p127, %p128
    %p130 = pneg %p129
    // Predicated region
    $region9: #{down_forward.5} parent=5 // pred_check
      _
    $region10: #{down_forward.5} parent=5 // pred_check_branch
      %132 = sbr.rel (%p129) target = $region12
    $region11: #{down_forward.5} parent=5 // pred_region
      %s133 = ssub.s32 %s9, 1
      // Predicated region
      $region13: #{down_forward.5} parent=11 // pred_check
        %p134 = pneg %p70
      $region14: #{down_forward.5} parent=11 // pred_check_branch
        %136 = sbr.rel (%p134) target = $region16
      $region15: #{down_forward.5} parent=11 // pred_region
        _
      $region16: #{down_forward.5} parent=11 // pred_fallthru
        _
      // Predicated region
      $region17: #{down_forward.5} parent=11 // pred_check
        %p137 = pneg %p91
      $region18: #{down_forward.5} parent=11 // pred_check_branch
        %139 = sbr.rel (%p137) target = $region20
      $region19: #{down_forward.5} parent=11 // pred_region
        _
      $region20: #{down_forward.5} parent=11 // pred_fallthru
        _
    $region12: #{down_forward.5} parent=5 // pred_fallthru
      _
    %p140 = scmp.lt.s32.totalorder %s9, 2
    // Predicated region
    $region21: #{down_forward.5} parent=5 // pred_check
      %p141 = pneg %p140
    $region22: #{down_forward.5} parent=5 // pred_check_branch
      %143 = sbr.rel (%p141) target = $region24
    $region23: #{down_forward.5} parent=5 // pred_region
      // Predicated region
      $region25: #{down_forward.5} parent=23 // pred_check
        %p144 = pneg %p43
      $region26: #{down_forward.5} parent=23 // pred_check_branch
        %146 = sbr.rel (%p144) target = $region28
      $region27: #{down_forward.5} parent=23 // pred_region
        %s147 = smul.u32 8, %s17
        %p148 = scmp.lt.s32.totalorder %s16, 1
        %s149 = scalar_select %p148, %s16, 1
        %p150 = scmp.lt.s32.totalorder %s147, 7
        %s151 = scalar_select %p150, %s147, 7
        %s152 = smul.addr %s149, 8
        %s153 = sadd.s32 %s151, %s152
        %s154 = smul.addr %s153, 8
        %s155 = scalar_lea.vmem %s0, %s154
        %s156 = smul.u32 8, %s17
      $region28: #{down_forward.5} parent=23 // pred_fallthru
        _
    $region24: #{down_forward.5} parent=5 // pred_fallthru
      _
    %p157 = scmp.le.s32.totalorder 1, %s9
    %p158 = scmp.lt.s32.totalorder %s9, 3
    %p159 = pnand %p157, %p158
    %p160 = pneg %p159
    // Predicated region
    $region29: #{down_forward.5} parent=5 // pred_check
      _
    $region30: #{down_forward.5} parent=5 // pred_check_branch
      %162 = sbr.rel (%p159) target = $region32
    $region31: #{down_forward.5} parent=5 // pred_region
      %s163 = ssub.s32 %s9, 1
      %s164 = smul.u32 8, %s19
      %p165 = scmp.lt.s32.totalorder %s18, 1
      %s166 = scalar_select %p165, %s18, 1
      %p167 = scmp.lt.s32.totalorder %s164, 7
      %s168 = scalar_select %p167, %s164, 7
      %s169 = smul.addr %s166, 8
      %s170 = sadd.s32 %s168, %s169
      %s171 = smul.addr %s170, 8
      %s172 = scalar_lea.vmem %s0, %s171
      %p173 = pneg %p49
      %p174 = pneg %p46
      %p175 = pneg %p70
      %p176 = pneg %p67
      %p177 = pneg %p91
      %p178 = pneg %p88
      %p179 = pneg %p119
      %p180 = pneg %p116
      %s181 = smul.u32 8, %s19
      %p182 = scmp.lt.s32.totalorder %s18, 1
      %s183 = scalar_select %p182, %s18, 1
      %p184 = scmp.lt.s32.totalorder %s181, 7
      %s185 = scalar_select %p184, %s181, 7
      %s186 = smul.addr %s183, 8
      %s187 = sadd.s32 %s185, %s186
      %s188 = smul.addr %s187, 8
      %s189 = scalar_lea.vmem %s3, %s188
      %s190 = smul.u32 8, %s19
      %p191 = scmp.lt.s32.totalorder %s18, 1
      %s192 = scalar_select %p191, %s18, 1
      %p193 = scmp.lt.s32.totalorder %s190, 7
      %s194 = scalar_select %p193, %s190, 7
      %s195 = smul.addr %s192, 8
      %s196 = sadd.s32 %s194, %s195
      %s197 = smul.addr %s196, 8
      %s198 = scalar_lea.vmem %s0, %s197
      %s199 = smul.u32 8, %s19
      %s200 = smul.u32 8, %s19
      %p201 = scmp.lt.s32.totalorder %s18, 1
      %s202 = scalar_select %p201, %s18, 1
      %p203 = scmp.lt.s32.totalorder %s200, 7
      %s204 = scalar_select %p203, %s200, 7
      %s205 = smul.addr %s202, 8
      %s206 = sadd.s32 %s204, %s205
      %s207 = smul.addr %s206, 8
      %s208 = scalar_lea.vmem %s3, %s207
      %s209 = smul.u32 8, %s19
      %v210 = vld [vmem:[%s198] sm:$0xff]
      %v211 = vld [vmem:[%s198 + $0x8] sm:$0xff]
      %v212 = vld [vmem:[%s198 + $0x10] sm:$0xff]
      %v213 = vld [vmem:[%s198 + $0x18] sm:$0xff]
      %v214 = vld [vmem:[%s198 + $0x20] sm:$0xff]
      %v215 = vld [vmem:[%s198 + $0x28] sm:$0xff]
      %v216 = vld [vmem:[%s198 + $0x30] sm:$0xff]
      %v217 = vld [vmem:[%s198 + $0x38] sm:$0xff]
      %v218 = vld [vmem:[%s1] sm:$0x1]
      %v220 = vperm.slane %v218, 0
      %v222 = vmul.f32 %v210, %v220
      %v223 = vmul.f32 %v211, %v220
      %v224 = vmul.f32 %v212, %v220
      %v225 = vmul.f32 %v213, %v220
      %v226 = vmul.f32 %v214, %v220
      %v227 = vmul.f32 %v215, %v220
      %v228 = vmul.f32 %v216, %v220
      %v229 = vmul.f32 %v217, %v220
      %v230 = vld [vmem:[%s2] sm:$0x1]
      %v232 = vperm.slane %v230, 0
      %v234 = vadd.f32 %v222, %v232
      %v235 = vadd.f32 %v223, %v232
      %v236 = vadd.f32 %v224, %v232
      %v237 = vadd.f32 %v225, %v232
      %v238 = vadd.f32 %v226, %v232
      %v239 = vadd.f32 %v227, %v232
      %v240 = vadd.f32 %v228, %v232
      %v241 = vadd.f32 %v229, %v232
      %v242 = vmax.f32 %v234, 0.0
      %v243 = vmax.f32 %v235, 0.0
      %v244 = vmax.f32 %v236, 0.0
      %v245 = vmax.f32 %v237, 0.0
      %v246 = vmax.f32 %v238, 0.0
      %v247 = vmax.f32 %v239, 0.0
      %v248 = vmax.f32 %v240, 0.0
      %v249 = vmax.f32 %v241, 0.0
      %250 = vst [vmem:[%s208] sm:$0xff] %v242
      %251 = vst [vmem:[%s208 + $0x8] sm:$0xff] %v243
      %252 = vst [vmem:[%s208 + $0x10] sm:$0xff] %v244
      %253 = vst [vmem:[%s208 + $0x18] sm:$0xff] %v245
      %254 = vst [vmem:[%s208 + $0x20] sm:$0xff] %v246
      %255 = vst [vmem:[%s208 + $0x28] sm:$0xff] %v247
      %256 = vst [vmem:[%s208 + $0x30] sm:$0xff] %v248
      %257 = vst [vmem:[%s208 + $0x38] sm:$0xff] %v249
      %s258 = smul.u32 8, %s19
      %p259 = scmp.lt.s32.totalorder %s18, 1
      %s260 = scalar_select %p259, %s18, 1
      %p261 = scmp.lt.s32.totalorder %s258, 7
      %s262 = scalar_select %p261, %s258, 7
      %s263 = smul.addr %s260, 8
      %s264 = sadd.s32 %s262, %s263
      %s265 = smul.addr %s264, 8
      %s266 = scalar_lea.vmem %s3, %s265
      // Predicated region
      $region33: #{down_forward.5} parent=31 // pred_check
        %p267 = pneg %p116
      $region34: #{down_forward.5} parent=31 // pred_check_branch
        %269 = sbr.rel (%p267) target = $region36
      $region35: #{down_forward.5} parent=31 // pred_region
        %s270 = smul.u32 8, %s19
      $region36: #{down_forward.5} parent=31 // pred_fallthru
        _
    $region32: #{down_forward.5} parent=5 // pred_fallthru
      _
    %p271 = scmp.le.s32.totalorder 2, %s9
    // Predicated region
    $region37: #{down_forward.5} parent=5 // pred_check
      %p272 = pneg %p271
    $region38: #{down_forward.5} parent=5 // pred_check_branch
      %274 = sbr.rel (%p272) target = $region40
    $region39: #{down_forward.5} parent=5 // pred_region
      %s275 = ssub.s32 %s9, 2
      // Predicated region
      $region41: #{down_forward.5} parent=39 // pred_check
        %p276 = pneg %p122
      $region42: #{down_forward.5} parent=39 // pred_check_branch
        %278 = sbr.rel (%p276) target = $region44
      $region43: #{down_forward.5} parent=39 // pred_region
        %s279 = smul.u32 8, %s21
        %p280 = scmp.lt.s32.totalorder %s20, 1
        %s281 = scalar_select %p280, %s20, 1
        %p282 = scmp.lt.s32.totalorder %s279, 7
        %s283 = scalar_select %p282, %s279, 7
        %s284 = smul.addr %s281, 8
        %s285 = sadd.s32 %s283, %s284
        %s286 = smul.addr %s285, 8
        %s287 = scalar_lea.vmem %s3, %s286
      $region44: #{down_forward.5} parent=39 // pred_fallthru
        _
    $region40: #{down_forward.5} parent=5 // pred_fallthru
      _
  $region6: #{down_forward.5} parent=0 // loop_footer
    %s13 = sadd.s32 1, %s9
  $region7: #{down_forward.5} parent=0 // loop_footer_branch
    %8 = sbr.rel target = $region3
  $region8: #{down_forward.5} parent=0 // loop_exit
    _

// kernel: down_forward.4
$region0: #{down_forward.4}
  #allocation0 [shape = 'u32[]', space=smem, size = 0x4, offset = 0x4, fixed_abs, tag = 'smem constant byte address 0x4 - core index']
  #allocation1 [shape = 'u32[72,128]{1,0:T(1,128)}', space=vmem, size = 0x9000, scoped, tag = 'internal scratch']
  #allocation2 [shape = 'f32[1,10,10,128]{3,2,1,0:T(8,128)}', space=vmem, size = 0x14000, scoped, tag = 'scratch operand']
  %s0 = inlined_call_operand.vmem [shape: f32[2,8,8,128], index: 0, kind: input, shape index: {}]
  %s1 = inlined_call_operand.vmem [shape: f32[1,128], index: 1, kind: input, shape index: {}]
  %s2 = inlined_call_operand.vmem [shape: f32[1,128], index: 2, kind: input, shape index: {}]
  %s3 = inlined_call_operand.vmem [shape: f32[9,128,128], index: 3, kind: input, shape index: {}]
  %s4 = inlined_call_operand.vmem [shape: f32[2,8,8,128], index: 4, kind: output, shape index: {0}]
  %s5 = inlined_call_operand.vmem [shape: f32[2,1,128], index: 5, kind: output, shape index: {1}]
  %s6 = inlined_call_operand.vmem [shape: f32[2,1,128], index: 6, kind: output, shape index: {2}]
  %7 = xla_tuple %s4, %s5, %s6
  %s8 = sld [smem:[#allocation0]]
  $region69: #{down_forward.4} parent=0
    _
  %s10 = ssub.s32 1, %s8
  %s11 = scalar_select 0, %s10, %s8
  loop: start=0, step=1, limit=4
  $region2: #{down_forward.4} parent=0 // loop_pre_header
    _
  $region3: #{down_forward.4} parent=0 // loop_header
    %s13 = sphi 0, %s17
    %p14 = scmp.ge.s32.totalorder %s13, 4
    %s20 = sphi 0, %s32
    %s21 = sphi 0, %s28
    %s22 = sphi 0, %s20
    %s23 = sphi 0, %s21
    %s24 = sphi 0, %s22
    %s25 = sphi 0, %s23
    %s35 = sphi 0, %s37
    %s38 = sphi 0, %s35
    %s39 = sphi 0, %s38
    %s55 = sphi 0, %s39
    %s59 = sphi 0, %s59
    %s61 = sphi 0, %s59
    %s62 = sphi 0, %s61
    %s76 = sphi 0, %s62
    %s80 = sphi 0, %s80
    %s82 = sphi 0, %s80
    %s83 = sphi 0, %s82
    %s97 = sphi 0, %s83
    %s101 = sphi 0, %s101
    %s103 = sphi 0, %s101
    %s104 = sphi 0, %s103
    %s118 = sphi 0, %s104
    %s126 = sphi 0, %s128
    %s129 = sphi 0, %s126
    %s130 = sphi 0, %s129
    %s146 = sphi 0, %s130
    %s152 = sphi 0, %s154
    %s155 = sphi 0, %s152
    %s156 = sphi 0, %s155
    %s172 = sphi 0, %s156
    %s178 = sphi 0, %s180
    %s181 = sphi 0, %s178
    %s182 = sphi 0, %s181
    %s198 = sphi 0, %s182
  $region4: #{down_forward.4} parent=0 // loop_header_branch
    %16 = sbr.rel (%p14) target = $region8
  $region5: #{down_forward.4} parent=0 // loop_body
    %s18 = ssub.s32 %s13, 1
    %s19 = ssub.s32 %s13, 2
    %s26 = sadd.s32 1, %s21
    %p27 = scmp.ge.s32.totalorder %s26, 1
    %s28 = scalar_select %p27, 0, %s26
    %s29 = sadd.s32 1, %s20
    %s30 = scalar_select %p27, %s29, %s20
    %p31 = scmp.ge.s32.totalorder %s30, 2
    %s32 = scalar_select %p31, 0, %s30
    %s33 = ssub.s32 %s20, %s32
    %p34 = scmp.eq.s32.totalorder %s33, 0
    %s36 = sadd.s32 %s35, 1
    %s37 = scalar_select %p34, %s35, %s36
    %p40 = pneg %p34
    %p41 = scmp.eq.s32.totalorder %s13, 1
    %p42 = por %p40, %p41
    %p43 = scmp.ne.s32.totalorder %s35, %s38
    %p44 = scmp.eq.s32.totalorder %s13, 0
    %p45 = por %p43, %p44
    %p46 = scmp.ne.s32.totalorder %s35, %s38
    %p47 = scmp.eq.s32.totalorder %s18, 1
    %p48 = por %p46, %p47
    %p49 = scmp.ne.s32.totalorder %s38, %s39
    %p50 = scmp.eq.s32.totalorder %s18, 0
    %p51 = por %p49, %p50
    %p52 = scmp.ne.s32.totalorder %s38, %s39
    %p53 = scmp.eq.s32.totalorder %s19, 1
    %p54 = por %p52, %p53
    %p56 = scmp.ne.s32.totalorder %s39, %s55
    %p57 = scmp.eq.s32.totalorder %s19, 0
    %p58 = por %p56, %p57
    %s60 = sadd.s32 %s59, 1
    %p63 = scmp.eq.s32.totalorder %s13, 1
    %p64 = scmp.ne.s32.totalorder %s59, %s61
    %p65 = scmp.eq.s32.totalorder %s13, 0
    %p66 = por %p64, %p65
    %p67 = scmp.ne.s32.totalorder %s59, %s61
    %p68 = scmp.eq.s32.totalorder %s18, 1
    %p69 = por %p67, %p68
    %p70 = scmp.ne.s32.totalorder %s61, %s62
    %p71 = scmp.eq.s32.totalorder %s18, 0
    %p72 = por %p70, %p71
    %p73 = scmp.ne.s32.totalorder %s61, %s62
    %p74 = scmp.eq.s32.totalorder %s19, 1
    %p75 = por %p73, %p74
    %p77 = scmp.ne.s32.totalorder %s62, %s76
    %p78 = scmp.eq.s32.totalorder %s19, 0
    %p79 = por %p77, %p78
    %s81 = sadd.s32 %s80, 1
    %p84 = scmp.eq.s32.totalorder %s13, 1
    %p85 = scmp.ne.s32.totalorder %s80, %s82
    %p86 = scmp.eq.s32.totalorder %s13, 0
    %p87 = por %p85, %p86
    %p88 = scmp.ne.s32.totalorder %s80, %s82
    %p89 = scmp.eq.s32.totalorder %s18, 1
    %p90 = por %p88, %p89
    %p91 = scmp.ne.s32.totalorder %s82, %s83
    %p92 = scmp.eq.s32.totalorder %s18, 0
    %p93 = por %p91, %p92
    %p94 = scmp.ne.s32.totalorder %s82, %s83
    %p95 = scmp.eq.s32.totalorder %s19, 1
    %p96 = por %p94, %p95
    %p98 = scmp.ne.s32.totalorder %s83, %s97
    %p99 = scmp.eq.s32.totalorder %s19, 0
    %p100 = por %p98, %p99
    %s102 = sadd.s32 %s101, 1
    %p105 = scmp.eq.s32.totalorder %s13, 1
    %p106 = scmp.ne.s32.totalorder %s101, %s103
    %p107 = scmp.eq.s32.totalorder %s13, 0
    %p108 = por %p106, %p107
    %p109 = scmp.ne.s32.totalorder %s101, %s103
    %p110 = scmp.eq.s32.totalorder %s18, 1
    %p111 = por %p109, %p110
    %p112 = scmp.ne.s32.totalorder %s103, %s104
    %p113 = scmp.eq.s32.totalorder %s18, 0
    %p114 = por %p112, %p113
    %p115 = scmp.ne.s32.totalorder %s103, %s104
    %p116 = scmp.eq.s32.totalorder %s19, 1
    %p117 = por %p115, %p116
    %p119 = scmp.ne.s32.totalorder %s104, %s118
    %p120 = scmp.eq.s32.totalorder %s19, 0
    %p121 = por %p119, %p120
    %s122 = ssub.s32 %s20, %s32
    %s123 = ssub.s32 %s21, %s28
    %s124 = sor.u32 %s122, %s123
    %p125 = scmp.eq.s32.totalorder %s124, 0
    %s127 = sadd.s32 %s126, 1
    %s128 = scalar_select %p125, %s126, %s127
    %p131 = pneg %p125
    %p132 = scmp.eq.s32.totalorder %s13, 1
    %p133 = por %p131, %p132
    %p134 = scmp.ne.s32.totalorder %s126, %s129
    %p135 = scmp.eq.s32.totalorder %s13, 0
    %p136 = por %p134, %p135
    %p137 = scmp.ne.s32.totalorder %s126, %s129
    %p138 = scmp.eq.s32.totalorder %s18, 1
    %p139 = por %p137, %p138
    %p140 = scmp.ne.s32.totalorder %s129, %s130
    %p141 = scmp.eq.s32.totalorder %s18, 0
    %p142 = por %p140, %p141
    %p143 = scmp.ne.s32.totalorder %s129, %s130
    %p144 = scmp.eq.s32.totalorder %s19, 1
    %p145 = por %p143, %p144
    %p147 = scmp.ne.s32.totalorder %s130, %s146
    %p148 = scmp.eq.s32.totalorder %s19, 0
    %p149 = por %p147, %p148
    %s150 = ssub.s32 %s20, %s32
    %p151 = scmp.eq.s32.totalorder %s150, 0
    %s153 = sadd.s32 %s152, 1
    %s154 = scalar_select %p151, %s152, %s153
    %p157 = pneg %p151
    %p158 = scmp.eq.s32.totalorder %s13, 1
    %p159 = por %p157, %p158
    %p160 = scmp.ne.s32.totalorder %s152, %s155
    %p161 = scmp.eq.s32.totalorder %s13, 0
    %p162 = por %p160, %p161
    %p163 = scmp.ne.s32.totalorder %s152, %s155
    %p164 = scmp.eq.s32.totalorder %s18, 1
    %p165 = por %p163, %p164
    %p166 = scmp.ne.s32.totalorder %s155, %s156
    %p167 = scmp.eq.s32.totalorder %s18, 0
    %p168 = por %p166, %p167
    %p169 = scmp.ne.s32.totalorder %s155, %s156
    %p170 = scmp.eq.s32.totalorder %s19, 1
    %p171 = por %p169, %p170
    %p173 = scmp.ne.s32.totalorder %s156, %s172
    %p174 = scmp.eq.s32.totalorder %s19, 0
    %p175 = por %p173, %p174
    %s176 = ssub.s32 %s20, %s32
    %p177 = scmp.eq.s32.totalorder %s176, 0
    %s179 = sadd.s32 %s178, 1
    %s180 = scalar_select %p177, %s178, %s179
    %p183 = pneg %p177
    %p184 = scmp.eq.s32.totalorder %s13, 1
    %p185 = por %p183, %p184
    %p186 = scmp.ne.s32.totalorder %s178, %s181
    %p187 = scmp.eq.s32.totalorder %s13, 0
    %p188 = por %p186, %p187
    %p189 = scmp.ne.s32.totalorder %s178, %s181
    %p190 = scmp.eq.s32.totalorder %s18, 1
    %p191 = por %p189, %p190
    %p192 = scmp.ne.s32.totalorder %s181, %s182
    %p193 = scmp.eq.s32.totalorder %s18, 0
    %p194 = por %p192, %p193
    %p195 = scmp.ne.s32.totalorder %s181, %s182
    %p196 = scmp.eq.s32.totalorder %s19, 1
    %p197 = por %p195, %p196
    %p199 = scmp.ne.s32.totalorder %s182, %s198
    %p200 = scmp.eq.s32.totalorder %s19, 0
    %p201 = por %p199, %p200
    %p202 = scmp.le.s32.totalorder 1, %s13
    %p203 = scmp.lt.s32.totalorder %s13, 3
    %p204 = pnand %p202, %p203
    %p205 = pneg %p204
    // Predicated region
    $region9: #{down_forward.4} parent=5 // pred_check
      _
    $region10: #{down_forward.4} parent=5 // pred_check_branch
      %207 = sbr.rel (%p204) target = $region12
    $region11: #{down_forward.4} parent=5 // pred_region
      %s208 = ssub.s32 %s13, 1
      // Predicated region
      $region13: #{down_forward.4} parent=11 // pred_check
        %p209 = pneg %p72
      $region14: #{down_forward.4} parent=11 // pred_check_branch
        %211 = sbr.rel (%p209) target = $region16
      $region15: #{down_forward.4} parent=11 // pred_region
        _
      $region16: #{down_forward.4} parent=11 // pred_fallthru
        _
      // Predicated region
      $region17: #{down_forward.4} parent=11 // pred_check
        %p212 = pneg %p93
      $region18: #{down_forward.4} parent=11 // pred_check_branch
        %214 = sbr.rel (%p212) target = $region20
      $region19: #{down_forward.4} parent=11 // pred_region
        _
      $region20: #{down_forward.4} parent=11 // pred_fallthru
        _
      // Predicated region
      $region21: #{down_forward.4} parent=11 // pred_check
        %p215 = pneg %p114
      $region22: #{down_forward.4} parent=11 // pred_check_branch
        %217 = sbr.rel (%p215) target = $region24
      $region23: #{down_forward.4} parent=11 // pred_region
        _
      $region24: #{down_forward.4} parent=11 // pred_fallthru
        _
    $region12: #{down_forward.4} parent=5 // pred_fallthru
      _
    %p218 = scmp.lt.s32.totalorder %s13, 2
    // Predicated region
    $region25: #{down_forward.4} parent=5 // pred_check
      %p219 = pneg %p218
    $region26: #{down_forward.4} parent=5 // pred_check_branch
      %221 = sbr.rel (%p219) target = $region28
    $region27: #{down_forward.4} parent=5 // pred_region
      // Predicated region
      $region29: #{down_forward.4} parent=27 // pred_check
        %p222 = pneg %p45
      $region30: #{down_forward.4} parent=27 // pred_check_branch
        %224 = sbr.rel (%p222) target = $region32
      $region31: #{down_forward.4} parent=27 // pred_region
        %p225 = scmp.lt.s32.totalorder %s20, 1
        %s226 = scalar_select %p225, %s20, 1
        %s227 = smul.addr %s226, 8
        %s228 = smul.addr %s227, 8
        %s229 = scalar_lea.vmem %s0, %s228
      $region32: #{down_forward.4} parent=27 // pred_fallthru
        _
    $region28: #{down_forward.4} parent=5 // pred_fallthru
      _
    %p230 = scmp.le.s32.totalorder 1, %s13
    %p231 = scmp.lt.s32.totalorder %s13, 3
    %p232 = pnand %p230, %p231
    %p233 = pneg %p232
    // Predicated region
    $region33: #{down_forward.4} parent=5 // pred_check
      _
    $region34: #{down_forward.4} parent=5 // pred_check_branch
      %235 = sbr.rel (%p232) target = $region36
    $region35: #{down_forward.4} parent=5 // pred_region
      %s236 = ssub.s32 %s13, 1
      %p237 = scmp.lt.s32.totalorder %s22, 1
      %s238 = scalar_select %p237, %s22, 1
      %s239 = smul.addr %s238, 8
      %s240 = smul.addr %s239, 8
      %s241 = scalar_lea.vmem %s0, %s240
      %p242 = pneg %p51
      %p243 = pneg %p48
      %p244 = pneg %p72
      %p245 = pneg %p69
      %p246 = pneg %p93
      %p247 = pneg %p90
      %p248 = pneg %p114
      %p249 = pneg %p111
      %p250 = pneg %p142
      %p251 = pneg %p139
      %s252 = smul.u32 8, %s23
      %p253 = scmp.lt.s32.totalorder %s22, 1
      %s254 = scalar_select %p253, %s22, 1
      %p255 = scmp.lt.s32.totalorder %s252, 7
      %s256 = scalar_select %p255, %s252, 7
      %s257 = smul.addr %s254, 8
      %s258 = sadd.s32 %s256, %s257
      %s259 = smul.addr %s258, 8
      %s260 = scalar_lea.vmem %s4, %s259
      %p261 = pneg %p168
      %p262 = pneg %p165
      %p263 = scmp.lt.s32.totalorder %s22, 1
      %s264 = scalar_select %p263, %s22, 1
      %s265 = scalar_lea.vmem %s5, %s264
      %p266 = pneg %p194
      %p267 = pneg %p191
      %p268 = scmp.lt.s32.totalorder %s22, 1
      %s269 = scalar_select %p268, %s22, 1
      %s270 = scalar_lea.vmem %s6, %s269
      %p271 = scmp.lt.s32.totalorder %s22, 1
      %s272 = scalar_select %p271, %s22, 1
      %s273 = smul.addr %s272, 8
      %s274 = smul.addr %s273, 8
      %s275 = scalar_lea.vmem %s0, %s274
      %s276 = smul.u32 8, %s23
      %p277 = scmp.lt.s32.totalorder %s22, 1
      %s278 = scalar_select %p277, %s22, 1
      %p279 = scmp.lt.s32.totalorder %s276, 7
      %s280 = scalar_select %p279, %s276, 7
      %s281 = smul.addr %s278, 8
      %s282 = sadd.s32 %s280, %s281
      %s283 = smul.addr %s282, 8
      %s284 = scalar_lea.vmem %s4, %s283
      %s285 = smul.u32 8, %s23
      %p286 = scmp.lt.s32.totalorder %s22, 1
      %s287 = scalar_select %p286, %s22, 1
      %s288 = scalar_lea.vmem %s5, %s287
      %p289 = scmp.lt.s32.totalorder %s22, 1
      %s290 = scalar_select %p289, %s22, 1
      %s291 = scalar_lea.vmem %s6, %s290
      %p292 = scmp.eq.s32.totalorder %s23, 0
      // Predicated region
      $region37: #{down_forward.4} parent=35 // pred_check
        %p293 = pneg %p292
      $region38: #{down_forward.4} parent=35 // pred_check_branch
        %295 = sbr.rel (%p293) target = $region40
      $region39: #{down_forward.4} parent=35 // pred_region
        %296 = vst [vmem:[#allocation2] sm:$0xff] 0.0
        %297 = vst [vmem:[#allocation2 + $0x8] sm:$0x3] 0.0
        %298 = vst [vmem:[#allocation2 + $0x10] sm:$0xff] 0.0
        %299 = vst [vmem:[#allocation2 + $0x18] sm:$0x3] 0.0
        %300 = vst [vmem:[#allocation2 + $0x20] sm:$0xff] 0.0
        %301 = vst [vmem:[#allocation2 + $0x28] sm:$0x3] 0.0
        %302 = vst [vmem:[#allocation2 + $0x30] sm:$0xff] 0.0
        %303 = vst [vmem:[#allocation2 + $0x38] sm:$0x3] 0.0
        %304 = vst [vmem:[#allocation2 + $0x40] sm:$0xff] 0.0
        %305 = vst [vmem:[#allocation2 + $0x48] sm:$0x3] 0.0
        %306 = vst [vmem:[#allocation2 + $0x50] sm:$0xff] 0.0
        %307 = vst [vmem:[#allocation2 + $0x58] sm:$0x3] 0.0
        %308 = vst [vmem:[#allocation2 + $0x60] sm:$0xff] 0.0
        %309 = vst [vmem:[#allocation2 + $0x68] sm:$0x3] 0.0
        %310 = vst [vmem:[#allocation2 + $0x70] sm:$0xff] 0.0
        %311 = vst [vmem:[#allocation2 + $0x78] sm:$0x3] 0.0
        %312 = vst [vmem:[#allocation2 + $0x80] sm:$0xff] 0.0
        %313 = vst [vmem:[#allocation2 + $0x88] sm:$0x3] 0.0
        %314 = vst [vmem:[#allocation2 + $0x90] sm:$0xff] 0.0
        %315 = vst [vmem:[#allocation2 + $0x98] sm:$0x3] 0.0
        %v316 = vld [vmem:[%s275] sm:$0xff]
        %v317 = vld [vmem:[%s275 + $0x8] sm:$0xff]
        %v318 = vld [vmem:[%s275 + $0x10] sm:$0xff]
        %v319 = vld [vmem:[%s275 + $0x18] sm:$0xff]
        %v320 = vld [vmem:[%s275 + $0x20] sm:$0xff]
        %v321 = vld [vmem:[%s275 + $0x28] sm:$0xff]
        %v322 = vld [vmem:[%s275 + $0x30] sm:$0xff]
        %v323 = vld [vmem:[%s275 + $0x38] sm:$0xff]
        %v324 = vld [vmem:[%s1] sm:$0x1]
        %v326 = vperm.slane %v324, 0
        %v328 = vmul.f32 %v316, %v326
        %v329 = vmul.f32 %v317, %v326
        %v330 = vmul.f32 %v318, %v326
        %v331 = vmul.f32 %v319, %v326
        %v332 = vmul.f32 %v320, %v326
        %v333 = vmul.f32 %v321, %v326
        %v334 = vmul.f32 %v322, %v326
        %v335 = vmul.f32 %v323, %v326
        %v336 = vld [vmem:[%s2] sm:$0x1]
        %v338 = vperm.slane %v336, 0
        %v340 = vadd.f32 %v328, %v338
        %v341 = vadd.f32 %v329, %v338
        %v342 = vadd.f32 %v330, %v338
        %v343 = vadd.f32 %v331, %v338
        %v344 = vadd.f32 %v332, %v338
        %v345 = vadd.f32 %v333, %v338
        %v346 = vadd.f32 %v334, %v338
        %v347 = vadd.f32 %v335, %v338
        %v348 = vmax.f32 %v340, 0.0
        %v349 = vmax.f32 %v341, 0.0
        %v350 = vmax.f32 %v342, 0.0
        %v351 = vmax.f32 %v343, 0.0
        %v352 = vmax.f32 %v344, 0.0
        %v353 = vmax.f32 %v345, 0.0
        %v354 = vmax.f32 %v346, 0.0
        %v355 = vmax.f32 %v347, 0.0
        %s356 = scalar_lea.vmem [#allocation2], 16
        %357 = vst [vmem:[%s356 + $0x1] sm:$0xff] %v348
        %358 = vst [vmem:[%s356 + $0x11] sm:$0xff] %v349
        %359 = vst [vmem:[%s356 + $0x21] sm:$0xff] %v350
        %360 = vst [vmem:[%s356 + $0x31] sm:$0xff] %v351
        %361 = vst [vmem:[%s356 + $0x41] sm:$0xff] %v352
        %362 = vst [vmem:[%s356 + $0x51] sm:$0xff] %v353
        %363 = vst [vmem:[%s356 + $0x61] sm:$0xff] %v354
        %364 = vst [vmem:[%s356 + $0x71] sm:$0xff] %v355
        %365 = vst [vmem:[%s288] sm:$0x1] 0.0
        %366 = vst [vmem:[%s291] sm:$0x1] 0.0
      $region40: #{down_forward.4} parent=35 // pred_fallthru
        _
      %s367 = smul.u32 %s23, 8
      %s368 = smul.u32 %s367, 16
      %s369 = scalar_lea.vmem [#allocation2], %s368
      %v370 = vld [vmem:[%s369] sm:$0xff]
      %v371 = vld [vmem:[%s369 + $0x10] sm:$0xff]
      %v372 = vld [vmem:[%s369 + $0x20] sm:$0xff]
      %v373 = vld [vmem:[%s369 + $0x30] sm:$0xff]
      %v374 = vld [vmem:[%s369 + $0x40] sm:$0xff]
      %v375 = vld [vmem:[%s369 + $0x50] sm:$0xff]
      %v376 = vld [vmem:[%s369 + $0x60] sm:$0xff]
      %v377 = vld [vmem:[%s369 + $0x70] sm:$0xff]
      %v378 = vld [vmem:[%s3] sm:$0xff]
      %v379 = vld [vmem:[%s3 + $0x8] sm:$0xff]
      %v380 = vld [vmem:[%s3 + $0x10] sm:$0xff]
      %v381 = vld [vmem:[%s3 + $0x18] sm:$0xff]
      %v382 = vld [vmem:[%s3 + $0x20] sm:$0xff]
      %v383 = vld [vmem:[%s3 + $0x28] sm:$0xff]
      %v384 = vld [vmem:[%s3 + $0x30] sm:$0xff]
      %v385 = vld [vmem:[%s3 + $0x38] sm:$0xff]
      %v386 = vld [vmem:[%s3 + $0x40] sm:$0xff]
      %v387 = vld [vmem:[%s3 + $0x48] sm:$0xff]
      %v388 = vld [vmem:[%s3 + $0x50] sm:$0xff]
      %v389 = vld [vmem:[%s3 + $0x58] sm:$0xff]
      %v390 = vld [vmem:[%s3 + $0x60] sm:$0xff]
      %v391 = vld [vmem:[%s3 + $0x68] sm:$0xff]
      %v392 = vld [vmem:[%s3 + $0x70] sm:$0xff]
      %v393 = vld [vmem:[%s3 + $0x78] sm:$0xff]
      %v394 = vld [vmem:[%s369 + $0x1] sm:$0xff]
      %v395 = vld [vmem:[%s369 + $0x11] sm:$0xff]
      %v396 = vld [vmem:[%s369 + $0x21] sm:$0xff]
      %v397 = vld [vmem:[%s369 + $0x31] sm:$0xff]
      %v398 = vld [vmem:[%s369 + $0x41] sm:$0xff]
      %v399 = vld [vmem:[%s369 + $0x51] sm:$0xff]
      %v400 = vld [vmem:[%s369 + $0x61] sm:$0xff]
      %v401 = vld [vmem:[%s369 + $0x71] sm:$0xff]
      %s402 = scalar_lea.vmem %s3, 128
      %v403 = vld [vmem:[%s402] sm:$0xff]
      %v404 = vld [vmem:[%s402 + $0x8] sm:$0xff]
      %v405 = vld [vmem:[%s402 + $0x10] sm:$0xff]
      %v406 = vld [vmem:[%s402 + $0x18] sm:$0xff]
      %v407 = vld [vmem:[%s402 + $0x20] sm:$0xff]
      %v408 = vld [vmem:[%s402 + $0x28] sm:$0xff]
      %v409 = vld [vmem:[%s402 + $0x30] sm:$0xff]
      %v410 = vld [vmem:[%s402 + $0x38] sm:$0xff]
      %v411 = vld [vmem:[%s402 + $0x40] sm:$0xff]
      %v412 = vld [vmem:[%s402 + $0x48] sm:$0xff]
      %v413 = vld [vmem:[%s402 + $0x50] sm:$0xff]
      %v414 = vld [vmem:[%s402 + $0x58] sm:$0xff]
      %v415 = vld [vmem:[%s402 + $0x60] sm:$0xff]
      %v416 = vld [vmem:[%s402 + $0x68] sm:$0xff]
      %v417 = vld [vmem:[%s402 + $0x70] sm:$0xff]
      %v418 = vld [vmem:[%s402 + $0x78] sm:$0xff]
      %419 = vmatpush.msra.mxu0 %v418
      %420 = vmatpush.msra.mxu0 %v417
      %421 = vmatpush.msra.mxu0 %v416
      %422 = vmatpush.msra.mxu0 %v415
      %423 = vmatpush.msra.mxu0 %v414
      %424 = vmatpush.msra.mxu0 %v413
      %425 = vmatpush.msra.mxu0 %v412
      %426 = vmatpush.msra.mxu0 %v411
      %427 = vmatpush.msra.mxu0 %v410
      %428 = vmatpush.msra.mxu0 %v409
      %429 = vmatpush.msra.mxu0 %v408
      %430 = vmatpush.msra.mxu0 %v407
      %431 = vmatpush.msra.mxu0 %v406
      %432 = vmatpush.msra.mxu0 %v405
      %433 = vmatpush.msra.mxu0 %v404
      %434 = vmatpush.msra.mxu0 %v403
      %435 = vmatmul.f32.gmra.mxu0 %v394
      %v436 = vpop.f32.mrf.mxu0
      %v437 = vadd.f32 0.0, %v436
      %438 = vmatmul.f32.gmra.mxu0 %v395
      %v439 = vpop.f32.mrf.mxu0
      %v440 = vadd.f32 0.0, %v439
      %441 = vmatmul.f32.gmra.mxu0 %v396
      %v442 = vpop.f32.mrf.mxu0
      %v443 = vadd.f32 0.0, %v442
      %444 = vmatmul.f32.gmra.mxu0 %v397
      %v445 = vpop.f32.mrf.mxu0
      %v446 = vadd.f32 0.0, %v445
      %447 = vmatmul.f32.gmra.mxu0 %v398
      %v448 = vpop.f32.mrf.mxu0
      %v449 = vadd.f32 0.0, %v448
      %450 = vmatmul.f32.gmra.mxu0 %v399
      %v451 = vpop.f32.mrf.mxu0
      %v452 = vadd.f32 0.0, %v451
      %453 = vmatmul.f32.gmra.mxu0 %v400
      %v454 = vpop.f32.mrf.mxu0
      %v455 = vadd.f32 0.0, %v454
      %456 = vmatmul.f32.gmra.mxu0 %v401
      %v457 = vpop.f32.mrf.mxu0
      %v458 = vadd.f32 0.0, %v457
      %459 = vdwg.mxu0
      %460 = vmatpush.msra.mxu0 %v393
      %461 = vmatpush.msra.mxu0 %v392
      %462 = vmatpush.msra.mxu0 %v391
      %463 = vmatpush.msra.mxu0 %v390
      %464 = vmatpush.msra.mxu0 %v389
      %465 = vmatpush.msra.mxu0 %v388
      %466 = vmatpush.msra.mxu0 %v387
      %467 = vmatpush.msra.mxu0 %v386
      %468 = vmatpush.msra.mxu0 %v385
      %469 = vmatpush.msra.mxu0 %v384
      %470 = vmatpush.msra.mxu0 %v383
      %471 = vmatpush.msra.mxu0 %v382
      %472 = vmatpush.msra.mxu0 %v381
      %473 = vmatpush.msra.mxu0 %v380
      %474 = vmatpush.msra.mxu0 %v379
      %475 = vmatpush.msra.mxu0 %v378
      %476 = vmatmul.f32.gmra.mxu0 %v370
      %v477 = vpop.f32.mrf.mxu0
      %v478 = vadd.f32 %v437, %v477
      %479 = vmatmul.f32.gmra.mxu0 %v371
      %v480 = vpop.f32.mrf.mxu0
      %v481 = vadd.f32 %v440, %v480
      %482 = vmatmul.f32.gmra.mxu0 %v372
      %v483 = vpop.f32.mrf.mxu0
      %v484 = vadd.f32 %v443, %v483
      %485 = vmatmul.f32.gmra.mxu0 %v373
      %v486 = vpop.f32.mrf.mxu0
      %v487 = vadd.f32 %v446, %v486
      %488 = vmatmul.f32.gmra.mxu0 %v374
      %v489 = vpop.f32.mrf.mxu0
      %v490 = vadd.f32 %v449, %v489
      %491 = vmatmul.f32.gmra.mxu0 %v375
      %v492 = vpop.f32.mrf.mxu0
      %v493 = vadd.f32 %v452, %v492
      %494 = vmatmul.f32.gmra.mxu0 %v376
      %v495 = vpop.f32.mrf.mxu0
      %v496 = vadd.f32 %v455, %v495
      %497 = vmatmul.f32.gmra.mxu0 %v377
      %v498 = vpop.f32.mrf.mxu0
      %v499 = vadd.f32 %v458, %v498
      %500 = vdwg.mxu0
      %v501 = vld [vmem:[%s369 + $0x2] sm:$0xff]
      %v502 = vld [vmem:[%s369 + $0x12] sm:$0xff]
      %v503 = vld [vmem:[%s369 + $0x22] sm:$0xff]
      %v504 = vld [vmem:[%s369 + $0x32] sm:$0xff]
      %v505 = vld [vmem:[%s369 + $0x42] sm:$0xff]
      %v506 = vld [vmem:[%s369 + $0x52] sm:$0xff]
      %v507 = vld [vmem:[%s369 + $0x62] sm:$0xff]
      %v508 = vld [vmem:[%s369 + $0x72] sm:$0xff]
      %s509 = scalar_lea.vmem %s3, 256
      %v510 = vld [vmem:[%s509] sm:$0xff]
      %v511 = vld [vmem:[%s509 + $0x8] sm:$0xff]
      %v512 = vld [vmem:[%s509 + $0x10] sm:$0xff]
      %v513 = vld [vmem:[%s509 + $0x18] sm:$0xff]
      %v514 = vld [vmem:[%s509 + $0x20] sm:$0xff]
      %v515 = vld [vmem:[%s509 + $0x28] sm:$0xff]
      %v516 = vld [vmem:[%s509 + $0x30] sm:$0xff]
      %v517 = vld [vmem:[%s509 + $0x38] sm:$0xff]
      %v518 = vld [vmem:[%s509 + $0x40] sm:$0xff]
      %v519 = vld [vmem:[%s509 + $0x48] sm:$0xff]
      %v520 = vld [vmem:[%s509 + $0x50] sm:$0xff]
      %v521 = vld [vmem:[%s509 + $0x58] sm:$0xff]
      %v522 = vld [vmem:[%s509 + $0x60] sm:$0xff]
      %v523 = vld [vmem:[%s509 + $0x68] sm:$0xff]
      %v524 = vld [vmem:[%s509 + $0x70] sm:$0xff]
      %v525 = vld [vmem:[%s509 + $0x78] sm:$0xff]
      %526 = vmatpush.msra.mxu0 %v525
      %527 = vmatpush.msra.mxu0 %v524
      %528 = vmatpush.msra.mxu0 %v523
      %529 = vmatpush.msra.mxu0 %v522
      %530 = vmatpush.msra.mxu0 %v521
      %531 = vmatpush.msra.mxu0 %v520
      %532 = vmatpush.msra.mxu0 %v519
      %533 = vmatpush.msra.mxu0 %v518
      %534 = vmatpush.msra.mxu0 %v517
      %535 = vmatpush.msra.mxu0 %v516
      %536 = vmatpush.msra.mxu0 %v515
      %537 = vmatpush.msra.mxu0 %v514
      %538 = vmatpush.msra.mxu0 %v513
      %539 = vmatpush.msra.mxu0 %v512
      %540 = vmatpush.msra.mxu0 %v511
      %541 = vmatpush.msra.mxu0 %v510
      %542 = vmatmul.f32.gmra.mxu0 %v501
      %v543 = vpop.f32.mrf.mxu0
      %v544 = vadd.f32 0.0, %v543
      %545 = vmatmul.f32.gmra.mxu0 %v502
      %v546 = vpop.f32.mrf.mxu0
      %v547 = vadd.f32 0.0, %v546
      %548 = vmatmul.f32.gmra.mxu0 %v503
      %v549 = vpop.f32.mrf.mxu0
      %v550 = vadd.f32 0.0, %v549
      %551 = vmatmul.f32.gmra.mxu0 %v504
      %v552 = vpop.f32.mrf.mxu0
      %v553 = vadd.f32 0.0, %v552
      %554 = vmatmul.f32.gmra.mxu0 %v505
      %v555 = vpop.f32.mrf.mxu0
      %v556 = vadd.f32 0.0, %v555
      %557 = vmatmul.f32.gmra.mxu0 %v506
      %v558 = vpop.f32.mrf.mxu0
      %v559 = vadd.f32 0.0, %v558
      %560 = vmatmul.f32.gmra.mxu0 %v507
      %v561 = vpop.f32.mrf.mxu0
      %v562 = vadd.f32 0.0, %v561
      %563 = vmatmul.f32.gmra.mxu0 %v508
      %v564 = vpop.f32.mrf.mxu0
      %v565 = vadd.f32 0.0, %v564
      %566 = vdwg.mxu0
      %v567 = vadd.f32 %v478, %v544
      %v568 = vadd.f32 %v481, %v547
      %v569 = vadd.f32 %v484, %v550
      %v570 = vadd.f32 %v487, %v553
      %v571 = vadd.f32 %v490, %v556
      %v572 = vadd.f32 %v493, %v559
      %v573 = vadd.f32 %v496, %v562
      %v574 = vadd.f32 %v499, %v565
      %s575 = sadd.s32 %s367, 1
      %s576 = smul.u32 %s575, 16
      %s577 = scalar_lea.vmem [#allocation2], %s576
      %v578 = vld [vmem:[%s577] sm:$0xff]
      %v579 = vld [vmem:[%s577 + $0x10] sm:$0xff]
      %v580 = vld [vmem:[%s577 + $0x20] sm:$0xff]
      %v581 = vld [vmem:[%s577 + $0x30] sm:$0xff]
      %v582 = vld [vmem:[%s577 + $0x40] sm:$0xff]
      %v583 = vld [vmem:[%s577 + $0x50] sm:$0xff]
      %v584 = vld [vmem:[%s577 + $0x60] sm:$0xff]
      %v585 = vld [vmem:[%s577 + $0x70] sm:$0xff]
      %s586 = scalar_lea.vmem %s3, 384
      %v587 = vld [vmem:[%s586] sm:$0xff]
      %v588 = vld [vmem:[%s586 + $0x8] sm:$0xff]
      %v589 = vld [vmem:[%s586 + $0x10] sm:$0xff]
      %v590 = vld [vmem:[%s586 + $0x18] sm:$0xff]
      %v591 = vld [vmem:[%s586 + $0x20] sm:$0xff]
      %v592 = vld [vmem:[%s586 + $0x28] sm:$0xff]
      %v593 = vld [vmem:[%s586 + $0x30] sm:$0xff]
      %v594 = vld [vmem:[%s586 + $0x38] sm:$0xff]
      %v595 = vld [vmem:[%s586 + $0x40] sm:$0xff]
      %v596 = vld [vmem:[%s586 + $0x48] sm:$0xff]
      %v597 = vld [vmem:[%s586 + $0x50] sm:$0xff]
      %v598 = vld [vmem:[%s586 + $0x58] sm:$0xff]
      %v599 = vld [vmem:[%s586 + $0x60] sm:$0xff]
      %v600 = vld [vmem:[%s586 + $0x68] sm:$0xff]
      %v601 = vld [vmem:[%s586 + $0x70] sm:$0xff]
      %v602 = vld [vmem:[%s586 + $0x78] sm:$0xff]
      %603 = vmatpush.msra.mxu0 %v602
      %604 = vmatpush.msra.mxu0 %v601
      %605 = vmatpush.msra.mxu0 %v600
      %606 = vmatpush.msra.mxu0 %v599
      %607 = vmatpush.msra.mxu0 %v598
      %608 = vmatpush.msra.mxu0 %v597
      %609 = vmatpush.msra.mxu0 %v596
      %610 = vmatpush.msra.mxu0 %v595
      %611 = vmatpush.msra.mxu0 %v594
      %612 = vmatpush.msra.mxu0 %v593
      %613 = vmatpush.msra.mxu0 %v592
      %614 = vmatpush.msra.mxu0 %v591
      %615 = vmatpush.msra.mxu0 %v590
      %616 = vmatpush.msra.mxu0 %v589
      %617 = vmatpush.msra.mxu0 %v588
      %618 = vmatpush.msra.mxu0 %v587
      %619 = vmatmul.f32.gmra.mxu0 %v578
      %v620 = vpop.f32.mrf.mxu0
      %v621 = vadd.f32 0.0, %v620
      %622 = vmatmul.f32.gmra.mxu0 %v579
      %v623 = vpop.f32.mrf.mxu0
      %v624 = vadd.f32 0.0, %v623
      %625 = vmatmul.f32.gmra.mxu0 %v580
      %v626 = vpop.f32.mrf.mxu0
      %v627 = vadd.f32 0.0, %v626
      %628 = vmatmul.f32.gmra.mxu0 %v581
      %v629 = vpop.f32.mrf.mxu0
      %v630 = vadd.f32 0.0, %v629
      %631 = vmatmul.f32.gmra.mxu0 %v582
      %v632 = vpop.f32.mrf.mxu0
      %v633 = vadd.f32 0.0, %v632
      %634 = vmatmul.f32.gmra.mxu0 %v583
      %v635 = vpop.f32.mrf.mxu0
      %v636 = vadd.f32 0.0, %v635
      %637 = vmatmul.f32.gmra.mxu0 %v584
      %v638 = vpop.f32.mrf.mxu0
      %v639 = vadd.f32 0.0, %v638
      %640 = vmatmul.f32.gmra.mxu0 %v585
      %v641 = vpop.f32.mrf.mxu0
      %v642 = vadd.f32 0.0, %v641
      %643 = vdwg.mxu0
      %v644 = vadd.f32 %v567, %v621
      %v645 = vadd.f32 %v568, %v624
      %v646 = vadd.f32 %v569, %v627
      %v647 = vadd.f32 %v570, %v630
      %v648 = vadd.f32 %v571, %v633
      %v649 = vadd.f32 %v572, %v636
      %v650 = vadd.f32 %v573, %v639
      %v651 = vadd.f32 %v574, %v642
      %v652 = vld [vmem:[%s577 + $0x1] sm:$0xff]
      %v653 = vld [vmem:[%s577 + $0x11] sm:$0xff]
      %v654 = vld [vmem:[%s577 + $0x21] sm:$0xff]
      %v655 = vld [vmem:[%s577 + $0x31] sm:$0xff]
      %v656 = vld [vmem:[%s577 + $0x41] sm:$0xff]
      %v657 = vld [vmem:[%s577 + $0x51] sm:$0xff]
      %v658 = vld [vmem:[%s577 + $0x61] sm:$0xff]
      %v659 = vld [vmem:[%s577 + $0x71] sm:$0xff]
      %s660 = scalar_lea.vmem %s3, 512
      %v661 = vld [vmem:[%s660] sm:$0xff]
      %v662 = vld [vmem:[%s660 + $0x8] sm:$0xff]
      %v663 = vld [vmem:[%s660 + $0x10] sm:$0xff]
      %v664 = vld [vmem:[%s660 + $0x18] sm:$0xff]
      %v665 = vld [vmem:[%s660 + $0x20] sm:$0xff]
      %v666 = vld [vmem:[%s660 + $0x28] sm:$0xff]
      %v667 = vld [vmem:[%s660 + $0x30] sm:$0xff]
      %v668 = vld [vmem:[%s660 + $0x38] sm:$0xff]
      %v669 = vld [vmem:[%s660 + $0x40] sm:$0xff]
      %v670 = vld [vmem:[%s660 + $0x48] sm:$0xff]
      %v671 = vld [vmem:[%s660 + $0x50] sm:$0xff]
      %v672 = vld [vmem:[%s660 + $0x58] sm:$0xff]
      %v673 = vld [vmem:[%s660 + $0x60] sm:$0xff]
      %v674 = vld [vmem:[%s660 + $0x68] sm:$0xff]
      %v675 = vld [vmem:[%s660 + $0x70] sm:$0xff]
      %v676 = vld [vmem:[%s660 + $0x78] sm:$0xff]
      %677 = vmatpush.msra.mxu0 %v676
      %678 = vmatpush.msra.mxu0 %v675
      %679 = vmatpush.msra.mxu0 %v674
      %680 = vmatpush.msra.mxu0 %v673
      %681 = vmatpush.msra.mxu0 %v672
      %682 = vmatpush.msra.mxu0 %v671
      %683 = vmatpush.msra.mxu0 %v670
      %684 = vmatpush.msra.mxu0 %v669
      %685 = vmatpush.msra.mxu0 %v668
      %686 = vmatpush.msra.mxu0 %v667
      %687 = vmatpush.msra.mxu0 %v666
      %688 = vmatpush.msra.mxu0 %v665
      %689 = vmatpush.msra.mxu0 %v664
      %690 = vmatpush.msra.mxu0 %v663
      %691 = vmatpush.msra.mxu0 %v662
      %692 = vmatpush.msra.mxu0 %v661
      %693 = vmatmul.f32.gmra.mxu0 %v652
      %v694 = vpop.f32.mrf.mxu0
      %v695 = vadd.f32 0.0, %v694
      %696 = vmatmul.f32.gmra.mxu0 %v653
      %v697 = vpop.f32.mrf.mxu0
      %v698 = vadd.f32 0.0, %v697
      %699 = vmatmul.f32.gmra.mxu0 %v654
      %v700 = vpop.f32.mrf.mxu0
      %v701 = vadd.f32 0.0, %v700
      %702 = vmatmul.f32.gmra.mxu0 %v655
      %v703 = vpop.f32.mrf.mxu0
      %v704 = vadd.f32 0.0, %v703
      %705 = vmatmul.f32.gmra.mxu0 %v656
      %v706 = vpop.f32.mrf.mxu0
      %v707 = vadd.f32 0.0, %v706
      %708 = vmatmul.f32.gmra.mxu0 %v657
      %v709 = vpop.f32.mrf.mxu0
      %v710 = vadd.f32 0.0, %v709
      %711 = vmatmul.f32.gmra.mxu0 %v658
      %v712 = vpop.f32.mrf.mxu0
      %v713 = vadd.f32 0.0, %v712
      %714 = vmatmul.f32.gmra.mxu0 %v659
      %v715 = vpop.f32.mrf.mxu0
      %v716 = vadd.f32 0.0, %v715
      %717 = vdwg.mxu0
      %v718 = vadd.f32 %v644, %v695
      %v719 = vadd.f32 %v645, %v698
      %v720 = vadd.f32 %v646, %v701
      %v721 = vadd.f32 %v647, %v704
      %v722 = vadd.f32 %v648, %v707
      %v723 = vadd.f32 %v649, %v710
      %v724 = vadd.f32 %v650, %v713
      %v725 = vadd.f32 %v651, %v716
      %v726 = vld [vmem:[%s577 + $0x2] sm:$0xff]
      %v727 = vld [vmem:[%s577 + $0x12] sm:$0xff]
      %v728 = vld [vmem:[%s577 + $0x22] sm:$0xff]
      %v729 = vld [vmem:[%s577 + $0x32] sm:$0xff]
      %v730 = vld [vmem:[%s577 + $0x42] sm:$0xff]
      %v731 = vld [vmem:[%s577 + $0x52] sm:$0xff]
      %v732 = vld [vmem:[%s577 + $0x62] sm:$0xff]
      %v733 = vld [vmem:[%s577 + $0x72] sm:$0xff]
      %s734 = scalar_lea.vmem %s3, 640
      %v735 = vld [vmem:[%s734] sm:$0xff]
      %v736 = vld [vmem:[%s734 + $0x8] sm:$0xff]
      %v737 = vld [vmem:[%s734 + $0x10] sm:$0xff]
      %v738 = vld [vmem:[%s734 + $0x18] sm:$0xff]
      %v739 = vld [vmem:[%s734 + $0x20] sm:$0xff]
      %v740 = vld [vmem:[%s734 + $0x28] sm:$0xff]
      %v741 = vld [vmem:[%s734 + $0x30] sm:$0xff]
      %v742 = vld [vmem:[%s734 + $0x38] sm:$0xff]
      %v743 = vld [vmem:[%s734 + $0x40] sm:$0xff]
      %v744 = vld [vmem:[%s734 + $0x48] sm:$0xff]
      %v745 = vld [vmem:[%s734 + $0x50] sm:$0xff]
      %v746 = vld [vmem:[%s734 + $0x58] sm:$0xff]
      %v747 = vld [vmem:[%s734 + $0x60] sm:$0xff]
      %v748 = vld [vmem:[%s734 + $0x68] sm:$0xff]
      %v749 = vld [vmem:[%s734 + $0x70] sm:$0xff]
      %v750 = vld [vmem:[%s734 + $0x78] sm:$0xff]
      %751 = vmatpush.msra.mxu0 %v750
      %752 = vmatpush.msra.mxu0 %v749
      %753 = vmatpush.msra.mxu0 %v748
      %754 = vmatpush.msra.mxu0 %v747
      %755 = vmatpush.msra.mxu0 %v746
      %756 = vmatpush.msra.mxu0 %v745
      %757 = vmatpush.msra.mxu0 %v744
      %758 = vmatpush.msra.mxu0 %v743
      %759 = vmatpush.msra.mxu0 %v742
      %760 = vmatpush.msra.mxu0 %v741
      %761 = vmatpush.msra.mxu0 %v740
      %762 = vmatpush.msra.mxu0 %v739
      %763 = vmatpush.msra.mxu0 %v738
      %764 = vmatpush.msra.mxu0 %v737
      %765 = vmatpush.msra.mxu0 %v736
      %766 = vmatpush.msra.mxu0 %v735
      %767 = vmatmul.f32.gmra.mxu0 %v726
      %v768 = vpop.f32.mrf.mxu0
      %v769 = vadd.f32 0.0, %v768
      %770 = vmatmul.f32.gmra.mxu0 %v727
      %v771 = vpop.f32.mrf.mxu0
      %v772 = vadd.f32 0.0, %v771
      %773 = vmatmul.f32.gmra.mxu0 %v728
      %v774 = vpop.f32.mrf.mxu0
      %v775 = vadd.f32 0.0, %v774
      %776 = vmatmul.f32.gmra.mxu0 %v729
      %v777 = vpop.f32.mrf.mxu0
      %v778 = vadd.f32 0.0, %v777
      %779 = vmatmul.f32.gmra.mxu0 %v730
      %v780 = vpop.f32.mrf.mxu0
      %v781 = vadd.f32 0.0, %v780
      %782 = vmatmul.f32.gmra.mxu0 %v731
      %v783 = vpop.f32.mrf.mxu0
      %v784 = vadd.f32 0.0, %v783
      %785 = vmatmul.f32.gmra.mxu0 %v732
      %v786 = vpop.f32.mrf.mxu0
      %v787 = vadd.f32 0.0, %v786
      %788 = vmatmul.f32.gmra.mxu0 %v733
      %v789 = vpop.f32.mrf.mxu0
      %v790 = vadd.f32 0.0, %v789
      %791 = vdwg.mxu0
      %v792 = vadd.f32 %v718, %v769
      %v793 = vadd.f32 %v719, %v772
      %v794 = vadd.f32 %v720, %v775
      %v795 = vadd.f32 %v721, %v778
      %v796 = vadd.f32 %v722, %v781
      %v797 = vadd.f32 %v723, %v784
      %v798 = vadd.f32 %v724, %v787
      %v799 = vadd.f32 %v725, %v790
      %s800 = sadd.s32 %s367, 2
      %s801 = smul.u32 %s800, 16
      %s802 = scalar_lea.vmem [#allocation2], %s801
      %v803 = vld [vmem:[%s802] sm:$0xff]
      %v804 = vld [vmem:[%s802 + $0x10] sm:$0xff]
      %v805 = vld [vmem:[%s802 + $0x20] sm:$0xff]
      %v806 = vld [vmem:[%s802 + $0x30] sm:$0xff]
      %v807 = vld [vmem:[%s802 + $0x40] sm:$0xff]
      %v808 = vld [vmem:[%s802 + $0x50] sm:$0xff]
      %v809 = vld [vmem:[%s802 + $0x60] sm:$0xff]
      %v810 = vld [vmem:[%s802 + $0x70] sm:$0xff]
      %s811 = scalar_lea.vmem %s3, 768
      %v812 = vld [vmem:[%s811] sm:$0xff]
      %v813 = vld [vmem:[%s811 + $0x8] sm:$0xff]
      %v814 = vld [vmem:[%s811 + $0x10] sm:$0xff]
      %v815 = vld [vmem:[%s811 + $0x18] sm:$0xff]
      %v816 = vld [vmem:[%s811 + $0x20] sm:$0xff]
      %v817 = vld [vmem:[%s811 + $0x28] sm:$0xff]
      %v818 = vld [vmem:[%s811 + $0x30] sm:$0xff]
      %v819 = vld [vmem:[%s811 + $0x38] sm:$0xff]
      %v820 = vld [vmem:[%s811 + $0x40] sm:$0xff]
      %v821 = vld [vmem:[%s811 + $0x48] sm:$0xff]
      %v822 = vld [vmem:[%s811 + $0x50] sm:$0xff]
      %v823 = vld [vmem:[%s811 + $0x58] sm:$0xff]
      %v824 = vld [vmem:[%s811 + $0x60] sm:$0xff]
      %v825 = vld [vmem:[%s811 + $0x68] sm:$0xff]
      %v826 = vld [vmem:[%s811 + $0x70] sm:$0xff]
      %v827 = vld [vmem:[%s811 + $0x78] sm:$0xff]
      %828 = vmatpush.msra.mxu0 %v827
      %829 = vmatpush.msra.mxu0 %v826
      %830 = vmatpush.msra.mxu0 %v825
      %831 = vmatpush.msra.mxu0 %v824
      %832 = vmatpush.msra.mxu0 %v823
      %833 = vmatpush.msra.mxu0 %v822
      %834 = vmatpush.msra.mxu0 %v821
      %835 = vmatpush.msra.mxu0 %v820
      %836 = vmatpush.msra.mxu0 %v819
      %837 = vmatpush.msra.mxu0 %v818
      %838 = vmatpush.msra.mxu0 %v817
      %839 = vmatpush.msra.mxu0 %v816
      %840 = vmatpush.msra.mxu0 %v815
      %841 = vmatpush.msra.mxu0 %v814
      %842 = vmatpush.msra.mxu0 %v813
      %843 = vmatpush.msra.mxu0 %v812
      %844 = vmatmul.f32.gmra.mxu0 %v803
      %v845 = vpop.f32.mrf.mxu0
      %v846 = vadd.f32 0.0, %v845
      %847 = vmatmul.f32.gmra.mxu0 %v804
      %v848 = vpop.f32.mrf.mxu0
      %v849 = vadd.f32 0.0, %v848
      %850 = vmatmul.f32.gmra.mxu0 %v805
      %v851 = vpop.f32.mrf.mxu0
      %v852 = vadd.f32 0.0, %v851
      %853 = vmatmul.f32.gmra.mxu0 %v806
      %v854 = vpop.f32.mrf.mxu0
      %v855 = vadd.f32 0.0, %v854
      %856 = vmatmul.f32.gmra.mxu0 %v807
      %v857 = vpop.f32.mrf.mxu0
      %v858 = vadd.f32 0.0, %v857
      %859 = vmatmul.f32.gmra.mxu0 %v808
      %v860 = vpop.f32.mrf.mxu0
      %v861 = vadd.f32 0.0, %v860
      %862 = vmatmul.f32.gmra.mxu0 %v809
      %v863 = vpop.f32.mrf.mxu0
      %v864 = vadd.f32 0.0, %v863
      %865 = vmatmul.f32.gmra.mxu0 %v810
      %v866 = vpop.f32.mrf.mxu0
      %v867 = vadd.f32 0.0, %v866
      %868 = vdwg.mxu0
      %v869 = vadd.f32 %v792, %v846
      %v870 = vadd.f32 %v793, %v849
      %v871 = vadd.f32 %v794, %v852
      %v872 = vadd.f32 %v795, %v855
      %v873 = vadd.f32 %v796, %v858
      %v874 = vadd.f32 %v797, %v861
      %v875 = vadd.f32 %v798, %v864
      %v876 = vadd.f32 %v799, %v867
      %v877 = vld [vmem:[%s802 + $0x1] sm:$0xff]
      %v878 = vld [vmem:[%s802 + $0x11] sm:$0xff]
      %v879 = vld [vmem:[%s802 + $0x21] sm:$0xff]
      %v880 = vld [vmem:[%s802 + $0x31] sm:$0xff]
      %v881 = vld [vmem:[%s802 + $0x41] sm:$0xff]
      %v882 = vld [vmem:[%s802 + $0x51] sm:$0xff]
      %v883 = vld [vmem:[%s802 + $0x61] sm:$0xff]
      %v884 = vld [vmem:[%s802 + $0x71] sm:$0xff]
      %s885 = scalar_lea.vmem %s3, 896
      %v886 = vld [vmem:[%s885] sm:$0xff]
      %v887 = vld [vmem:[%s885 + $0x8] sm:$0xff]
      %v888 = vld [vmem:[%s885 + $0x10] sm:$0xff]
      %v889 = vld [vmem:[%s885 + $0x18] sm:$0xff]
      %v890 = vld [vmem:[%s885 + $0x20] sm:$0xff]
      %v891 = vld [vmem:[%s885 + $0x28] sm:$0xff]
      %v892 = vld [vmem:[%s885 + $0x30] sm:$0xff]
      %v893 = vld [vmem:[%s885 + $0x38] sm:$0xff]
      %v894 = vld [vmem:[%s885 + $0x40] sm:$0xff]
      %v895 = vld [vmem:[%s885 + $0x48] sm:$0xff]
      %v896 = vld [vmem:[%s885 + $0x50] sm:$0xff]
      %v897 = vld [vmem:[%s885 + $0x58] sm:$0xff]
      %v898 = vld [vmem:[%s885 + $0x60] sm:$0xff]
      %v899 = vld [vmem:[%s885 + $0x68] sm:$0xff]
      %v900 = vld [vmem:[%s885 + $0x70] sm:$0xff]
      %v901 = vld [vmem:[%s885 + $0x78] sm:$0xff]
      %902 = vmatpush.msra.mxu0 %v901
      %903 = vmatpush.msra.mxu0 %v900
      %904 = vmatpush.msra.mxu0 %v899
      %905 = vmatpush.msra.mxu0 %v898
      %906 = vmatpush.msra.mxu0 %v897
      %907 = vmatpush.msra.mxu0 %v896
      %908 = vmatpush.msra.mxu0 %v895
      %909 = vmatpush.msra.mxu0 %v894
      %910 = vmatpush.msra.mxu0 %v893
      %911 = vmatpush.msra.mxu0 %v892
      %912 = vmatpush.msra.mxu0 %v891
      %913 = vmatpush.msra.mxu0 %v890
      %914 = vmatpush.msra.mxu0 %v889
      %915 = vmatpush.msra.mxu0 %v888
      %916 = vmatpush.msra.mxu0 %v887
      %917 = vmatpush.msra.mxu0 %v886
      %918 = vmatmul.f32.gmra.mxu0 %v877
      %v919 = vpop.f32.mrf.mxu0
      %v920 = vadd.f32 0.0, %v919
      %921 = vmatmul.f32.gmra.mxu0 %v878
      %v922 = vpop.f32.mrf.mxu0
      %v923 = vadd.f32 0.0, %v922
      %924 = vmatmul.f32.gmra.mxu0 %v879
      %v925 = vpop.f32.mrf.mxu0
      %v926 = vadd.f32 0.0, %v925
      %927 = vmatmul.f32.gmra.mxu0 %v880
      %v928 = vpop.f32.mrf.mxu0
      %v929 = vadd.f32 0.0, %v928
      %930 = vmatmul.f32.gmra.mxu0 %v881
      %v931 = vpop.f32.mrf.mxu0
      %v932 = vadd.f32 0.0, %v931
      %933 = vmatmul.f32.gmra.mxu0 %v882
      %v934 = vpop.f32.mrf.mxu0
      %v935 = vadd.f32 0.0, %v934
      %936 = vmatmul.f32.gmra.mxu0 %v883
      %v937 = vpop.f32.mrf.mxu0
      %v938 = vadd.f32 0.0, %v937
      %939 = vmatmul.f32.gmra.mxu0 %v884
      %v940 = vpop.f32.mrf.mxu0
      %v941 = vadd.f32 0.0, %v940
      %942 = vdwg.mxu0
      %v943 = vadd.f32 %v869, %v920
      %v944 = vadd.f32 %v870, %v923
      %v945 = vadd.f32 %v871, %v926
      %v946 = vadd.f32 %v872, %v929
      %v947 = vadd.f32 %v873, %v932
      %v948 = vadd.f32 %v874, %v935
      %v949 = vadd.f32 %v875, %v938
      %v950 = vadd.f32 %v876, %v941
      %v951 = vld [vmem:[%s802 + $0x2] sm:$0xff]
      %v952 = vld [vmem:[%s802 + $0x12] sm:$0xff]
      %v953 = vld [vmem:[%s802 + $0x22] sm:$0xff]
      %v954 = vld [vmem:[%s802 + $0x32] sm:$0xff]
      %v955 = vld [vmem:[%s802 + $0x42] sm:$0xff]
      %v956 = vld [vmem:[%s802 + $0x52] sm:$0xff]
      %v957 = vld [vmem:[%s802 + $0x62] sm:$0xff]
      %v958 = vld [vmem:[%s802 + $0x72] sm:$0xff]
      %s959 = scalar_lea.vmem %s3, 1024
      %v960 = vld [vmem:[%s959] sm:$0xff]
      %v961 = vld [vmem:[%s959 + $0x8] sm:$0xff]
      %v962 = vld [vmem:[%s959 + $0x10] sm:$0xff]
      %v963 = vld [vmem:[%s959 + $0x18] sm:$0xff]
      %v964 = vld [vmem:[%s959 + $0x20] sm:$0xff]
      %v965 = vld [vmem:[%s959 + $0x28] sm:$0xff]
      %v966 = vld [vmem:[%s959 + $0x30] sm:$0xff]
      %v967 = vld [vmem:[%s959 + $0x38] sm:$0xff]
      %v968 = vld [vmem:[%s959 + $0x40] sm:$0xff]
      %v969 = vld [vmem:[%s959 + $0x48] sm:$0xff]
      %v970 = vld [vmem:[%s959 + $0x50] sm:$0xff]
      %v971 = vld [vmem:[%s959 + $0x58] sm:$0xff]
      %v972 = vld [vmem:[%s959 + $0x60] sm:$0xff]
      %v973 = vld [vmem:[%s959 + $0x68] sm:$0xff]
      %v974 = vld [vmem:[%s959 + $0x70] sm:$0xff]
      %v975 = vld [vmem:[%s959 + $0x78] sm:$0xff]
      %976 = vmatpush.msra.mxu0 %v975
      %977 = vmatpush.msra.mxu0 %v974
      %978 = vmatpush.msra.mxu0 %v973
      %979 = vmatpush.msra.mxu0 %v972
      %980 = vmatpush.msra.mxu0 %v971
      %981 = vmatpush.msra.mxu0 %v970
      %982 = vmatpush.msra.mxu0 %v969
      %983 = vmatpush.msra.mxu0 %v968
      %984 = vmatpush.msra.mxu0 %v967
      %985 = vmatpush.msra.mxu0 %v966
      %986 = vmatpush.msra.mxu0 %v965
      %987 = vmatpush.msra.mxu0 %v964
      %988 = vmatpush.msra.mxu0 %v963
      %989 = vmatpush.msra.mxu0 %v962
      %990 = vmatpush.msra.mxu0 %v961
      %991 = vmatpush.msra.mxu0 %v960
      %992 = vmatmul.f32.gmra.mxu0 %v951
      %v993 = vpop.f32.mrf.mxu0
      %v994 = vadd.f32 0.0, %v993
      %995 = vmatmul.f32.gmra.mxu0 %v952
      %v996 = vpop.f32.mrf.mxu0
      %v997 = vadd.f32 0.0, %v996
      %998 = vmatmul.f32.gmra.mxu0 %v953
      %v999 = vpop.f32.mrf.mxu0
      %v1000 = vadd.f32 0.0, %v999
      %1001 = vmatmul.f32.gmra.mxu0 %v954
      %v1002 = vpop.f32.mrf.mxu0
      %v1003 = vadd.f32 0.0, %v1002
      %1004 = vmatmul.f32.gmra.mxu0 %v955
      %v1005 = vpop.f32.mrf.mxu0
      %v1006 = vadd.f32 0.0, %v1005
      %1007 = vmatmul.f32.gmra.mxu0 %v956
      %v1008 = vpop.f32.mrf.mxu0
      %v1009 = vadd.f32 0.0, %v1008
      %1010 = vmatmul.f32.gmra.mxu0 %v957
      %v1011 = vpop.f32.mrf.mxu0
      %v1012 = vadd.f32 0.0, %v1011
      %1013 = vmatmul.f32.gmra.mxu0 %v958
      %v1014 = vpop.f32.mrf.mxu0
      %v1015 = vadd.f32 0.0, %v1014
      %1016 = vdwg.mxu0
      %v1017 = vadd.f32 %v943, %v994
      %v1018 = vadd.f32 %v944, %v997
      %v1019 = vadd.f32 %v945, %v1000
      %v1020 = vadd.f32 %v946, %v1003
      %v1021 = vadd.f32 %v947, %v1006
      %v1022 = vadd.f32 %v948, %v1009
      %v1023 = vadd.f32 %v949, %v1012
      %v1024 = vadd.f32 %v950, %v1015
      %1025 = vst [vmem:[%s284] sm:$0xff] %v1017
      %1026 = vst [vmem:[%s284 + $0x8] sm:$0xff] %v1018
      %1027 = vst [vmem:[%s284 + $0x10] sm:$0xff] %v1019
      %1028 = vst [vmem:[%s284 + $0x18] sm:$0xff] %v1020
      %1029 = vst [vmem:[%s284 + $0x20] sm:$0xff] %v1021
      %1030 = vst [vmem:[%s284 + $0x28] sm:$0xff] %v1022
      %1031 = vst [vmem:[%s284 + $0x30] sm:$0xff] %v1023
      %1032 = vst [vmem:[%s284 + $0x38] sm:$0xff] %v1024
      %v1033 = vld [vmem:[%s288] sm:$0x1]
      %v1034 = vadd.f32 %v1017, %v1018
      %v1035 = vadd.f32 %v1034, %v1019
      %v1036 = vadd.f32 %v1035, %v1020
      %v1037 = vadd.f32 %v1036, %v1021
      %v1038 = vadd.f32 %v1037, %v1022
      %v1039 = vadd.f32 %v1038, %v1023
      %v1040 = vadd.f32 %v1039, %v1024
      %v1041 = vrot.slane %v1040, 4
      %v1042 = vadd.f32 %v1040, %v1041
      %v1043 = vrot.slane %v1042, 2
      %v1044 = vadd.f32 %v1042, %v1043
      %v1045 = vrot.slane %v1044, 1
      %v1046 = vadd.f32 %v1044, %v1045
      %v1047 = vadd.f32 %v1033, %v1046
      %1048 = vst [vmem:[%s288] sm:$0x1] %v1047
      %v1049 = vld [vmem:[%s291] sm:$0x1]
      %v1050 = vmul.f32 %v1017, %v1017
      %v1051 = vmul.f32 %v1018, %v1018
      %v1052 = vmul.f32 %v1019, %v1019
      %v1053 = vmul.f32 %v1020, %v1020
      %v1054 = vmul.f32 %v1021, %v1021
      %v1055 = vmul.f32 %v1022, %v1022
      %v1056 = vmul.f32 %v1023, %v1023
      %v1057 = vmul.f32 %v1024, %v1024
      %v1058 = vadd.f32 %v1050, %v1051
      %v1059 = vadd.f32 %v1058, %v1052
      %v1060 = vadd.f32 %v1059, %v1053
      %v1061 = vadd.f32 %v1060, %v1054
      %v1062 = vadd.f32 %v1061, %v1055
      %v1063 = vadd.f32 %v1062, %v1056
      %v1064 = vadd.f32 %v1063, %v1057
      %v1065 = vrot.slane %v1064, 4
      %v1066 = vadd.f32 %v1064, %v1065
      %v1067 = vrot.slane %v1066, 2
      %v1068 = vadd.f32 %v1066, %v1067
      %v1069 = vrot.slane %v1068, 1
      %v1070 = vadd.f32 %v1068, %v1069
      %v1071 = vadd.f32 %v1049, %v1070
      %1072 = vst [vmem:[%s291] sm:$0x1] %v1071
      %s1073 = smul.u32 8, %s23
      %p1074 = scmp.lt.s32.totalorder %s22, 1
      %s1075 = scalar_select %p1074, %s22, 1
      %p1076 = scmp.lt.s32.totalorder %s1073, 7
      %s1077 = scalar_select %p1076, %s1073, 7
      %s1078 = smul.addr %s1075, 8
      %s1079 = sadd.s32 %s1077, %s1078
      %s1080 = smul.addr %s1079, 8
      %s1081 = scalar_lea.vmem %s4, %s1080
      %p1082 = scmp.lt.s32.totalorder %s22, 1
      %s1083 = scalar_select %p1082, %s22, 1
      %s1084 = scalar_lea.vmem %s5, %s1083
      %p1085 = scmp.lt.s32.totalorder %s22, 1
      %s1086 = scalar_select %p1085, %s22, 1
      %s1087 = scalar_lea.vmem %s6, %s1086
      // Predicated region
      $region41: #{down_forward.4} parent=35 // pred_check
        %p1088 = pneg %p139
      $region42: #{down_forward.4} parent=35 // pred_check_branch
        %1090 = sbr.rel (%p1088) target = $region44
      $region43: #{down_forward.4} parent=35 // pred_region
        %s1091 = smul.u32 8, %s23
      $region44: #{down_forward.4} parent=35 // pred_fallthru
        _
      // Predicated region
      $region45: #{down_forward.4} parent=35 // pred_check
        %p1092 = pneg %p165
      $region46: #{down_forward.4} parent=35 // pred_check_branch
        %1094 = sbr.rel (%p1092) target = $region48
      $region47: #{down_forward.4} parent=35 // pred_region
        _
      $region48: #{down_forward.4} parent=35 // pred_fallthru
        _
      // Predicated region
      $region49: #{down_forward.4} parent=35 // pred_check
        %p1095 = pneg %p191
      $region50: #{down_forward.4} parent=35 // pred_check_branch
        %1097 = sbr.rel (%p1095) target = $region52
      $region51: #{down_forward.4} parent=35 // pred_region
        _
      $region52: #{down_forward.4} parent=35 // pred_fallthru
        _
    $region36: #{down_forward.4} parent=5 // pred_fallthru
      _
    %p1098 = scmp.le.s32.totalorder 2, %s13
    // Predicated region
    $region53: #{down_forward.4} parent=5 // pred_check
      %p1099 = pneg %p1098
    $region54: #{down_forward.4} parent=5 // pred_check_branch
      %1101 = sbr.rel (%p1099) target = $region56
    $region55: #{down_forward.4} parent=5 // pred_region
      %s1102 = ssub.s32 %s13, 2
      // Predicated region
      $region57: #{down_forward.4} parent=55 // pred_check
        %p1103 = pneg %p145
      $region58: #{down_forward.4} parent=55 // pred_check_branch
        %1105 = sbr.rel (%p1103) target = $region60
      $region59: #{down_forward.4} parent=55 // pred_region
        %s1106 = smul.u32 8, %s25
        %p1107 = scmp.lt.s32.totalorder %s24, 1
        %s1108 = scalar_select %p1107, %s24, 1
        %p1109 = scmp.lt.s32.totalorder %s1106, 7
        %s1110 = scalar_select %p1109, %s1106, 7
        %s1111 = smul.addr %s1108, 8
        %s1112 = sadd.s32 %s1110, %s1111
        %s1113 = smul.addr %s1112, 8
        %s1114 = scalar_lea.vmem %s4, %s1113
      $region60: #{down_forward.4} parent=55 // pred_fallthru
        _
      // Predicated region
      $region61: #{down_forward.4} parent=55 // pred_check
        %p1115 = pneg %p171
      $region62: #{down_forward.4} parent=55 // pred_check_branch
        %1117 = sbr.rel (%p1115) target = $region64
      $region63: #{down_forward.4} parent=55 // pred_region
        %p1118 = scmp.lt.s32.totalorder %s24, 1
        %s1119 = scalar_select %p1118, %s24, 1
        %s1120 = scalar_lea.vmem %s5, %s1119
      $region64: #{down_forward.4} parent=55 // pred_fallthru
        _
      // Predicated region
      $region65: #{down_forward.4} parent=55 // pred_check
        %p1121 = pneg %p197
      $region66: #{down_forward.4} parent=55 // pred_check_branch
        %1123 = sbr.rel (%p1121) target = $region68
      $region67: #{down_forward.4} parent=55 // pred_region
        %p1124 = scmp.lt.s32.totalorder %s24, 1
        %s1125 = scalar_select %p1124, %s24, 1
        %s1126 = scalar_lea.vmem %s6, %s1125
      $region68: #{down_forward.4} parent=55 // pred_fallthru
        _
    $region56: #{down_forward.4} parent=5 // pred_fallthru
      _
  $region6: #{down_forward.4} parent=0 // loop_footer
    %s17 = sadd.s32 1, %s13
  $region7: #{down_forward.4} parent=0 // loop_footer_branch
    %12 = sbr.rel target = $region3
  $region8: #{down_forward.4} parent=0 // loop_exit
    _

// kernel: down_forward.3
$region0: #{down_forward.3}
  #allocation0 [shape = 'u32[]', space=smem, size = 0x4, offset = 0x4, fixed_abs, tag = 'smem constant byte address 0x4 - core index']
  #allocation1 [shape = 'u32[72,128]{1,0:T(1,128)}', space=vmem, size = 0x9000, scoped, tag = 'internal scratch']
  #allocation2 [shape = 'f32[1,10,10,128]{3,2,1,0:T(8,128)}', space=vmem, size = 0x14000, scoped, tag = 'scratch operand']
  %s0 = inlined_call_operand.vmem [shape: f32[2,8,2,8,2,4], index: 0, kind: input, shape index: {}]
  %s1 = inlined_call_operand.vmem [shape: f32[9,128,128], index: 1, kind: input, shape index: {}]
  %s2 = inlined_call_operand.vmem [shape: f32[2,8,8,128], index: 2, kind: output, shape index: {0}]
  %s3 = inlined_call_operand.vmem [shape: f32[2,1,128], index: 3, kind: output, shape index: {1}]
  %s4 = inlined_call_operand.vmem [shape: f32[2,1,128], index: 4, kind: output, shape index: {2}]
  %5 = xla_tuple %s2, %s3, %s4
  %s6 = sld [smem:[#allocation0]]
  $region61: #{down_forward.3} parent=0
    _
  %s8 = ssub.s32 1, %s6
  %s9 = scalar_select 0, %s8, %s6
  loop: start=0, step=1, limit=4
  $region2: #{down_forward.3} parent=0 // loop_pre_header
    _
  $region3: #{down_forward.3} parent=0 // loop_header
    %s11 = sphi 0, %s15
    %p12 = scmp.ge.s32.totalorder %s11, 4
    %s18 = sphi 0, %s30
    %s19 = sphi 0, %s26
    %s20 = sphi 0, %s18
    %s21 = sphi 0, %s19
    %s22 = sphi 0, %s20
    %s23 = sphi 0, %s21
    %s33 = sphi 0, %s35
    %s36 = sphi 0, %s33
    %s37 = sphi 0, %s36
    %s53 = sphi 0, %s37
    %s57 = sphi 0, %s57
    %s59 = sphi 0, %s57
    %s60 = sphi 0, %s59
    %s74 = sphi 0, %s60
    %s82 = sphi 0, %s84
    %s85 = sphi 0, %s82
    %s86 = sphi 0, %s85
    %s102 = sphi 0, %s86
    %s108 = sphi 0, %s110
    %s111 = sphi 0, %s108
    %s112 = sphi 0, %s111
    %s128 = sphi 0, %s112
    %s134 = sphi 0, %s136
    %s137 = sphi 0, %s134
    %s138 = sphi 0, %s137
    %s154 = sphi 0, %s138
  $region4: #{down_forward.3} parent=0 // loop_header_branch
    %14 = sbr.rel (%p12) target = $region8
  $region5: #{down_forward.3} parent=0 // loop_body
    %s16 = ssub.s32 %s11, 1
    %s17 = ssub.s32 %s11, 2
    %s24 = sadd.s32 1, %s19
    %p25 = scmp.ge.s32.totalorder %s24, 1
    %s26 = scalar_select %p25, 0, %s24
    %s27 = sadd.s32 1, %s18
    %s28 = scalar_select %p25, %s27, %s18
    %p29 = scmp.ge.s32.totalorder %s28, 2
    %s30 = scalar_select %p29, 0, %s28
    %s31 = ssub.s32 %s18, %s30
    %p32 = scmp.eq.s32.totalorder %s31, 0
    %s34 = sadd.s32 %s33, 1
    %s35 = scalar_select %p32, %s33, %s34
    %p38 = pneg %p32
    %p39 = scmp.eq.s32.totalorder %s11, 1
    %p40 = por %p38, %p39
    %p41 = scmp.ne.s32.totalorder %s33, %s36
    %p42 = scmp.eq.s32.totalorder %s11, 0
    %p43 = por %p41, %p42
    %p44 = scmp.ne.s32.totalorder %s33, %s36
    %p45 = scmp.eq.s32.totalorder %s16, 1
    %p46 = por %p44, %p45
    %p47 = scmp.ne.s32.totalorder %s36, %s37
    %p48 = scmp.eq.s32.totalorder %s16, 0
    %p49 = por %p47, %p48
    %p50 = scmp.ne.s32.totalorder %s36, %s37
    %p51 = scmp.eq.s32.totalorder %s17, 1
    %p52 = por %p50, %p51
    %p54 = scmp.ne.s32.totalorder %s37, %s53
    %p55 = scmp.eq.s32.totalorder %s17, 0
    %p56 = por %p54, %p55
    %s58 = sadd.s32 %s57, 1
    %p61 = scmp.eq.s32.totalorder %s11, 1
    %p62 = scmp.ne.s32.totalorder %s57, %s59
    %p63 = scmp.eq.s32.totalorder %s11, 0
    %p64 = por %p62, %p63
    %p65 = scmp.ne.s32.totalorder %s57, %s59
    %p66 = scmp.eq.s32.totalorder %s16, 1
    %p67 = por %p65, %p66
    %p68 = scmp.ne.s32.totalorder %s59, %s60
    %p69 = scmp.eq.s32.totalorder %s16, 0
    %p70 = por %p68, %p69
    %p71 = scmp.ne.s32.totalorder %s59, %s60
    %p72 = scmp.eq.s32.totalorder %s17, 1
    %p73 = por %p71, %p72
    %p75 = scmp.ne.s32.totalorder %s60, %s74
    %p76 = scmp.eq.s32.totalorder %s17, 0
    %p77 = por %p75, %p76
    %s78 = ssub.s32 %s18, %s30
    %s79 = ssub.s32 %s19, %s26
    %s80 = sor.u32 %s78, %s79
    %p81 = scmp.eq.s32.totalorder %s80, 0
    %s83 = sadd.s32 %s82, 1
    %s84 = scalar_select %p81, %s82, %s83
    %p87 = pneg %p81
    %p88 = scmp.eq.s32.totalorder %s11, 1
    %p89 = por %p87, %p88
    %p90 = scmp.ne.s32.totalorder %s82, %s85
    %p91 = scmp.eq.s32.totalorder %s11, 0
    %p92 = por %p90, %p91
    %p93 = scmp.ne.s32.totalorder %s82, %s85
    %p94 = scmp.eq.s32.totalorder %s16, 1
    %p95 = por %p93, %p94
    %p96 = scmp.ne.s32.totalorder %s85, %s86
    %p97 = scmp.eq.s32.totalorder %s16, 0
    %p98 = por %p96, %p97
    %p99 = scmp.ne.s32.totalorder %s85, %s86
    %p100 = scmp.eq.s32.totalorder %s17, 1
    %p101 = por %p99, %p100
    %p103 = scmp.ne.s32.totalorder %s86, %s102
    %p104 = scmp.eq.s32.totalorder %s17, 0
    %p105 = por %p103, %p104
    %s106 = ssub.s32 %s18, %s30
    %p107 = scmp.eq.s32.totalorder %s106, 0
    %s109 = sadd.s32 %s108, 1
    %s110 = scalar_select %p107, %s108, %s109
    %p113 = pneg %p107
    %p114 = scmp.eq.s32.totalorder %s11, 1
    %p115 = por %p113, %p114
    %p116 = scmp.ne.s32.totalorder %s108, %s111
    %p117 = scmp.eq.s32.totalorder %s11, 0
    %p118 = por %p116, %p117
    %p119 = scmp.ne.s32.totalorder %s108, %s111
    %p120 = scmp.eq.s32.totalorder %s16, 1
    %p121 = por %p119, %p120
    %p122 = scmp.ne.s32.totalorder %s111, %s112
    %p123 = scmp.eq.s32.totalorder %s16, 0
    %p124 = por %p122, %p123
    %p125 = scmp.ne.s32.totalorder %s111, %s112
    %p126 = scmp.eq.s32.totalorder %s17, 1
    %p127 = por %p125, %p126
    %p129 = scmp.ne.s32.totalorder %s112, %s128
    %p130 = scmp.eq.s32.totalorder %s17, 0
    %p131 = por %p129, %p130
    %s132 = ssub.s32 %s18, %s30
    %p133 = scmp.eq.s32.totalorder %s132, 0
    %s135 = sadd.s32 %s134, 1
    %s136 = scalar_select %p133, %s134, %s135
    %p139 = pneg %p133
    %p140 = scmp.eq.s32.totalorder %s11, 1
    %p141 = por %p139, %p140
    %p142 = scmp.ne.s32.totalorder %s134, %s137
    %p143 = scmp.eq.s32.totalorder %s11, 0
    %p144 = por %p142, %p143
    %p145 = scmp.ne.s32.totalorder %s134, %s137
    %p146 = scmp.eq.s32.totalorder %s16, 1
    %p147 = por %p145, %p146
    %p148 = scmp.ne.s32.totalorder %s137, %s138
    %p149 = scmp.eq.s32.totalorder %s16, 0
    %p150 = por %p148, %p149
    %p151 = scmp.ne.s32.totalorder %s137, %s138
    %p152 = scmp.eq.s32.totalorder %s17, 1
    %p153 = por %p151, %p152
    %p155 = scmp.ne.s32.totalorder %s138, %s154
    %p156 = scmp.eq.s32.totalorder %s17, 0
    %p157 = por %p155, %p156
    %p158 = scmp.le.s32.totalorder 1, %s11
    %p159 = scmp.lt.s32.totalorder %s11, 3
    %p160 = pnand %p158, %p159
    %p161 = pneg %p160
    // Predicated region
    $region9: #{down_forward.3} parent=5 // pred_check
      _
    $region10: #{down_forward.3} parent=5 // pred_check_branch
      %163 = sbr.rel (%p160) target = $region12
    $region11: #{down_forward.3} parent=5 // pred_region
      %s164 = ssub.s32 %s11, 1
      // Predicated region
      $region13: #{down_forward.3} parent=11 // pred_check
        %p165 = pneg %p70
      $region14: #{down_forward.3} parent=11 // pred_check_branch
        %167 = sbr.rel (%p165) target = $region16
      $region15: #{down_forward.3} parent=11 // pred_region
        _
      $region16: #{down_forward.3} parent=11 // pred_fallthru
        _
    $region12: #{down_forward.3} parent=5 // pred_fallthru
      _
    %p168 = scmp.lt.s32.totalorder %s11, 2
    // Predicated region
    $region17: #{down_forward.3} parent=5 // pred_check
      %p169 = pneg %p168
    $region18: #{down_forward.3} parent=5 // pred_check_branch
      %171 = sbr.rel (%p169) target = $region20
    $region19: #{down_forward.3} parent=5 // pred_region
      // Predicated region
      $region21: #{down_forward.3} parent=19 // pred_check
        %p172 = pneg %p43
      $region22: #{down_forward.3} parent=19 // pred_check_branch
        %174 = sbr.rel (%p172) target = $region24
      $region23: #{down_forward.3} parent=19 // pred_region
        %p175 = scmp.lt.s32.totalorder %s18, 1
        %s176 = scalar_select %p175, %s18, 1
        %s177 = smul.addr %s176, 128
        %s178 = smul.addr %s177, 2
        %s179 = scalar_lea.vmem %s0, %s178
      $region24: #{down_forward.3} parent=19 // pred_fallthru
        _
    $region20: #{down_forward.3} parent=5 // pred_fallthru
      _
    %p180 = scmp.le.s32.totalorder 1, %s11
    %p181 = scmp.lt.s32.totalorder %s11, 3
    %p182 = pnand %p180, %p181
    %p183 = pneg %p182
    // Predicated region
    $region25: #{down_forward.3} parent=5 // pred_check
      _
    $region26: #{down_forward.3} parent=5 // pred_check_branch
      %185 = sbr.rel (%p182) target = $region28
    $region27: #{down_forward.3} parent=5 // pred_region
      %s186 = ssub.s32 %s11, 1
      %p187 = scmp.lt.s32.totalorder %s20, 1
      %s188 = scalar_select %p187, %s20, 1
      %s189 = smul.addr %s188, 128
      %s190 = smul.addr %s189, 2
      %s191 = scalar_lea.vmem %s0, %s190
      %p192 = pneg %p49
      %p193 = pneg %p46
      %p194 = pneg %p70
      %p195 = pneg %p67
      %p196 = pneg %p98
      %p197 = pneg %p95
      %s198 = smul.u32 8, %s21
      %p199 = scmp.lt.s32.totalorder %s20, 1
      %s200 = scalar_select %p199, %s20, 1
      %p201 = scmp.lt.s32.totalorder %s198, 7
      %s202 = scalar_select %p201, %s198, 7
      %s203 = smul.addr %s200, 8
      %s204 = sadd.s32 %s202, %s203
      %s205 = smul.addr %s204, 8
      %s206 = scalar_lea.vmem %s2, %s205
      %p207 = pneg %p124
      %p208 = pneg %p121
      %p209 = scmp.lt.s32.totalorder %s20, 1
      %s210 = scalar_select %p209, %s20, 1
      %s211 = scalar_lea.vmem %s3, %s210
      %p212 = pneg %p150
      %p213 = pneg %p147
      %p214 = scmp.lt.s32.totalorder %s20, 1
      %s215 = scalar_select %p214, %s20, 1
      %s216 = scalar_lea.vmem %s4, %s215
      %p217 = scmp.lt.s32.totalorder %s20, 1
      %s218 = scalar_select %p217, %s20, 1
      %s219 = smul.addr %s218, 128
      %s220 = smul.addr %s219, 2
      %s221 = scalar_lea.vmem %s0, %s220
      %s222 = smul.u32 8, %s21
      %p223 = scmp.lt.s32.totalorder %s20, 1
      %s224 = scalar_select %p223, %s20, 1
      %p225 = scmp.lt.s32.totalorder %s222, 7
      %s226 = scalar_select %p225, %s222, 7
      %s227 = smul.addr %s224, 8
      %s228 = sadd.s32 %s226, %s227
      %s229 = smul.addr %s228, 8
      %s230 = scalar_lea.vmem %s2, %s229
      %s231 = smul.u32 8, %s21
      %p232 = scmp.lt.s32.totalorder %s20, 1
      %s233 = scalar_select %p232, %s20, 1
      %s234 = scalar_lea.vmem %s3, %s233
      %p235 = scmp.lt.s32.totalorder %s20, 1
      %s236 = scalar_select %p235, %s20, 1
      %s237 = scalar_lea.vmem %s4, %s236
      %p238 = scmp.eq.s32.totalorder %s21, 0
      // Predicated region
      $region29: #{down_forward.3} parent=27 // pred_check
        %p239 = pneg %p238
      $region30: #{down_forward.3} parent=27 // pred_check_branch
        %241 = sbr.rel (%p239) target = $region32
      $region31: #{down_forward.3} parent=27 // pred_region
        %242 = vst [vmem:[#allocation2] sm:$0xff] 0.0
        %243 = vst [vmem:[#allocation2 + $0x8] sm:$0x3] 0.0
        %244 = vst [vmem:[#allocation2 + $0x10] sm:$0xff] 0.0
        %245 = vst [vmem:[#allocation2 + $0x18] sm:$0x3] 0.0
        %246 = vst [vmem:[#allocation2 + $0x20] sm:$0xff] 0.0
        %247 = vst [vmem:[#allocation2 + $0x28] sm:$0x3] 0.0
        %248 = vst [vmem:[#allocation2 + $0x30] sm:$0xff] 0.0
        %249 = vst [vmem:[#allocation2 + $0x38] sm:$0x3] 0.0
        %250 = vst [vmem:[#allocation2 + $0x40] sm:$0xff] 0.0
        %251 = vst [vmem:[#allocation2 + $0x48] sm:$0x3] 0.0
        %252 = vst [vmem:[#allocation2 + $0x50] sm:$0xff] 0.0
        %253 = vst [vmem:[#allocation2 + $0x58] sm:$0x3] 0.0
        %254 = vst [vmem:[#allocation2 + $0x60] sm:$0xff] 0.0
        %255 = vst [vmem:[#allocation2 + $0x68] sm:$0x3] 0.0
        %256 = vst [vmem:[#allocation2 + $0x70] sm:$0xff] 0.0
        %257 = vst [vmem:[#allocation2 + $0x78] sm:$0x3] 0.0
        %258 = vst [vmem:[#allocation2 + $0x80] sm:$0xff] 0.0
        %259 = vst [vmem:[#allocation2 + $0x88] sm:$0x3] 0.0
        %260 = vst [vmem:[#allocation2 + $0x90] sm:$0xff] 0.0
        %261 = vst [vmem:[#allocation2 + $0x98] sm:$0x3] 0.0
        %v262 = vld [vmem:[%s221] sm:$0x1]
        %v263 = vld [vmem:[%s221 + $0x2] sm:$0x1]
        %v264 = vld [vmem:[%s221 + $0x4] sm:$0x1]
        %v265 = vld [vmem:[%s221 + $0x6] sm:$0x1]
        %v266 = vld [vmem:[%s221 + $0x8] sm:$0x1]
        %v267 = vld [vmem:[%s221 + $0xa] sm:$0x1]
        %v268 = vld [vmem:[%s221 + $0xc] sm:$0x1]
        %v269 = vld [vmem:[%s221 + $0xe] sm:$0x1]
        %v270 = vld [vmem:[%s221 + $0x20] sm:$0x1]
        %v271 = vld [vmem:[%s221 + $0x22] sm:$0x1]
        %v272 = vld [vmem:[%s221 + $0x24] sm:$0x1]
        %v273 = vld [vmem:[%s221 + $0x26] sm:$0x1]
        %v274 = vld [vmem:[%s221 + $0x28] sm:$0x1]
        %v275 = vld [vmem:[%s221 + $0x2a] sm:$0x1]
        %v276 = vld [vmem:[%s221 + $0x2c] sm:$0x1]
        %v277 = vld [vmem:[%s221 + $0x2e] sm:$0x1]
        %v278 = vld [vmem:[%s221 + $0x40] sm:$0x1]
        %v279 = vld [vmem:[%s221 + $0x42] sm:$0x1]
        %v280 = vld [vmem:[%s221 + $0x44] sm:$0x1]
        %v281 = vld [vmem:[%s221 + $0x46] sm:$0x1]
        %v282 = vld [vmem:[%s221 + $0x48] sm:$0x1]
        %v283 = vld [vmem:[%s221 + $0x4a] sm:$0x1]
        %v284 = vld [vmem:[%s221 + $0x4c] sm:$0x1]
        %v285 = vld [vmem:[%s221 + $0x4e] sm:$0x1]
        %v286 = vld [vmem:[%s221 + $0x60] sm:$0x1]
        %v287 = vld [vmem:[%s221 + $0x62] sm:$0x1]
        %v288 = vld [vmem:[%s221 + $0x64] sm:$0x1]
        %v289 = vld [vmem:[%s221 + $0x66] sm:$0x1]
        %v290 = vld [vmem:[%s221 + $0x68] sm:$0x1]
        %v291 = vld [vmem:[%s221 + $0x6a] sm:$0x1]
        %v292 = vld [vmem:[%s221 + $0x6c] sm:$0x1]
        %v293 = vld [vmem:[%s221 + $0x6e] sm:$0x1]
        %v294 = vld [vmem:[%s221 + $0x80] sm:$0x1]
        %v295 = vld [vmem:[%s221 + $0x82] sm:$0x1]
        %v296 = vld [vmem:[%s221 + $0x84] sm:$0x1]
        %v297 = vld [vmem:[%s221 + $0x86] sm:$0x1]
        %v298 = vld [vmem:[%s221 + $0x88] sm:$0x1]
        %v299 = vld [vmem:[%s221 + $0x8a] sm:$0x1]
        %v300 = vld [vmem:[%s221 + $0x8c] sm:$0x1]
        %v301 = vld [vmem:[%s221 + $0x8e] sm:$0x1]
        %v302 = vld [vmem:[%s221 + $0xa0] sm:$0x1]
        %v303 = vld [vmem:[%s221 + $0xa2] sm:$0x1]
        %v304 = vld [vmem:[%s221 + $0xa4] sm:$0x1]
        %v305 = vld [vmem:[%s221 + $0xa6] sm:$0x1]
        %v306 = vld [vmem:[%s221 + $0xa8] sm:$0x1]
        %v307 = vld [vmem:[%s221 + $0xaa] sm:$0x1]
        %v308 = vld [vmem:[%s221 + $0xac] sm:$0x1]
        %v309 = vld [vmem:[%s221 + $0xae] sm:$0x1]
        %v310 = vld [vmem:[%s221 + $0xc0] sm:$0x1]
        %v311 = vld [vmem:[%s221 + $0xc2] sm:$0x1]
        %v312 = vld [vmem:[%s221 + $0xc4] sm:$0x1]
        %v313 = vld [vmem:[%s221 + $0xc6] sm:$0x1]
        %v314 = vld [vmem:[%s221 + $0xc8] sm:$0x1]
        %v315 = vld [vmem:[%s221 + $0xca] sm:$0x1]
        %v316 = vld [vmem:[%s221 + $0xcc] sm:$0x1]
        %v317 = vld [vmem:[%s221 + $0xce] sm:$0x1]
        %v318 = vld [vmem:[%s221 + $0xe0] sm:$0x1]
        %v319 = vld [vmem:[%s221 + $0xe2] sm:$0x1]
        %v320 = vld [vmem:[%s221 + $0xe4] sm:$0x1]
        %v321 = vld [vmem:[%s221 + $0xe6] sm:$0x1]
        %v322 = vld [vmem:[%s221 + $0xe8] sm:$0x1]
        %v323 = vld [vmem:[%s221 + $0xea] sm:$0x1]
        %v324 = vld [vmem:[%s221 + $0xec] sm:$0x1]
        %v325 = vld [vmem:[%s221 + $0xee] sm:$0x1]
        %v326 = vld [vmem:[%s221 + $0x1] sm:$0x1]
        %v327 = vld [vmem:[%s221 + $0x3] sm:$0x1]
        %v328 = vld [vmem:[%s221 + $0x5] sm:$0x1]
        %v329 = vld [vmem:[%s221 + $0x7] sm:$0x1]
        %v330 = vld [vmem:[%s221 + $0x9] sm:$0x1]
        %v331 = vld [vmem:[%s221 + $0xb] sm:$0x1]
        %v332 = vld [vmem:[%s221 + $0xd] sm:$0x1]
        %v333 = vld [vmem:[%s221 + $0xf] sm:$0x1]
        %v334 = vld [vmem:[%s221 + $0x21] sm:$0x1]
        %v335 = vld [vmem:[%s221 + $0x23] sm:$0x1]
        %v336 = vld [vmem:[%s221 + $0x25] sm:$0x1]
        %v337 = vld [vmem:[%s221 + $0x27] sm:$0x1]
        %v338 = vld [vmem:[%s221 + $0x29] sm:$0x1]
        %v339 = vld [vmem:[%s221 + $0x2b] sm:$0x1]
        %v340 = vld [vmem:[%s221 + $0x2d] sm:$0x1]
        %v341 = vld [vmem:[%s221 + $0x2f] sm:$0x1]
        %v342 = vld [vmem:[%s221 + $0x41] sm:$0x1]
        %v343 = vld [vmem:[%s221 + $0x43] sm:$0x1]
        %v344 = vld [vmem:[%s221 + $0x45] sm:$0x1]
        %v345 = vld [vmem:[%s221 + $0x47] sm:$0x1]
        %v346 = vld [vmem:[%s221 + $0x49] sm:$0x1]
        %v347 = vld [vmem:[%s221 + $0x4b] sm:$0x1]
        %v348 = vld [vmem:[%s221 + $0x4d] sm:$0x1]
        %v349 = vld [vmem:[%s221 + $0x4f] sm:$0x1]
        %v350 = vld [vmem:[%s221 + $0x61] sm:$0x1]
        %v351 = vld [vmem:[%s221 + $0x63] sm:$0x1]
        %v352 = vld [vmem:[%s221 + $0x65] sm:$0x1]
        %v353 = vld [vmem:[%s221 + $0x67] sm:$0x1]
        %v354 = vld [vmem:[%s221 + $0x69] sm:$0x1]
        %v355 = vld [vmem:[%s221 + $0x6b] sm:$0x1]
        %v356 = vld [vmem:[%s221 + $0x6d] sm:$0x1]
        %v357 = vld [vmem:[%s221 + $0x6f] sm:$0x1]
        %v358 = vld [vmem:[%s221 + $0x81] sm:$0x1]
        %v359 = vld [vmem:[%s221 + $0x83] sm:$0x1]
        %v360 = vld [vmem:[%s221 + $0x85] sm:$0x1]
        %v361 = vld [vmem:[%s221 + $0x87] sm:$0x1]
        %v362 = vld [vmem:[%s221 + $0x89] sm:$0x1]
        %v363 = vld [vmem:[%s221 + $0x8b] sm:$0x1]
        %v364 = vld [vmem:[%s221 + $0x8d] sm:$0x1]
        %v365 = vld [vmem:[%s221 + $0x8f] sm:$0x1]
        %v366 = vld [vmem:[%s221 + $0xa1] sm:$0x1]
        %v367 = vld [vmem:[%s221 + $0xa3] sm:$0x1]
        %v368 = vld [vmem:[%s221 + $0xa5] sm:$0x1]
        %v369 = vld [vmem:[%s221 + $0xa7] sm:$0x1]
        %v370 = vld [vmem:[%s221 + $0xa9] sm:$0x1]
        %v371 = vld [vmem:[%s221 + $0xab] sm:$0x1]
        %v372 = vld [vmem:[%s221 + $0xad] sm:$0x1]
        %v373 = vld [vmem:[%s221 + $0xaf] sm:$0x1]
        %v374 = vld [vmem:[%s221 + $0xc1] sm:$0x1]
        %v375 = vld [vmem:[%s221 + $0xc3] sm:$0x1]
        %v376 = vld [vmem:[%s221 + $0xc5] sm:$0x1]
        %v377 = vld [vmem:[%s221 + $0xc7] sm:$0x1]
        %v378 = vld [vmem:[%s221 + $0xc9] sm:$0x1]
        %v379 = vld [vmem:[%s221 + $0xcb] sm:$0x1]
        %v380 = vld [vmem:[%s221 + $0xcd] sm:$0x1]
        %v381 = vld [vmem:[%s221 + $0xcf] sm:$0x1]
        %v382 = vld [vmem:[%s221 + $0xe1] sm:$0x1]
        %v383 = vld [vmem:[%s221 + $0xe3] sm:$0x1]
        %v384 = vld [vmem:[%s221 + $0xe5] sm:$0x1]
        %v385 = vld [vmem:[%s221 + $0xe7] sm:$0x1]
        %v386 = vld [vmem:[%s221 + $0xe9] sm:$0x1]
        %v387 = vld [vmem:[%s221 + $0xeb] sm:$0x1]
        %v388 = vld [vmem:[%s221 + $0xed] sm:$0x1]
        %v389 = vld [vmem:[%s221 + $0xef] sm:$0x1]
        %s390 = scalar_lea.vmem %s221, 16
        %v391 = vld [vmem:[%s390] sm:$0x1]
        %v392 = vld [vmem:[%s390 + $0x2] sm:$0x1]
        %v393 = vld [vmem:[%s390 + $0x4] sm:$0x1]
        %v394 = vld [vmem:[%s390 + $0x6] sm:$0x1]
        %v395 = vld [vmem:[%s390 + $0x8] sm:$0x1]
        %v396 = vld [vmem:[%s390 + $0xa] sm:$0x1]
        %v397 = vld [vmem:[%s390 + $0xc] sm:$0x1]
        %v398 = vld [vmem:[%s390 + $0xe] sm:$0x1]
        %v399 = vld [vmem:[%s390 + $0x20] sm:$0x1]
        %v400 = vld [vmem:[%s390 + $0x22] sm:$0x1]
        %v401 = vld [vmem:[%s390 + $0x24] sm:$0x1]
        %v402 = vld [vmem:[%s390 + $0x26] sm:$0x1]
        %v403 = vld [vmem:[%s390 + $0x28] sm:$0x1]
        %v404 = vld [vmem:[%s390 + $0x2a] sm:$0x1]
        %v405 = vld [vmem:[%s390 + $0x2c] sm:$0x1]
        %v406 = vld [vmem:[%s390 + $0x2e] sm:$0x1]
        %v407 = vld [vmem:[%s390 + $0x40] sm:$0x1]
        %v408 = vld [vmem:[%s390 + $0x42] sm:$0x1]
        %v409 = vld [vmem:[%s390 + $0x44] sm:$0x1]
        %v410 = vld [vmem:[%s390 + $0x46] sm:$0x1]
        %v411 = vld [vmem:[%s390 + $0x48] sm:$0x1]
        %v412 = vld [vmem:[%s390 + $0x4a] sm:$0x1]
        %v413 = vld [vmem:[%s390 + $0x4c] sm:$0x1]
        %v414 = vld [vmem:[%s390 + $0x4e] sm:$0x1]
        %v415 = vld [vmem:[%s390 + $0x60] sm:$0x1]
        %v416 = vld [vmem:[%s390 + $0x62] sm:$0x1]
        %v417 = vld [vmem:[%s390 + $0x64] sm:$0x1]
        %v418 = vld [vmem:[%s390 + $0x66] sm:$0x1]
        %v419 = vld [vmem:[%s390 + $0x68] sm:$0x1]
        %v420 = vld [vmem:[%s390 + $0x6a] sm:$0x1]
        %v421 = vld [vmem:[%s390 + $0x6c] sm:$0x1]
        %v422 = vld [vmem:[%s390 + $0x6e] sm:$0x1]
        %v423 = vld [vmem:[%s390 + $0x80] sm:$0x1]
        %v424 = vld [vmem:[%s390 + $0x82] sm:$0x1]
        %v425 = vld [vmem:[%s390 + $0x84] sm:$0x1]
        %v426 = vld [vmem:[%s390 + $0x86] sm:$0x1]
        %v427 = vld [vmem:[%s390 + $0x88] sm:$0x1]
        %v428 = vld [vmem:[%s390 + $0x8a] sm:$0x1]
        %v429 = vld [vmem:[%s390 + $0x8c] sm:$0x1]
        %v430 = vld [vmem:[%s390 + $0x8e] sm:$0x1]
        %v431 = vld [vmem:[%s390 + $0xa0] sm:$0x1]
        %v432 = vld [vmem:[%s390 + $0xa2] sm:$0x1]
        %v433 = vld [vmem:[%s390 + $0xa4] sm:$0x1]
        %v434 = vld [vmem:[%s390 + $0xa6] sm:$0x1]
        %v435 = vld [vmem:[%s390 + $0xa8] sm:$0x1]
        %v436 = vld [vmem:[%s390 + $0xaa] sm:$0x1]
        %v437 = vld [vmem:[%s390 + $0xac] sm:$0x1]
        %v438 = vld [vmem:[%s390 + $0xae] sm:$0x1]
        %v439 = vld [vmem:[%s390 + $0xc0] sm:$0x1]
        %v440 = vld [vmem:[%s390 + $0xc2] sm:$0x1]
        %v441 = vld [vmem:[%s390 + $0xc4] sm:$0x1]
        %v442 = vld [vmem:[%s390 + $0xc6] sm:$0x1]
        %v443 = vld [vmem:[%s390 + $0xc8] sm:$0x1]
        %v444 = vld [vmem:[%s390 + $0xca] sm:$0x1]
        %v445 = vld [vmem:[%s390 + $0xcc] sm:$0x1]
        %v446 = vld [vmem:[%s390 + $0xce] sm:$0x1]
        %v447 = vld [vmem:[%s390 + $0xe0] sm:$0x1]
        %v448 = vld [vmem:[%s390 + $0xe2] sm:$0x1]
        %v449 = vld [vmem:[%s390 + $0xe4] sm:$0x1]
        %v450 = vld [vmem:[%s390 + $0xe6] sm:$0x1]
        %v451 = vld [vmem:[%s390 + $0xe8] sm:$0x1]
        %v452 = vld [vmem:[%s390 + $0xea] sm:$0x1]
        %v453 = vld [vmem:[%s390 + $0xec] sm:$0x1]
        %v454 = vld [vmem:[%s390 + $0xee] sm:$0x1]
        %v455 = vld [vmem:[%s390 + $0x1] sm:$0x1]
        %v456 = vld [vmem:[%s390 + $0x3] sm:$0x1]
        %v457 = vld [vmem:[%s390 + $0x5] sm:$0x1]
        %v458 = vld [vmem:[%s390 + $0x7] sm:$0x1]
        %v459 = vld [vmem:[%s390 + $0x9] sm:$0x1]
        %v460 = vld [vmem:[%s390 + $0xb] sm:$0x1]
        %v461 = vld [vmem:[%s390 + $0xd] sm:$0x1]
        %v462 = vld [vmem:[%s390 + $0xf] sm:$0x1]
        %v463 = vld [vmem:[%s390 + $0x21] sm:$0x1]
        %v464 = vld [vmem:[%s390 + $0x23] sm:$0x1]
        %v465 = vld [vmem:[%s390 + $0x25] sm:$0x1]
        %v466 = vld [vmem:[%s390 + $0x27] sm:$0x1]
        %v467 = vld [vmem:[%s390 + $0x29] sm:$0x1]
        %v468 = vld [vmem:[%s390 + $0x2b] sm:$0x1]
        %v469 = vld [vmem:[%s390 + $0x2d] sm:$0x1]
        %v470 = vld [vmem:[%s390 + $0x2f] sm:$0x1]
        %v471 = vld [vmem:[%s390 + $0x41] sm:$0x1]
        %v472 = vld [vmem:[%s390 + $0x43] sm:$0x1]
        %v473 = vld [vmem:[%s390 + $0x45] sm:$0x1]
        %v474 = vld [vmem:[%s390 + $0x47] sm:$0x1]
        %v475 = vld [vmem:[%s390 + $0x49] sm:$0x1]
        %v476 = vld [vmem:[%s390 + $0x4b] sm:$0x1]
        %v477 = vld [vmem:[%s390 + $0x4d] sm:$0x1]
        %v478 = vld [vmem:[%s390 + $0x4f] sm:$0x1]
        %v479 = vld [vmem:[%s390 + $0x61] sm:$0x1]
        %v480 = vld [vmem:[%s390 + $0x63] sm:$0x1]
        %v481 = vld [vmem:[%s390 + $0x65] sm:$0x1]
        %v482 = vld [vmem:[%s390 + $0x67] sm:$0x1]
        %v483 = vld [vmem:[%s390 + $0x69] sm:$0x1]
        %v484 = vld [vmem:[%s390 + $0x6b] sm:$0x1]
        %v485 = vld [vmem:[%s390 + $0x6d] sm:$0x1]
        %v486 = vld [vmem:[%s390 + $0x6f] sm:$0x1]
        %v487 = vld [vmem:[%s390 + $0x81] sm:$0x1]
        %v488 = vld [vmem:[%s390 + $0x83] sm:$0x1]
        %v489 = vld [vmem:[%s390 + $0x85] sm:$0x1]
        %v490 = vld [vmem:[%s390 + $0x87] sm:$0x1]
        %v491 = vld [vmem:[%s390 + $0x89] sm:$0x1]
        %v492 = vld [vmem:[%s390 + $0x8b] sm:$0x1]
        %v493 = vld [vmem:[%s390 + $0x8d] sm:$0x1]
        %v494 = vld [vmem:[%s390 + $0x8f] sm:$0x1]
        %v495 = vld [vmem:[%s390 + $0xa1] sm:$0x1]
        %v496 = vld [vmem:[%s390 + $0xa3] sm:$0x1]
        %v497 = vld [vmem:[%s390 + $0xa5] sm:$0x1]
        %v498 = vld [vmem:[%s390 + $0xa7] sm:$0x1]
        %v499 = vld [vmem:[%s390 + $0xa9] sm:$0x1]
        %v500 = vld [vmem:[%s390 + $0xab] sm:$0x1]
        %v501 = vld [vmem:[%s390 + $0xad] sm:$0x1]
        %v502 = vld [vmem:[%s390 + $0xaf] sm:$0x1]
        %v503 = vld [vmem:[%s390 + $0xc1] sm:$0x1]
        %v504 = vld [vmem:[%s390 + $0xc3] sm:$0x1]
        %v505 = vld [vmem:[%s390 + $0xc5] sm:$0x1]
        %v506 = vld [vmem:[%s390 + $0xc7] sm:$0x1]
        %v507 = vld [vmem:[%s390 + $0xc9] sm:$0x1]
        %v508 = vld [vmem:[%s390 + $0xcb] sm:$0x1]
        %v509 = vld [vmem:[%s390 + $0xcd] sm:$0x1]
        %v510 = vld [vmem:[%s390 + $0xcf] sm:$0x1]
        %v511 = vld [vmem:[%s390 + $0xe1] sm:$0x1]
        %v512 = vld [vmem:[%s390 + $0xe3] sm:$0x1]
        %v513 = vld [vmem:[%s390 + $0xe5] sm:$0x1]
        %v514 = vld [vmem:[%s390 + $0xe7] sm:$0x1]
        %v515 = vld [vmem:[%s390 + $0xe9] sm:$0x1]
        %v516 = vld [vmem:[%s390 + $0xeb] sm:$0x1]
        %v517 = vld [vmem:[%s390 + $0xed] sm:$0x1]
        %v518 = vld [vmem:[%s390 + $0xef] sm:$0x1]
        %v519 = vmax.f32 %v262, %v326
        %v520 = vmax.f32 %v263, %v327
        %v521 = vmax.f32 %v264, %v328
        %v522 = vmax.f32 %v265, %v329
        %v523 = vmax.f32 %v266, %v330
        %v524 = vmax.f32 %v267, %v331
        %v525 = vmax.f32 %v268, %v332
        %v526 = vmax.f32 %v269, %v333
        %v527 = vmax.f32 %v270, %v334
        %v528 = vmax.f32 %v271, %v335
        %v529 = vmax.f32 %v272, %v336
        %v530 = vmax.f32 %v273, %v337
        %v531 = vmax.f32 %v274, %v338
        %v532 = vmax.f32 %v275, %v339
        %v533 = vmax.f32 %v276, %v340
        %v534 = vmax.f32 %v277, %v341
        %v535 = vmax.f32 %v278, %v342
        %v536 = vmax.f32 %v279, %v343
        %v537 = vmax.f32 %v280, %v344
        %v538 = vmax.f32 %v281, %v345
        %v539 = vmax.f32 %v282, %v346
        %v540 = vmax.f32 %v283, %v347
        %v541 = vmax.f32 %v284, %v348
        %v542 = vmax.f32 %v285, %v349
        %v543 = vmax.f32 %v286, %v350
        %v544 = vmax.f32 %v287, %v351
        %v545 = vmax.f32 %v288, %v352
        %v546 = vmax.f32 %v289, %v353
        %v547 = vmax.f32 %v290, %v354
        %v548 = vmax.f32 %v291, %v355
        %v549 = vmax.f32 %v292, %v356
        %v550 = vmax.f32 %v293, %v357
        %v551 = vmax.f32 %v294, %v358
        %v552 = vmax.f32 %v295, %v359
        %v553 = vmax.f32 %v296, %v360
        %v554 = vmax.f32 %v297, %v361
        %v555 = vmax.f32 %v298, %v362
        %v556 = vmax.f32 %v299, %v363
        %v557 = vmax.f32 %v300, %v364
        %v558 = vmax.f32 %v301, %v365
        %v559 = vmax.f32 %v302, %v366
        %v560 = vmax.f32 %v303, %v367
        %v561 = vmax.f32 %v304, %v368
        %v562 = vmax.f32 %v305, %v369
        %v563 = vmax.f32 %v306, %v370
        %v564 = vmax.f32 %v307, %v371
        %v565 = vmax.f32 %v308, %v372
        %v566 = vmax.f32 %v309, %v373
        %v567 = vmax.f32 %v310, %v374
        %v568 = vmax.f32 %v311, %v375
        %v569 = vmax.f32 %v312, %v376
        %v570 = vmax.f32 %v313, %v377
        %v571 = vmax.f32 %v314, %v378
        %v572 = vmax.f32 %v315, %v379
        %v573 = vmax.f32 %v316, %v380
        %v574 = vmax.f32 %v317, %v381
        %v575 = vmax.f32 %v318, %v382
        %v576 = vmax.f32 %v319, %v383
        %v577 = vmax.f32 %v320, %v384
        %v578 = vmax.f32 %v321, %v385
        %v579 = vmax.f32 %v322, %v386
        %v580 = vmax.f32 %v323, %v387
        %v581 = vmax.f32 %v324, %v388
        %v582 = vmax.f32 %v325, %v389
        %v583 = vmax.f32 %v391, %v455
        %v584 = vmax.f32 %v392, %v456
        %v585 = vmax.f32 %v393, %v457
        %v586 = vmax.f32 %v394, %v458
        %v587 = vmax.f32 %v395, %v459
        %v588 = vmax.f32 %v396, %v460
        %v589 = vmax.f32 %v397, %v461
        %v590 = vmax.f32 %v398, %v462
        %v591 = vmax.f32 %v399, %v463
        %v592 = vmax.f32 %v400, %v464
        %v593 = vmax.f32 %v401, %v465
        %v594 = vmax.f32 %v402, %v466
        %v595 = vmax.f32 %v403, %v467
        %v596 = vmax.f32 %v404, %v468
        %v597 = vmax.f32 %v405, %v469
        %v598 = vmax.f32 %v406, %v470
        %v599 = vmax.f32 %v407, %v471
        %v600 = vmax.f32 %v408, %v472
        %v601 = vmax.f32 %v409, %v473
        %v602 = vmax.f32 %v410, %v474
        %v603 = vmax.f32 %v411, %v475
        %v604 = vmax.f32 %v412, %v476
        %v605 = vmax.f32 %v413, %v477
        %v606 = vmax.f32 %v414, %v478
        %v607 = vmax.f32 %v415, %v479
        %v608 = vmax.f32 %v416, %v480
        %v609 = vmax.f32 %v417, %v481
        %v610 = vmax.f32 %v418, %v482
        %v611 = vmax.f32 %v419, %v483
        %v612 = vmax.f32 %v420, %v484
        %v613 = vmax.f32 %v421, %v485
        %v614 = vmax.f32 %v422, %v486
        %v615 = vmax.f32 %v423, %v487
        %v616 = vmax.f32 %v424, %v488
        %v617 = vmax.f32 %v425, %v489
        %v618 = vmax.f32 %v426, %v490
        %v619 = vmax.f32 %v427, %v491
        %v620 = vmax.f32 %v428, %v492
        %v621 = vmax.f32 %v429, %v493
        %v622 = vmax.f32 %v430, %v494
        %v623 = vmax.f32 %v431, %v495
        %v624 = vmax.f32 %v432, %v496
        %v625 = vmax.f32 %v433, %v497
        %v626 = vmax.f32 %v434, %v498
        %v627 = vmax.f32 %v435, %v499
        %v628 = vmax.f32 %v436, %v500
        %v629 = vmax.f32 %v437, %v501
        %v630 = vmax.f32 %v438, %v502
        %v631 = vmax.f32 %v439, %v503
        %v632 = vmax.f32 %v440, %v504
        %v633 = vmax.f32 %v441, %v505
        %v634 = vmax.f32 %v442, %v506
        %v635 = vmax.f32 %v443, %v507
        %v636 = vmax.f32 %v444, %v508
        %v637 = vmax.f32 %v445, %v509
        %v638 = vmax.f32 %v446, %v510
        %v639 = vmax.f32 %v447, %v511
        %v640 = vmax.f32 %v448, %v512
        %v641 = vmax.f32 %v449, %v513
        %v642 = vmax.f32 %v450, %v514
        %v643 = vmax.f32 %v451, %v515
        %v644 = vmax.f32 %v452, %v516
        %v645 = vmax.f32 %v453, %v517
        %v646 = vmax.f32 %v454, %v518
        %v647 = vmax.f32 %v519, %v583
        %v648 = vmax.f32 %v520, %v584
        %v649 = vmax.f32 %v521, %v585
        %v650 = vmax.f32 %v522, %v586
        %v651 = vmax.f32 %v523, %v587
        %v652 = vmax.f32 %v524, %v588
        %v653 = vmax.f32 %v525, %v589
        %v654 = vmax.f32 %v526, %v590
        %v655 = vmax.f32 %v527, %v591
        %v656 = vmax.f32 %v528, %v592
        %v657 = vmax.f32 %v529, %v593
        %v658 = vmax.f32 %v530, %v594
        %v659 = vmax.f32 %v531, %v595
        %v660 = vmax.f32 %v532, %v596
        %v661 = vmax.f32 %v533, %v597
        %v662 = vmax.f32 %v534, %v598
        %v663 = vmax.f32 %v535, %v599
        %v664 = vmax.f32 %v536, %v600
        %v665 = vmax.f32 %v537, %v601
        %v666 = vmax.f32 %v538, %v602
        %v667 = vmax.f32 %v539, %v603
        %v668 = vmax.f32 %v540, %v604
        %v669 = vmax.f32 %v541, %v605
        %v670 = vmax.f32 %v542, %v606
        %v671 = vmax.f32 %v543, %v607
        %v672 = vmax.f32 %v544, %v608
        %v673 = vmax.f32 %v545, %v609
        %v674 = vmax.f32 %v546, %v610
        %v675 = vmax.f32 %v547, %v611
        %v676 = vmax.f32 %v548, %v612
        %v677 = vmax.f32 %v549, %v613
        %v678 = vmax.f32 %v550, %v614
        %v679 = vmax.f32 %v551, %v615
        %v680 = vmax.f32 %v552, %v616
        %v681 = vmax.f32 %v553, %v617
        %v682 = vmax.f32 %v554, %v618
        %v683 = vmax.f32 %v555, %v619
        %v684 = vmax.f32 %v556, %v620
        %v685 = vmax.f32 %v557, %v621
        %v686 = vmax.f32 %v558, %v622
        %v687 = vmax.f32 %v559, %v623
        %v688 = vmax.f32 %v560, %v624
        %v689 = vmax.f32 %v561, %v625
        %v690 = vmax.f32 %v562, %v626
        %v691 = vmax.f32 %v563, %v627
        %v692 = vmax.f32 %v564, %v628
        %v693 = vmax.f32 %v565, %v629
        %v694 = vmax.f32 %v566, %v630
        %v695 = vmax.f32 %v567, %v631
        %v696 = vmax.f32 %v568, %v632
        %v697 = vmax.f32 %v569, %v633
        %v698 = vmax.f32 %v570, %v634
        %v699 = vmax.f32 %v571, %v635
        %v700 = vmax.f32 %v572, %v636
        %v701 = vmax.f32 %v573, %v637
        %v702 = vmax.f32 %v574, %v638
        %v703 = vmax.f32 %v575, %v639
        %v704 = vmax.f32 %v576, %v640
        %v705 = vmax.f32 %v577, %v641
        %v706 = vmax.f32 %v578, %v642
        %v707 = vmax.f32 %v579, %v643
        %v708 = vmax.f32 %v580, %v644
        %v709 = vmax.f32 %v581, %v645
        %v710 = vmax.f32 %v582, %v646
        %v775 = vrot.slane %v648, 7
        %vm776 = vcmask 1041409
        %v777 = vsel %vm776, %v775, %v647
        %v778 = vrot.slane %v649, 6
        %vm779 = vcmask 1042434
        %v780 = vsel %vm779, %v778, %v777
        %v781 = vrot.slane %v650, 5
        %vm782 = vcmask 1043459
        %v783 = vsel %vm782, %v781, %v780
        %v784 = vrot.slane %v651, 4
        %vm785 = vcmask 1044484
        %v786 = vsel %vm785, %v784, %v783
        %v787 = vrot.slane %v652, 3
        %vm788 = vcmask 1045509
        %v789 = vsel %vm788, %v787, %v786
        %v790 = vrot.slane %v653, 2
        %vm791 = vcmask 1046534
        %v792 = vsel %vm791, %v790, %v789
        %v793 = vrot.slane %v654, 1
        %vm794 = vcmask 1047559
        %v795 = vsel %vm794, %v793, %v792
        %v796 = vrot.slane %v656, 7
        %v797 = vsel %vm776, %v796, %v655
        %v798 = vrot.slane %v657, 6
        %v799 = vsel %vm779, %v798, %v797
        %v800 = vrot.slane %v658, 5
        %v801 = vsel %vm782, %v800, %v799
        %v802 = vrot.slane %v659, 4
        %v803 = vsel %vm785, %v802, %v801
        %v804 = vrot.slane %v660, 3
        %v805 = vsel %vm788, %v804, %v803
        %v806 = vrot.slane %v661, 2
        %v807 = vsel %vm791, %v806, %v805
        %v808 = vrot.slane %v662, 1
        %v809 = vsel %vm794, %v808, %v807
        %v810 = vrot.slane %v664, 7
        %v811 = vsel %vm776, %v810, %v663
        %v812 = vrot.slane %v665, 6
        %v813 = vsel %vm779, %v812, %v811
        %v814 = vrot.slane %v666, 5
        %v815 = vsel %vm782, %v814, %v813
        %v816 = vrot.slane %v667, 4
        %v817 = vsel %vm785, %v816, %v815
        %v818 = vrot.slane %v668, 3
        %v819 = vsel %vm788, %v818, %v817
        %v820 = vrot.slane %v669, 2
        %v821 = vsel %vm791, %v820, %v819
        %v822 = vrot.slane %v670, 1
        %v823 = vsel %vm794, %v822, %v821
        %v824 = vrot.slane %v672, 7
        %v825 = vsel %vm776, %v824, %v671
        %v826 = vrot.slane %v673, 6
        %v827 = vsel %vm779, %v826, %v825
        %v828 = vrot.slane %v674, 5
        %v829 = vsel %vm782, %v828, %v827
        %v830 = vrot.slane %v675, 4
        %v831 = vsel %vm785, %v830, %v829
        %v832 = vrot.slane %v676, 3
        %v833 = vsel %vm788, %v832, %v831
        %v834 = vrot.slane %v677, 2
        %v835 = vsel %vm791, %v834, %v833
        %v836 = vrot.slane %v678, 1
        %v837 = vsel %vm794, %v836, %v835
        %v838 = vrot.slane %v680, 7
        %v839 = vsel %vm776, %v838, %v679
        %v840 = vrot.slane %v681, 6
        %v841 = vsel %vm779, %v840, %v839
        %v842 = vrot.slane %v682, 5
        %v843 = vsel %vm782, %v842, %v841
        %v844 = vrot.slane %v683, 4
        %v845 = vsel %vm785, %v844, %v843
        %v846 = vrot.slane %v684, 3
        %v847 = vsel %vm788, %v846, %v845
        %v848 = vrot.slane %v685, 2
        %v849 = vsel %vm791, %v848, %v847
        %v850 = vrot.slane %v686, 1
        %v851 = vsel %vm794, %v850, %v849
        %v852 = vrot.slane %v688, 7
        %v853 = vsel %vm776, %v852, %v687
        %v854 = vrot.slane %v689, 6
        %v855 = vsel %vm779, %v854, %v853
        %v856 = vrot.slane %v690, 5
        %v857 = vsel %vm782, %v856, %v855
        %v858 = vrot.slane %v691, 4
        %v859 = vsel %vm785, %v858, %v857
        %v860 = vrot.slane %v692, 3
        %v861 = vsel %vm788, %v860, %v859
        %v862 = vrot.slane %v693, 2
        %v863 = vsel %vm791, %v862, %v861
        %v864 = vrot.slane %v694, 1
        %v865 = vsel %vm794, %v864, %v863
        %v866 = vrot.slane %v696, 7
        %v867 = vsel %vm776, %v866, %v695
        %v868 = vrot.slane %v697, 6
        %v869 = vsel %vm779, %v868, %v867
        %v870 = vrot.slane %v698, 5
        %v871 = vsel %vm782, %v870, %v869
        %v872 = vrot.slane %v699, 4
        %v873 = vsel %vm785, %v872, %v871
        %v874 = vrot.slane %v700, 3
        %v875 = vsel %vm788, %v874, %v873
        %v876 = vrot.slane %v701, 2
        %v877 = vsel %vm791, %v876, %v875
        %v878 = vrot.slane %v702, 1
        %v879 = vsel %vm794, %v878, %v877
        %v880 = vrot.slane %v704, 7
        %v881 = vsel %vm776, %v880, %v703
        %v882 = vrot.slane %v705, 6
        %v883 = vsel %vm779, %v882, %v881
        %v884 = vrot.slane %v706, 5
        %v885 = vsel %vm782, %v884, %v883
        %v886 = vrot.slane %v707, 4
        %v887 = vsel %vm785, %v886, %v885
        %v888 = vrot.slane %v708, 3
        %v889 = vsel %vm788, %v888, %v887
        %v890 = vrot.slane %v709, 2
        %v891 = vsel %vm791, %v890, %v889
        %v892 = vrot.slane %v710, 1
        %v893 = vsel %vm794, %v892, %v891
        %s902 = scalar_lea.vmem [#allocation2], 16
        %vm903 = vcmask 31744
        %904 = vst.msk [vmem:[%s902 + $0x1] sm:$0xff] %vm903, %v795
        %905 = vst.msk [vmem:[%s902 + $0x11] sm:$0xff] %vm903, %v809
        %906 = vst.msk [vmem:[%s902 + $0x21] sm:$0xff] %vm903, %v823
        %907 = vst.msk [vmem:[%s902 + $0x31] sm:$0xff] %vm903, %v837
        %908 = vst.msk [vmem:[%s902 + $0x41] sm:$0xff] %vm903, %v851
        %909 = vst.msk [vmem:[%s902 + $0x51] sm:$0xff] %vm903, %v865
        %910 = vst.msk [vmem:[%s902 + $0x61] sm:$0xff] %vm903, %v879
        %911 = vst.msk [vmem:[%s902 + $0x71] sm:$0xff] %vm903, %v893
        %912 = vst [vmem:[%s234] sm:$0x1] 0.0
        %913 = vst [vmem:[%s237] sm:$0x1] 0.0
      $region32: #{down_forward.3} parent=27 // pred_fallthru
        _
      %s914 = smul.u32 %s21, 8
      %s915 = smul.u32 %s914, 16
      %s916 = scalar_lea.vmem [#allocation2], %s915
      %v917 = vld [vmem:[%s916] sm:$0xff]
      %v918 = vld [vmem:[%s916 + $0x10] sm:$0xff]
      %v919 = vld [vmem:[%s916 + $0x20] sm:$0xff]
      %v920 = vld [vmem:[%s916 + $0x30] sm:$0xff]
      %v921 = vld [vmem:[%s916 + $0x40] sm:$0xff]
      %v922 = vld [vmem:[%s916 + $0x50] sm:$0xff]
      %v923 = vld [vmem:[%s916 + $0x60] sm:$0xff]
      %v924 = vld [vmem:[%s916 + $0x70] sm:$0xff]
      %v925 = vld [vmem:[%s1] sm:$0xff]
      %v926 = vld [vmem:[%s1 + $0x8] sm:$0xff]
      %v927 = vld [vmem:[%s1 + $0x10] sm:$0xff]
      %v928 = vld [vmem:[%s1 + $0x18] sm:$0xff]
      %v929 = vld [vmem:[%s1 + $0x20] sm:$0xff]
      %v930 = vld [vmem:[%s1 + $0x28] sm:$0xff]
      %v931 = vld [vmem:[%s1 + $0x30] sm:$0xff]
      %v932 = vld [vmem:[%s1 + $0x38] sm:$0xff]
      %v933 = vld [vmem:[%s1 + $0x40] sm:$0xff]
      %v934 = vld [vmem:[%s1 + $0x48] sm:$0xff]
      %v935 = vld [vmem:[%s1 + $0x50] sm:$0xff]
      %v936 = vld [vmem:[%s1 + $0x58] sm:$0xff]
      %v937 = vld [vmem:[%s1 + $0x60] sm:$0xff]
      %v938 = vld [vmem:[%s1 + $0x68] sm:$0xff]
      %v939 = vld [vmem:[%s1 + $0x70] sm:$0xff]
      %v940 = vld [vmem:[%s1 + $0x78] sm:$0xff]
      %v941 = vld [vmem:[%s916 + $0x1] sm:$0xff]
      %v942 = vld [vmem:[%s916 + $0x11] sm:$0xff]
      %v943 = vld [vmem:[%s916 + $0x21] sm:$0xff]
      %v944 = vld [vmem:[%s916 + $0x31] sm:$0xff]
      %v945 = vld [vmem:[%s916 + $0x41] sm:$0xff]
      %v946 = vld [vmem:[%s916 + $0x51] sm:$0xff]
      %v947 = vld [vmem:[%s916 + $0x61] sm:$0xff]
      %v948 = vld [vmem:[%s916 + $0x71] sm:$0xff]
      %s949 = scalar_lea.vmem %s1, 128
      %v950 = vld [vmem:[%s949] sm:$0xff]
      %v951 = vld [vmem:[%s949 + $0x8] sm:$0xff]
      %v952 = vld [vmem:[%s949 + $0x10] sm:$0xff]
      %v953 = vld [vmem:[%s949 + $0x18] sm:$0xff]
      %v954 = vld [vmem:[%s949 + $0x20] sm:$0xff]
      %v955 = vld [vmem:[%s949 + $0x28] sm:$0xff]
      %v956 = vld [vmem:[%s949 + $0x30] sm:$0xff]
      %v957 = vld [vmem:[%s949 + $0x38] sm:$0xff]
      %v958 = vld [vmem:[%s949 + $0x40] sm:$0xff]
      %v959 = vld [vmem:[%s949 + $0x48] sm:$0xff]
      %v960 = vld [vmem:[%s949 + $0x50] sm:$0xff]
      %v961 = vld [vmem:[%s949 + $0x58] sm:$0xff]
      %v962 = vld [vmem:[%s949 + $0x60] sm:$0xff]
      %v963 = vld [vmem:[%s949 + $0x68] sm:$0xff]
      %v964 = vld [vmem:[%s949 + $0x70] sm:$0xff]
      %v965 = vld [vmem:[%s949 + $0x78] sm:$0xff]
      %966 = vmatpush.msra.mxu0 %v965
      %967 = vmatpush.msra.mxu0 %v964
      %968 = vmatpush.msra.mxu0 %v963
      %969 = vmatpush.msra.mxu0 %v962
      %970 = vmatpush.msra.mxu0 %v961
      %971 = vmatpush.msra.mxu0 %v960
      %972 = vmatpush.msra.mxu0 %v959
      %973 = vmatpush.msra.mxu0 %v958
      %974 = vmatpush.msra.mxu0 %v957
      %975 = vmatpush.msra.mxu0 %v956
      %976 = vmatpush.msra.mxu0 %v955
      %977 = vmatpush.msra.mxu0 %v954
      %978 = vmatpush.msra.mxu0 %v953
      %979 = vmatpush.msra.mxu0 %v952
      %980 = vmatpush.msra.mxu0 %v951
      %981 = vmatpush.msra.mxu0 %v950
      %982 = vmatmul.f32.gmra.mxu0 %v941
      %v983 = vpop.f32.mrf.mxu0
      %v984 = vadd.f32 0.0, %v983
      %985 = vmatmul.f32.gmra.mxu0 %v942
      %v986 = vpop.f32.mrf.mxu0
      %v987 = vadd.f32 0.0, %v986
      %988 = vmatmul.f32.gmra.mxu0 %v943
      %v989 = vpop.f32.mrf.mxu0
      %v990 = vadd.f32 0.0, %v989
      %991 = vmatmul.f32.gmra.mxu0 %v944
      %v992 = vpop.f32.mrf.mxu0
      %v993 = vadd.f32 0.0, %v992
      %994 = vmatmul.f32.gmra.mxu0 %v945
      %v995 = vpop.f32.mrf.mxu0
      %v996 = vadd.f32 0.0, %v995
      %997 = vmatmul.f32.gmra.mxu0 %v946
      %v998 = vpop.f32.mrf.mxu0
      %v999 = vadd.f32 0.0, %v998
      %1000 = vmatmul.f32.gmra.mxu0 %v947
      %v1001 = vpop.f32.mrf.mxu0
      %v1002 = vadd.f32 0.0, %v1001
      %1003 = vmatmul.f32.gmra.mxu0 %v948
      %v1004 = vpop.f32.mrf.mxu0
      %v1005 = vadd.f32 0.0, %v1004
      %1006 = vdwg.mxu0
      %1007 = vmatpush.msra.mxu0 %v940
      %1008 = vmatpush.msra.mxu0 %v939
      %1009 = vmatpush.msra.mxu0 %v938
      %1010 = vmatpush.msra.mxu0 %v937
      %1011 = vmatpush.msra.mxu0 %v936
      %1012 = vmatpush.msra.mxu0 %v935
      %1013 = vmatpush.msra.mxu0 %v934
      %1014 = vmatpush.msra.mxu0 %v933
      %1015 = vmatpush.msra.mxu0 %v932
      %1016 = vmatpush.msra.mxu0 %v931
      %1017 = vmatpush.msra.mxu0 %v930
      %1018 = vmatpush.msra.mxu0 %v929
      %1019 = vmatpush.msra.mxu0 %v928
      %1020 = vmatpush.msra.mxu0 %v927
      %1021 = vmatpush.msra.mxu0 %v926
      %1022 = vmatpush.msra.mxu0 %v925
      %1023 = vmatmul.f32.gmra.mxu0 %v917
      %v1024 = vpop.f32.mrf.mxu0
      %v1025 = vadd.f32 %v984, %v1024
      %1026 = vmatmul.f32.gmra.mxu0 %v918
      %v1027 = vpop.f32.mrf.mxu0
      %v1028 = vadd.f32 %v987, %v1027
      %1029 = vmatmul.f32.gmra.mxu0 %v919
      %v1030 = vpop.f32.mrf.mxu0
      %v1031 = vadd.f32 %v990, %v1030
      %1032 = vmatmul.f32.gmra.mxu0 %v920
      %v1033 = vpop.f32.mrf.mxu0
      %v1034 = vadd.f32 %v993, %v1033
      %1035 = vmatmul.f32.gmra.mxu0 %v921
      %v1036 = vpop.f32.mrf.mxu0
      %v1037 = vadd.f32 %v996, %v1036
      %1038 = vmatmul.f32.gmra.mxu0 %v922
      %v1039 = vpop.f32.mrf.mxu0
      %v1040 = vadd.f32 %v999, %v1039
      %1041 = vmatmul.f32.gmra.mxu0 %v923
      %v1042 = vpop.f32.mrf.mxu0
      %v1043 = vadd.f32 %v1002, %v1042
      %1044 = vmatmul.f32.gmra.mxu0 %v924
      %v1045 = vpop.f32.mrf.mxu0
      %v1046 = vadd.f32 %v1005, %v1045
      %1047 = vdwg.mxu0
      %v1048 = vld [vmem:[%s916 + $0x2] sm:$0xff]
      %v1049 = vld [vmem:[%s916 + $0x12] sm:$0xff]
      %v1050 = vld [vmem:[%s916 + $0x22] sm:$0xff]
      %v1051 = vld [vmem:[%s916 + $0x32] sm:$0xff]
      %v1052 = vld [vmem:[%s916 + $0x42] sm:$0xff]
      %v1053 = vld [vmem:[%s916 + $0x52] sm:$0xff]
      %v1054 = vld [vmem:[%s916 + $0x62] sm:$0xff]
      %v1055 = vld [vmem:[%s916 + $0x72] sm:$0xff]
      %s1056 = scalar_lea.vmem %s1, 256
      %v1057 = vld [vmem:[%s1056] sm:$0xff]
      %v1058 = vld [vmem:[%s1056 + $0x8] sm:$0xff]
      %v1059 = vld [vmem:[%s1056 + $0x10] sm:$0xff]
      %v1060 = vld [vmem:[%s1056 + $0x18] sm:$0xff]
      %v1061 = vld [vmem:[%s1056 + $0x20] sm:$0xff]
      %v1062 = vld [vmem:[%s1056 + $0x28] sm:$0xff]
      %v1063 = vld [vmem:[%s1056 + $0x30] sm:$0xff]
      %v1064 = vld [vmem:[%s1056 + $0x38] sm:$0xff]
      %v1065 = vld [vmem:[%s1056 + $0x40] sm:$0xff]
      %v1066 = vld [vmem:[%s1056 + $0x48] sm:$0xff]
      %v1067 = vld [vmem:[%s1056 + $0x50] sm:$0xff]
      %v1068 = vld [vmem:[%s1056 + $0x58] sm:$0xff]
      %v1069 = vld [vmem:[%s1056 + $0x60] sm:$0xff]
      %v1070 = vld [vmem:[%s1056 + $0x68] sm:$0xff]
      %v1071 = vld [vmem:[%s1056 + $0x70] sm:$0xff]
      %v1072 = vld [vmem:[%s1056 + $0x78] sm:$0xff]
      %1073 = vmatpush.msra.mxu0 %v1072
      %1074 = vmatpush.msra.mxu0 %v1071
      %1075 = vmatpush.msra.mxu0 %v1070
      %1076 = vmatpush.msra.mxu0 %v1069
      %1077 = vmatpush.msra.mxu0 %v1068
      %1078 = vmatpush.msra.mxu0 %v1067
      %1079 = vmatpush.msra.mxu0 %v1066
      %1080 = vmatpush.msra.mxu0 %v1065
      %1081 = vmatpush.msra.mxu0 %v1064
      %1082 = vmatpush.msra.mxu0 %v1063
      %1083 = vmatpush.msra.mxu0 %v1062
      %1084 = vmatpush.msra.mxu0 %v1061
      %1085 = vmatpush.msra.mxu0 %v1060
      %1086 = vmatpush.msra.mxu0 %v1059
      %1087 = vmatpush.msra.mxu0 %v1058
      %1088 = vmatpush.msra.mxu0 %v1057
      %1089 = vmatmul.f32.gmra.mxu0 %v1048
      %v1090 = vpop.f32.mrf.mxu0
      %v1091 = vadd.f32 0.0, %v1090
      %1092 = vmatmul.f32.gmra.mxu0 %v1049
      %v1093 = vpop.f32.mrf.mxu0
      %v1094 = vadd.f32 0.0, %v1093
      %1095 = vmatmul.f32.gmra.mxu0 %v1050
      %v1096 = vpop.f32.mrf.mxu0
      %v1097 = vadd.f32 0.0, %v1096
      %1098 = vmatmul.f32.gmra.mxu0 %v1051
      %v1099 = vpop.f32.mrf.mxu0
      %v1100 = vadd.f32 0.0, %v1099
      %1101 = vmatmul.f32.gmra.mxu0 %v1052
      %v1102 = vpop.f32.mrf.mxu0
      %v1103 = vadd.f32 0.0, %v1102
      %1104 = vmatmul.f32.gmra.mxu0 %v1053
      %v1105 = vpop.f32.mrf.mxu0
      %v1106 = vadd.f32 0.0, %v1105
      %1107 = vmatmul.f32.gmra.mxu0 %v1054
      %v1108 = vpop.f32.mrf.mxu0
      %v1109 = vadd.f32 0.0, %v1108
      %1110 = vmatmul.f32.gmra.mxu0 %v1055
      %v1111 = vpop.f32.mrf.mxu0
      %v1112 = vadd.f32 0.0, %v1111
      %1113 = vdwg.mxu0
      %v1114 = vadd.f32 %v1025, %v1091
      %v1115 = vadd.f32 %v1028, %v1094
      %v1116 = vadd.f32 %v1031, %v1097
      %v1117 = vadd.f32 %v1034, %v1100
      %v1118 = vadd.f32 %v1037, %v1103
      %v1119 = vadd.f32 %v1040, %v1106
      %v1120 = vadd.f32 %v1043, %v1109
      %v1121 = vadd.f32 %v1046, %v1112
      %s1122 = sadd.s32 %s914, 1
      %s1123 = smul.u32 %s1122, 16
      %s1124 = scalar_lea.vmem [#allocation2], %s1123
      %v1125 = vld [vmem:[%s1124] sm:$0xff]
      %v1126 = vld [vmem:[%s1124 + $0x10] sm:$0xff]
      %v1127 = vld [vmem:[%s1124 + $0x20] sm:$0xff]
      %v1128 = vld [vmem:[%s1124 + $0x30] sm:$0xff]
      %v1129 = vld [vmem:[%s1124 + $0x40] sm:$0xff]
      %v1130 = vld [vmem:[%s1124 + $0x50] sm:$0xff]
      %v1131 = vld [vmem:[%s1124 + $0x60] sm:$0xff]
      %v1132 = vld [vmem:[%s1124 + $0x70] sm:$0xff]
      %s1133 = scalar_lea.vmem %s1, 384
      %v1134 = vld [vmem:[%s1133] sm:$0xff]
      %v1135 = vld [vmem:[%s1133 + $0x8] sm:$0xff]
      %v1136 = vld [vmem:[%s1133 + $0x10] sm:$0xff]
      %v1137 = vld [vmem:[%s1133 + $0x18] sm:$0xff]
      %v1138 = vld [vmem:[%s1133 + $0x20] sm:$0xff]
      %v1139 = vld [vmem:[%s1133 + $0x28] sm:$0xff]
      %v1140 = vld [vmem:[%s1133 + $0x30] sm:$0xff]
      %v1141 = vld [vmem:[%s1133 + $0x38] sm:$0xff]
      %v1142 = vld [vmem:[%s1133 + $0x40] sm:$0xff]
      %v1143 = vld [vmem:[%s1133 + $0x48] sm:$0xff]
      %v1144 = vld [vmem:[%s1133 + $0x50] sm:$0xff]
      %v1145 = vld [vmem:[%s1133 + $0x58] sm:$0xff]
      %v1146 = vld [vmem:[%s1133 + $0x60] sm:$0xff]
      %v1147 = vld [vmem:[%s1133 + $0x68] sm:$0xff]
      %v1148 = vld [vmem:[%s1133 + $0x70] sm:$0xff]
      %v1149 = vld [vmem:[%s1133 + $0x78] sm:$0xff]
      %1150 = vmatpush.msra.mxu0 %v1149
      %1151 = vmatpush.msra.mxu0 %v1148
      %1152 = vmatpush.msra.mxu0 %v1147
      %1153 = vmatpush.msra.mxu0 %v1146
      %1154 = vmatpush.msra.mxu0 %v1145
      %1155 = vmatpush.msra.mxu0 %v1144
      %1156 = vmatpush.msra.mxu0 %v1143
      %1157 = vmatpush.msra.mxu0 %v1142
      %1158 = vmatpush.msra.mxu0 %v1141
      %1159 = vmatpush.msra.mxu0 %v1140
      %1160 = vmatpush.msra.mxu0 %v1139
      %1161 = vmatpush.msra.mxu0 %v1138
      %1162 = vmatpush.msra.mxu0 %v1137
      %1163 = vmatpush.msra.mxu0 %v1136
      %1164 = vmatpush.msra.mxu0 %v1135
      %1165 = vmatpush.msra.mxu0 %v1134
      %1166 = vmatmul.f32.gmra.mxu0 %v1125
      %v1167 = vpop.f32.mrf.mxu0
      %v1168 = vadd.f32 0.0, %v1167
      %1169 = vmatmul.f32.gmra.mxu0 %v1126
      %v1170 = vpop.f32.mrf.mxu0
      %v1171 = vadd.f32 0.0, %v1170
      %1172 = vmatmul.f32.gmra.mxu0 %v1127
      %v1173 = vpop.f32.mrf.mxu0
      %v1174 = vadd.f32 0.0, %v1173
      %1175 = vmatmul.f32.gmra.mxu0 %v1128
      %v1176 = vpop.f32.mrf.mxu0
      %v1177 = vadd.f32 0.0, %v1176
      %1178 = vmatmul.f32.gmra.mxu0 %v1129
      %v1179 = vpop.f32.mrf.mxu0
      %v1180 = vadd.f32 0.0, %v1179
      %1181 = vmatmul.f32.gmra.mxu0 %v1130
      %v1182 = vpop.f32.mrf.mxu0
      %v1183 = vadd.f32 0.0, %v1182
      %1184 = vmatmul.f32.gmra.mxu0 %v1131
      %v1185 = vpop.f32.mrf.mxu0
      %v1186 = vadd.f32 0.0, %v1185
      %1187 = vmatmul.f32.gmra.mxu0 %v1132
      %v1188 = vpop.f32.mrf.mxu0
      %v1189 = vadd.f32 0.0, %v1188
      %1190 = vdwg.mxu0
      %v1191 = vadd.f32 %v1114, %v1168
      %v1192 = vadd.f32 %v1115, %v1171
      %v1193 = vadd.f32 %v1116, %v1174
      %v1194 = vadd.f32 %v1117, %v1177
      %v1195 = vadd.f32 %v1118, %v1180
      %v1196 = vadd.f32 %v1119, %v1183
      %v1197 = vadd.f32 %v1120, %v1186
      %v1198 = vadd.f32 %v1121, %v1189
      %v1199 = vld [vmem:[%s1124 + $0x1] sm:$0xff]
      %v1200 = vld [vmem:[%s1124 + $0x11] sm:$0xff]
      %v1201 = vld [vmem:[%s1124 + $0x21] sm:$0xff]
      %v1202 = vld [vmem:[%s1124 + $0x31] sm:$0xff]
      %v1203 = vld [vmem:[%s1124 + $0x41] sm:$0xff]
      %v1204 = vld [vmem:[%s1124 + $0x51] sm:$0xff]
      %v1205 = vld [vmem:[%s1124 + $0x61] sm:$0xff]
      %v1206 = vld [vmem:[%s1124 + $0x71] sm:$0xff]
      %s1207 = scalar_lea.vmem %s1, 512
      %v1208 = vld [vmem:[%s1207] sm:$0xff]
      %v1209 = vld [vmem:[%s1207 + $0x8] sm:$0xff]
      %v1210 = vld [vmem:[%s1207 + $0x10] sm:$0xff]
      %v1211 = vld [vmem:[%s1207 + $0x18] sm:$0xff]
      %v1212 = vld [vmem:[%s1207 + $0x20] sm:$0xff]
      %v1213 = vld [vmem:[%s1207 + $0x28] sm:$0xff]
      %v1214 = vld [vmem:[%s1207 + $0x30] sm:$0xff]
      %v1215 = vld [vmem:[%s1207 + $0x38] sm:$0xff]
      %v1216 = vld [vmem:[%s1207 + $0x40] sm:$0xff]
      %v1217 = vld [vmem:[%s1207 + $0x48] sm:$0xff]
      %v1218 = vld [vmem:[%s1207 + $0x50] sm:$0xff]
      %v1219 = vld [vmem:[%s1207 + $0x58] sm:$0xff]
      %v1220 = vld [vmem:[%s1207 + $0x60] sm:$0xff]
      %v1221 = vld [vmem:[%s1207 + $0x68] sm:$0xff]
      %v1222 = vld [vmem:[%s1207 + $0x70] sm:$0xff]
      %v1223 = vld [vmem:[%s1207 + $0x78] sm:$0xff]
      %1224 = vmatpush.msra.mxu0 %v1223
      %1225 = vmatpush.msra.mxu0 %v1222
      %1226 = vmatpush.msra.mxu0 %v1221
      %1227 = vmatpush.msra.mxu0 %v1220
      %1228 = vmatpush.msra.mxu0 %v1219
      %1229 = vmatpush.msra.mxu0 %v1218
      %1230 = vmatpush.msra.mxu0 %v1217
      %1231 = vmatpush.msra.mxu0 %v1216
      %1232 = vmatpush.msra.mxu0 %v1215
      %1233 = vmatpush.msra.mxu0 %v1214
      %1234 = vmatpush.msra.mxu0 %v1213
      %1235 = vmatpush.msra.mxu0 %v1212
      %1236 = vmatpush.msra.mxu0 %v1211
      %1237 = vmatpush.msra.mxu0 %v1210
      %1238 = vmatpush.msra.mxu0 %v1209
      %1239 = vmatpush.msra.mxu0 %v1208
      %1240 = vmatmul.f32.gmra.mxu0 %v1199
      %v1241 = vpop.f32.mrf.mxu0
      %v1242 = vadd.f32 0.0, %v1241
      %1243 = vmatmul.f32.gmra.mxu0 %v1200
      %v1244 = vpop.f32.mrf.mxu0
      %v1245 = vadd.f32 0.0, %v1244
      %1246 = vmatmul.f32.gmra.mxu0 %v1201
      %v1247 = vpop.f32.mrf.mxu0
      %v1248 = vadd.f32 0.0, %v1247
      %1249 = vmatmul.f32.gmra.mxu0 %v1202
      %v1250 = vpop.f32.mrf.mxu0
      %v1251 = vadd.f32 0.0, %v1250
      %1252 = vmatmul.f32.gmra.mxu0 %v1203
      %v1253 = vpop.f32.mrf.mxu0
      %v1254 = vadd.f32 0.0, %v1253
      %1255 = vmatmul.f32.gmra.mxu0 %v1204
      %v1256 = vpop.f32.mrf.mxu0
      %v1257 = vadd.f32 0.0, %v1256
      %1258 = vmatmul.f32.gmra.mxu0 %v1205
      %v1259 = vpop.f32.mrf.mxu0
      %v1260 = vadd.f32 0.0, %v1259
      %1261 = vmatmul.f32.gmra.mxu0 %v1206
      %v1262 = vpop.f32.mrf.mxu0
      %v1263 = vadd.f32 0.0, %v1262
      %1264 = vdwg.mxu0
      %v1265 = vadd.f32 %v1191, %v1242
      %v1266 = vadd.f32 %v1192, %v1245
      %v1267 = vadd.f32 %v1193, %v1248
      %v1268 = vadd.f32 %v1194, %v1251
      %v1269 = vadd.f32 %v1195, %v1254
      %v1270 = vadd.f32 %v1196, %v1257
      %v1271 = vadd.f32 %v1197, %v1260
      %v1272 = vadd.f32 %v1198, %v1263
      %v1273 = vld [vmem:[%s1124 + $0x2] sm:$0xff]
      %v1274 = vld [vmem:[%s1124 + $0x12] sm:$0xff]
      %v1275 = vld [vmem:[%s1124 + $0x22] sm:$0xff]
      %v1276 = vld [vmem:[%s1124 + $0x32] sm:$0xff]
      %v1277 = vld [vmem:[%s1124 + $0x42] sm:$0xff]
      %v1278 = vld [vmem:[%s1124 + $0x52] sm:$0xff]
      %v1279 = vld [vmem:[%s1124 + $0x62] sm:$0xff]
      %v1280 = vld [vmem:[%s1124 + $0x72] sm:$0xff]
      %s1281 = scalar_lea.vmem %s1, 640
      %v1282 = vld [vmem:[%s1281] sm:$0xff]
      %v1283 = vld [vmem:[%s1281 + $0x8] sm:$0xff]
      %v1284 = vld [vmem:[%s1281 + $0x10] sm:$0xff]
      %v1285 = vld [vmem:[%s1281 + $0x18] sm:$0xff]
      %v1286 = vld [vmem:[%s1281 + $0x20] sm:$0xff]
      %v1287 = vld [vmem:[%s1281 + $0x28] sm:$0xff]
      %v1288 = vld [vmem:[%s1281 + $0x30] sm:$0xff]
      %v1289 = vld [vmem:[%s1281 + $0x38] sm:$0xff]
      %v1290 = vld [vmem:[%s1281 + $0x40] sm:$0xff]
      %v1291 = vld [vmem:[%s1281 + $0x48] sm:$0xff]
      %v1292 = vld [vmem:[%s1281 + $0x50] sm:$0xff]
      %v1293 = vld [vmem:[%s1281 + $0x58] sm:$0xff]
      %v1294 = vld [vmem:[%s1281 + $0x60] sm:$0xff]
      %v1295 = vld [vmem:[%s1281 + $0x68] sm:$0xff]
      %v1296 = vld [vmem:[%s1281 + $0x70] sm:$0xff]
      %v1297 = vld [vmem:[%s1281 + $0x78] sm:$0xff]
      %1298 = vmatpush.msra.mxu0 %v1297
      %1299 = vmatpush.msra.mxu0 %v1296
      %1300 = vmatpush.msra.mxu0 %v1295
      %1301 = vmatpush.msra.mxu0 %v1294
      %1302 = vmatpush.msra.mxu0 %v1293
      %1303 = vmatpush.msra.mxu0 %v1292
      %1304 = vmatpush.msra.mxu0 %v1291
      %1305 = vmatpush.msra.mxu0 %v1290
      %1306 = vmatpush.msra.mxu0 %v1289
      %1307 = vmatpush.msra.mxu0 %v1288
      %1308 = vmatpush.msra.mxu0 %v1287
      %1309 = vmatpush.msra.mxu0 %v1286
      %1310 = vmatpush.msra.mxu0 %v1285
      %1311 = vmatpush.msra.mxu0 %v1284
      %1312 = vmatpush.msra.mxu0 %v1283
      %1313 = vmatpush.msra.mxu0 %v1282
      %1314 = vmatmul.f32.gmra.mxu0 %v1273
      %v1315 = vpop.f32.mrf.mxu0
      %v1316 = vadd.f32 0.0, %v1315
      %1317 = vmatmul.f32.gmra.mxu0 %v1274
      %v1318 = vpop.f32.mrf.mxu0
      %v1319 = vadd.f32 0.0, %v1318
      %1320 = vmatmul.f32.gmra.mxu0 %v1275
      %v1321 = vpop.f32.mrf.mxu0
      %v1322 = vadd.f32 0.0, %v1321
      %1323 = vmatmul.f32.gmra.mxu0 %v1276
      %v1324 = vpop.f32.mrf.mxu0
      %v1325 = vadd.f32 0.0, %v1324
      %1326 = vmatmul.f32.gmra.mxu0 %v1277
      %v1327 = vpop.f32.mrf.mxu0
      %v1328 = vadd.f32 0.0, %v1327
      %1329 = vmatmul.f32.gmra.mxu0 %v1278
      %v1330 = vpop.f32.mrf.mxu0
      %v1331 = vadd.f32 0.0, %v1330
      %1332 = vmatmul.f32.gmra.mxu0 %v1279
      %v1333 = vpop.f32.mrf.mxu0
      %v1334 = vadd.f32 0.0, %v1333
      %1335 = vmatmul.f32.gmra.mxu0 %v1280
      %v1336 = vpop.f32.mrf.mxu0
      %v1337 = vadd.f32 0.0, %v1336
      %1338 = vdwg.mxu0
      %v1339 = vadd.f32 %v1265, %v1316
      %v1340 = vadd.f32 %v1266, %v1319
      %v1341 = vadd.f32 %v1267, %v1322
      %v1342 = vadd.f32 %v1268, %v1325
      %v1343 = vadd.f32 %v1269, %v1328
      %v1344 = vadd.f32 %v1270, %v1331
      %v1345 = vadd.f32 %v1271, %v1334
      %v1346 = vadd.f32 %v1272, %v1337
      %s1347 = sadd.s32 %s914, 2
      %s1348 = smul.u32 %s1347, 16
      %s1349 = scalar_lea.vmem [#allocation2], %s1348
      %v1350 = vld [vmem:[%s1349] sm:$0xff]
      %v1351 = vld [vmem:[%s1349 + $0x10] sm:$0xff]
      %v1352 = vld [vmem:[%s1349 + $0x20] sm:$0xff]
      %v1353 = vld [vmem:[%s1349 + $0x30] sm:$0xff]
      %v1354 = vld [vmem:[%s1349 + $0x40] sm:$0xff]
      %v1355 = vld [vmem:[%s1349 + $0x50] sm:$0xff]
      %v1356 = vld [vmem:[%s1349 + $0x60] sm:$0xff]
      %v1357 = vld [vmem:[%s1349 + $0x70] sm:$0xff]
      %s1358 = scalar_lea.vmem %s1, 768
      %v1359 = vld [vmem:[%s1358] sm:$0xff]
      %v1360 = vld [vmem:[%s1358 + $0x8] sm:$0xff]
      %v1361 = vld [vmem:[%s1358 + $0x10] sm:$0xff]
      %v1362 = vld [vmem:[%s1358 + $0x18] sm:$0xff]
      %v1363 = vld [vmem:[%s1358 + $0x20] sm:$0xff]
      %v1364 = vld [vmem:[%s1358 + $0x28] sm:$0xff]
      %v1365 = vld [vmem:[%s1358 + $0x30] sm:$0xff]
      %v1366 = vld [vmem:[%s1358 + $0x38] sm:$0xff]
      %v1367 = vld [vmem:[%s1358 + $0x40] sm:$0xff]
      %v1368 = vld [vmem:[%s1358 + $0x48] sm:$0xff]
      %v1369 = vld [vmem:[%s1358 + $0x50] sm:$0xff]
      %v1370 = vld [vmem:[%s1358 + $0x58] sm:$0xff]
      %v1371 = vld [vmem:[%s1358 + $0x60] sm:$0xff]
      %v1372 = vld [vmem:[%s1358 + $0x68] sm:$0xff]
      %v1373 = vld [vmem:[%s1358 + $0x70] sm:$0xff]
      %v1374 = vld [vmem:[%s1358 + $0x78] sm:$0xff]
      %1375 = vmatpush.msra.mxu0 %v1374
      %1376 = vmatpush.msra.mxu0 %v1373
      %1377 = vmatpush.msra.mxu0 %v1372
      %1378 = vmatpush.msra.mxu0 %v1371
      %1379 = vmatpush.msra.mxu0 %v1370
      %1380 = vmatpush.msra.mxu0 %v1369
      %1381 = vmatpush.msra.mxu0 %v1368
      %1382 = vmatpush.msra.mxu0 %v1367
      %1383 = vmatpush.msra.mxu0 %v1366
      %1384 = vmatpush.msra.mxu0 %v1365
      %1385 = vmatpush.msra.mxu0 %v1364
      %1386 = vmatpush.msra.mxu0 %v1363
      %1387 = vmatpush.msra.mxu0 %v1362
      %1388 = vmatpush.msra.mxu0 %v1361
      %1389 = vmatpush.msra.mxu0 %v1360
      %1390 = vmatpush.msra.mxu0 %v1359
      %1391 = vmatmul.f32.gmra.mxu0 %v1350
      %v1392 = vpop.f32.mrf.mxu0
      %v1393 = vadd.f32 0.0, %v1392
      %1394 = vmatmul.f32.gmra.mxu0 %v1351
      %v1395 = vpop.f32.mrf.mxu0
      %v1396 = vadd.f32 0.0, %v1395
      %1397 = vmatmul.f32.gmra.mxu0 %v1352
      %v1398 = vpop.f32.mrf.mxu0
      %v1399 = vadd.f32 0.0, %v1398
      %1400 = vmatmul.f32.gmra.mxu0 %v1353
      %v1401 = vpop.f32.mrf.mxu0
      %v1402 = vadd.f32 0.0, %v1401
      %1403 = vmatmul.f32.gmra.mxu0 %v1354
      %v1404 = vpop.f32.mrf.mxu0
      %v1405 = vadd.f32 0.0, %v1404
      %1406 = vmatmul.f32.gmra.mxu0 %v1355
      %v1407 = vpop.f32.mrf.mxu0
      %v1408 = vadd.f32 0.0, %v1407
      %1409 = vmatmul.f32.gmra.mxu0 %v1356
      %v1410 = vpop.f32.mrf.mxu0
      %v1411 = vadd.f32 0.0, %v1410
      %1412 = vmatmul.f32.gmra.mxu0 %v1357
      %v1413 = vpop.f32.mrf.mxu0
      %v1414 = vadd.f32 0.0, %v1413
      %1415 = vdwg.mxu0
      %v1416 = vadd.f32 %v1339, %v1393
      %v1417 = vadd.f32 %v1340, %v1396
      %v1418 = vadd.f32 %v1341, %v1399
      %v1419 = vadd.f32 %v1342, %v1402
      %v1420 = vadd.f32 %v1343, %v1405
      %v1421 = vadd.f32 %v1344, %v1408
      %v1422 = vadd.f32 %v1345, %v1411
      %v1423 = vadd.f32 %v1346, %v1414
      %v1424 = vld [vmem:[%s1349 + $0x1] sm:$0xff]
      %v1425 = vld [vmem:[%s1349 + $0x11] sm:$0xff]
      %v1426 = vld [vmem:[%s1349 + $0x21] sm:$0xff]
      %v1427 = vld [vmem:[%s1349 + $0x31] sm:$0xff]
      %v1428 = vld [vmem:[%s1349 + $0x41] sm:$0xff]
      %v1429 = vld [vmem:[%s1349 + $0x51] sm:$0xff]
      %v1430 = vld [vmem:[%s1349 + $0x61] sm:$0xff]
      %v1431 = vld [vmem:[%s1349 + $0x71] sm:$0xff]
      %s1432 = scalar_lea.vmem %s1, 896
      %v1433 = vld [vmem:[%s1432] sm:$0xff]
      %v1434 = vld [vmem:[%s1432 + $0x8] sm:$0xff]
      %v1435 = vld [vmem:[%s1432 + $0x10] sm:$0xff]
      %v1436 = vld [vmem:[%s1432 + $0x18] sm:$0xff]
      %v1437 = vld [vmem:[%s1432 + $0x20] sm:$0xff]
      %v1438 = vld [vmem:[%s1432 + $0x28] sm:$0xff]
      %v1439 = vld [vmem:[%s1432 + $0x30] sm:$0xff]
      %v1440 = vld [vmem:[%s1432 + $0x38] sm:$0xff]
      %v1441 = vld [vmem:[%s1432 + $0x40] sm:$0xff]
      %v1442 = vld [vmem:[%s1432 + $0x48] sm:$0xff]
      %v1443 = vld [vmem:[%s1432 + $0x50] sm:$0xff]
      %v1444 = vld [vmem:[%s1432 + $0x58] sm:$0xff]
      %v1445 = vld [vmem:[%s1432 + $0x60] sm:$0xff]
      %v1446 = vld [vmem:[%s1432 + $0x68] sm:$0xff]
      %v1447 = vld [vmem:[%s1432 + $0x70] sm:$0xff]
      %v1448 = vld [vmem:[%s1432 + $0x78] sm:$0xff]
      %1449 = vmatpush.msra.mxu0 %v1448
      %1450 = vmatpush.msra.mxu0 %v1447
      %1451 = vmatpush.msra.mxu0 %v1446
      %1452 = vmatpush.msra.mxu0 %v1445
      %1453 = vmatpush.msra.mxu0 %v1444
      %1454 = vmatpush.msra.mxu0 %v1443
      %1455 = vmatpush.msra.mxu0 %v1442
      %1456 = vmatpush.msra.mxu0 %v1441
      %1457 = vmatpush.msra.mxu0 %v1440
      %1458 = vmatpush.msra.mxu0 %v1439
      %1459 = vmatpush.msra.mxu0 %v1438
      %1460 = vmatpush.msra.mxu0 %v1437
      %1461 = vmatpush.msra.mxu0 %v1436
      %1462 = vmatpush.msra.mxu0 %v1435
      %1463 = vmatpush.msra.mxu0 %v1434
      %1464 = vmatpush.msra.mxu0 %v1433
      %1465 = vmatmul.f32.gmra.mxu0 %v1424
      %v1466 = vpop.f32.mrf.mxu0
      %v1467 = vadd.f32 0.0, %v1466
      %1468 = vmatmul.f32.gmra.mxu0 %v1425
      %v1469 = vpop.f32.mrf.mxu0
      %v1470 = vadd.f32 0.0, %v1469
      %1471 = vmatmul.f32.gmra.mxu0 %v1426
      %v1472 = vpop.f32.mrf.mxu0
      %v1473 = vadd.f32 0.0, %v1472
      %1474 = vmatmul.f32.gmra.mxu0 %v1427
      %v1475 = vpop.f32.mrf.mxu0
      %v1476 = vadd.f32 0.0, %v1475
      %1477 = vmatmul.f32.gmra.mxu0 %v1428
      %v1478 = vpop.f32.mrf.mxu0
      %v1479 = vadd.f32 0.0, %v1478
      %1480 = vmatmul.f32.gmra.mxu0 %v1429
      %v1481 = vpop.f32.mrf.mxu0
      %v1482 = vadd.f32 0.0, %v1481
      %1483 = vmatmul.f32.gmra.mxu0 %v1430
      %v1484 = vpop.f32.mrf.mxu0
      %v1485 = vadd.f32 0.0, %v1484
      %1486 = vmatmul.f32.gmra.mxu0 %v1431
      %v1487 = vpop.f32.mrf.mxu0
      %v1488 = vadd.f32 0.0, %v1487
      %1489 = vdwg.mxu0
      %v1490 = vadd.f32 %v1416, %v1467
      %v1491 = vadd.f32 %v1417, %v1470
      %v1492 = vadd.f32 %v1418, %v1473
      %v1493 = vadd.f32 %v1419, %v1476
      %v1494 = vadd.f32 %v1420, %v1479
      %v1495 = vadd.f32 %v1421, %v1482
      %v1496 = vadd.f32 %v1422, %v1485
      %v1497 = vadd.f32 %v1423, %v1488
      %v1498 = vld [vmem:[%s1349 + $0x2] sm:$0xff]
      %v1499 = vld [vmem:[%s1349 + $0x12] sm:$0xff]
      %v1500 = vld [vmem:[%s1349 + $0x22] sm:$0xff]
      %v1501 = vld [vmem:[%s1349 + $0x32] sm:$0xff]
      %v1502 = vld [vmem:[%s1349 + $0x42] sm:$0xff]
      %v1503 = vld [vmem:[%s1349 + $0x52] sm:$0xff]
      %v1504 = vld [vmem:[%s1349 + $0x62] sm:$0xff]
      %v1505 = vld [vmem:[%s1349 + $0x72] sm:$0xff]
      %s1506 = scalar_lea.vmem %s1, 1024
      %v1507 = vld [vmem:[%s1506] sm:$0xff]
      %v1508 = vld [vmem:[%s1506 + $0x8] sm:$0xff]
      %v1509 = vld [vmem:[%s1506 + $0x10] sm:$0xff]
      %v1510 = vld [vmem:[%s1506 + $0x18] sm:$0xff]
      %v1511 = vld [vmem:[%s1506 + $0x20] sm:$0xff]
      %v1512 = vld [vmem:[%s1506 + $0x28] sm:$0xff]
      %v1513 = vld [vmem:[%s1506 + $0x30] sm:$0xff]
      %v1514 = vld [vmem:[%s1506 + $0x38] sm:$0xff]
      %v1515 = vld [vmem:[%s1506 + $0x40] sm:$0xff]
      %v1516 = vld [vmem:[%s1506 + $0x48] sm:$0xff]
      %v1517 = vld [vmem:[%s1506 + $0x50] sm:$0xff]
      %v1518 = vld [vmem:[%s1506 + $0x58] sm:$0xff]
      %v1519 = vld [vmem:[%s1506 + $0x60] sm:$0xff]
      %v1520 = vld [vmem:[%s1506 + $0x68] sm:$0xff]
      %v1521 = vld [vmem:[%s1506 + $0x70] sm:$0xff]
      %v1522 = vld [vmem:[%s1506 + $0x78] sm:$0xff]
      %1523 = vmatpush.msra.mxu0 %v1522
      %1524 = vmatpush.msra.mxu0 %v1521
      %1525 = vmatpush.msra.mxu0 %v1520
      %1526 = vmatpush.msra.mxu0 %v1519
      %1527 = vmatpush.msra.mxu0 %v1518
      %1528 = vmatpush.msra.mxu0 %v1517
      %1529 = vmatpush.msra.mxu0 %v1516
      %1530 = vmatpush.msra.mxu0 %v1515
      %1531 = vmatpush.msra.mxu0 %v1514
      %1532 = vmatpush.msra.mxu0 %v1513
      %1533 = vmatpush.msra.mxu0 %v1512
      %1534 = vmatpush.msra.mxu0 %v1511
      %1535 = vmatpush.msra.mxu0 %v1510
      %1536 = vmatpush.msra.mxu0 %v1509
      %1537 = vmatpush.msra.mxu0 %v1508
      %1538 = vmatpush.msra.mxu0 %v1507
      %1539 = vmatmul.f32.gmra.mxu0 %v1498
      %v1540 = vpop.f32.mrf.mxu0
      %v1541 = vadd.f32 0.0, %v1540
      %1542 = vmatmul.f32.gmra.mxu0 %v1499
      %v1543 = vpop.f32.mrf.mxu0
      %v1544 = vadd.f32 0.0, %v1543
      %1545 = vmatmul.f32.gmra.mxu0 %v1500
      %v1546 = vpop.f32.mrf.mxu0
      %v1547 = vadd.f32 0.0, %v1546
      %1548 = vmatmul.f32.gmra.mxu0 %v1501
      %v1549 = vpop.f32.mrf.mxu0
      %v1550 = vadd.f32 0.0, %v1549
      %1551 = vmatmul.f32.gmra.mxu0 %v1502
      %v1552 = vpop.f32.mrf.mxu0
      %v1553 = vadd.f32 0.0, %v1552
      %1554 = vmatmul.f32.gmra.mxu0 %v1503
      %v1555 = vpop.f32.mrf.mxu0
      %v1556 = vadd.f32 0.0, %v1555
      %1557 = vmatmul.f32.gmra.mxu0 %v1504
      %v1558 = vpop.f32.mrf.mxu0
      %v1559 = vadd.f32 0.0, %v1558
      %1560 = vmatmul.f32.gmra.mxu0 %v1505
      %v1561 = vpop.f32.mrf.mxu0
      %v1562 = vadd.f32 0.0, %v1561
      %1563 = vdwg.mxu0
      %v1564 = vadd.f32 %v1490, %v1541
      %v1565 = vadd.f32 %v1491, %v1544
      %v1566 = vadd.f32 %v1492, %v1547
      %v1567 = vadd.f32 %v1493, %v1550
      %v1568 = vadd.f32 %v1494, %v1553
      %v1569 = vadd.f32 %v1495, %v1556
      %v1570 = vadd.f32 %v1496, %v1559
      %v1571 = vadd.f32 %v1497, %v1562
      %1572 = vst [vmem:[%s230] sm:$0xff] %v1564
      %1573 = vst [vmem:[%s230 + $0x8] sm:$0xff] %v1565
      %1574 = vst [vmem:[%s230 + $0x10] sm:$0xff] %v1566
      %1575 = vst [vmem:[%s230 + $0x18] sm:$0xff] %v1567
      %1576 = vst [vmem:[%s230 + $0x20] sm:$0xff] %v1568
      %1577 = vst [vmem:[%s230 + $0x28] sm:$0xff] %v1569
      %1578 = vst [vmem:[%s230 + $0x30] sm:$0xff] %v1570
      %1579 = vst [vmem:[%s230 + $0x38] sm:$0xff] %v1571
      %v1580 = vld [vmem:[%s234] sm:$0x1]
      %v1581 = vadd.f32 %v1564, %v1565
      %v1582 = vadd.f32 %v1581, %v1566
      %v1583 = vadd.f32 %v1582, %v1567
      %v1584 = vadd.f32 %v1583, %v1568
      %v1585 = vadd.f32 %v1584, %v1569
      %v1586 = vadd.f32 %v1585, %v1570
      %v1587 = vadd.f32 %v1586, %v1571
      %v1588 = vrot.slane %v1587, 4
      %v1589 = vadd.f32 %v1587, %v1588
      %v1590 = vrot.slane %v1589, 2
      %v1591 = vadd.f32 %v1589, %v1590
      %v1592 = vrot.slane %v1591, 1
      %v1593 = vadd.f32 %v1591, %v1592
      %v1594 = vadd.f32 %v1580, %v1593
      %1595 = vst [vmem:[%s234] sm:$0x1] %v1594
      %v1596 = vld [vmem:[%s237] sm:$0x1]
      %v1597 = vmul.f32 %v1564, %v1564
      %v1598 = vmul.f32 %v1565, %v1565
      %v1599 = vmul.f32 %v1566, %v1566
      %v1600 = vmul.f32 %v1567, %v1567
      %v1601 = vmul.f32 %v1568, %v1568
      %v1602 = vmul.f32 %v1569, %v1569
      %v1603 = vmul.f32 %v1570, %v1570
      %v1604 = vmul.f32 %v1571, %v1571
      %v1605 = vadd.f32 %v1597, %v1598
      %v1606 = vadd.f32 %v1605, %v1599
      %v1607 = vadd.f32 %v1606, %v1600
      %v1608 = vadd.f32 %v1607, %v1601
      %v1609 = vadd.f32 %v1608, %v1602
      %v1610 = vadd.f32 %v1609, %v1603
      %v1611 = vadd.f32 %v1610, %v1604
      %v1612 = vrot.slane %v1611, 4
      %v1613 = vadd.f32 %v1611, %v1612
      %v1614 = vrot.slane %v1613, 2
      %v1615 = vadd.f32 %v1613, %v1614
      %v1616 = vrot.slane %v1615, 1
      %v1617 = vadd.f32 %v1615, %v1616
      %v1618 = vadd.f32 %v1596, %v1617
      %1619 = vst [vmem:[%s237] sm:$0x1] %v1618
      %s1620 = smul.u32 8, %s21
      %p1621 = scmp.lt.s32.totalorder %s20, 1
      %s1622 = scalar_select %p1621, %s20, 1
      %p1623 = scmp.lt.s32.totalorder %s1620, 7
      %s1624 = scalar_select %p1623, %s1620, 7
      %s1625 = smul.addr %s1622, 8
      %s1626 = sadd.s32 %s1624, %s1625
      %s1627 = smul.addr %s1626, 8
      %s1628 = scalar_lea.vmem %s2, %s1627
      %p1629 = scmp.lt.s32.totalorder %s20, 1
      %s1630 = scalar_select %p1629, %s20, 1
      %s1631 = scalar_lea.vmem %s3, %s1630
      %p1632 = scmp.lt.s32.totalorder %s20, 1
      %s1633 = scalar_select %p1632, %s20, 1
      %s1634 = scalar_lea.vmem %s4, %s1633
      // Predicated region
      $region33: #{down_forward.3} parent=27 // pred_check
        %p1635 = pneg %p95
      $region34: #{down_forward.3} parent=27 // pred_check_branch
        %1637 = sbr.rel (%p1635) target = $region36
      $region35: #{down_forward.3} parent=27 // pred_region
        %s1638 = smul.u32 8, %s21
      $region36: #{down_forward.3} parent=27 // pred_fallthru
        _
      // Predicated region
      $region37: #{down_forward.3} parent=27 // pred_check
        %p1639 = pneg %p121
      $region38: #{down_forward.3} parent=27 // pred_check_branch
        %1641 = sbr.rel (%p1639) target = $region40
      $region39: #{down_forward.3} parent=27 // pred_region
        _
      $region40: #{down_forward.3} parent=27 // pred_fallthru
        _
      // Predicated region
      $region41: #{down_forward.3} parent=27 // pred_check
        %p1642 = pneg %p147
      $region42: #{down_forward.3} parent=27 // pred_check_branch
        %1644 = sbr.rel (%p1642) target = $region44
      $region43: #{down_forward.3} parent=27 // pred_region
        _
      $region44: #{down_forward.3} parent=27 // pred_fallthru
        _
    $region28: #{down_forward.3} parent=5 // pred_fallthru
      _
    %p1645 = scmp.le.s32.totalorder 2, %s11
    // Predicated region
    $region45: #{down_forward.3} parent=5 // pred_check
      %p1646 = pneg %p1645
    $region46: #{down_forward.3} parent=5 // pred_check_branch
      %1648 = sbr.rel (%p1646) target = $region48
    $region47: #{down_forward.3} parent=5 // pred_region
      %s1649 = ssub.s32 %s11, 2
      // Predicated region
      $region49: #{down_forward.3} parent=47 // pred_check
        %p1650 = pneg %p101
      $region50: #{down_forward.3} parent=47 // pred_check_branch
        %1652 = sbr.rel (%p1650) target = $region52
      $region51: #{down_forward.3} parent=47 // pred_region
        %s1653 = smul.u32 8, %s23
        %p1654 = scmp.lt.s32.totalorder %s22, 1
        %s1655 = scalar_select %p1654, %s22, 1
        %p1656 = scmp.lt.s32.totalorder %s1653, 7
        %s1657 = scalar_select %p1656, %s1653, 7
        %s1658 = smul.addr %s1655, 8
        %s1659 = sadd.s32 %s1657, %s1658
        %s1660 = smul.addr %s1659, 8
        %s1661 = scalar_lea.vmem %s2, %s1660
      $region52: #{down_forward.3} parent=47 // pred_fallthru
        _
      // Predicated region
      $region53: #{down_forward.3} parent=47 // pred_check
        %p1662 = pneg %p127
      $region54: #{down_forward.3} parent=47 // pred_check_branch
        %1664 = sbr.rel (%p1662) target = $region56
      $region55: #{down_forward.3} parent=47 // pred_region
        %p1665 = scmp.lt.s32.totalorder %s22, 1
        %s1666 = scalar_select %p1665, %s22, 1
        %s1667 = scalar_lea.vmem %s3, %s1666
      $region56: #{down_forward.3} parent=47 // pred_fallthru
        _
      // Predicated region
      $region57: #{down_forward.3} parent=47 // pred_check
        %p1668 = pneg %p153
      $region58: #{down_forward.3} parent=47 // pred_check_branch
        %1670 = sbr.rel (%p1668) target = $region60
      $region59: #{down_forward.3} parent=47 // pred_region
        %p1671 = scmp.lt.s32.totalorder %s22, 1
        %s1672 = scalar_select %p1671, %s22, 1
        %s1673 = scalar_lea.vmem %s4, %s1672
      $region60: #{down_forward.3} parent=47 // pred_fallthru
        _
    $region48: #{down_forward.3} parent=5 // pred_fallthru
      _
  $region6: #{down_forward.3} parent=0 // loop_footer
    %s15 = sadd.s32 1, %s11
  $region7: #{down_forward.3} parent=0 // loop_footer_branch
    %10 = sbr.rel target = $region3
  $region8: #{down_forward.3} parent=0 // loop_exit
    _

</llo_original>
